<compile_context>
chip_gen: v7x
topology: tpu7x:2x2x1
jax: 0.10.0
libtpu: 0.0.40
codegen_flags: <defaults>
</compile_context>

<pallas_src>
import math
from functools import partial

import jax
import jax.numpy as jnp
from jax.experimental import pallas as pl
from jax.experimental.pallas import tpu as pltpu


def _attention_kernel(x_ref, wqkv_ref, bqkv_ref, wo_ref, bo_ref, o_ref,
                      *, num_heads: int, head_dim: int):
    # x_ref block: (Bb, S, E) bf16; wqkv: (E, 3E) bf16 (Q cols pre-scaled by
    # 1/sqrt(D)); bqkv: (1, 3E) f32 (bq pre-scaled); wo: (E, E) bf16;
    # bo: (1, E) f32; o_ref: (Bb*S, E) bf16.
    Bb, S, E = x_ref.shape
    H, D = num_heads, head_dim

    # Flatten batch*seq into the MXU M dimension.
    x2d = x_ref[...].reshape(Bb * S, E)                       # bf16 (Bb*S, E)

    # Fused Q/K/V projection: one bf16 MXU matmul, f32 accumulation + f32 bias.
    qkv = jnp.dot(x2d, wqkv_ref[...],
                  preferred_element_type=jnp.float32) + bqkv_ref[0]
    q = qkv[:, :E]
    k = qkv[:, E:2 * E]
    v = qkv[:, 2 * E:]

    # Split heads into a leading batch axis: (Bb*S, E) -> (Bb*H, S, D), keeping
    # the contracted dim last so both attention steps are plain 3-D batched
    # matmuls (known-good Mosaic lowering).  Transposes kept in f32 (identical
    # to the previously verified path); bf16 cast happens at the MXU operands.
    def to_heads(t):
        return (t.reshape(Bb, S, H, D)
                 .transpose(0, 2, 1, 3)
                 .reshape(Bb * H, S, D))

    qh = to_heads(q).astype(jnp.bfloat16)
    kh = to_heads(k).astype(jnp.bfloat16)
    vh = to_heads(v).astype(jnp.bfloat16)

    # scores[bh, q, k] = (Q_h / sqrt(D)) . K_h   -- scale already in Q.
    # bf16 x bf16 MXU op, f32 accumulation.
    scores = jnp.einsum('bqd,bkd->bqk', qh, kh,
                        preferred_element_type=jnp.float32)

    # Numerically-stable softmax over keys in f32 (v5e has no bf16 VPU);
    # denominator via EUP approximate reciprocal (free slot, inference-grade).
    m = jnp.max(scores, axis=-1, keepdims=True)
    e = jnp.exp(scores - m)
    attn = e * pl.reciprocal(jnp.sum(e, axis=-1, keepdims=True), approx=True)

    # attended[bh, q, d] = sum_k attn[bh, q, k] * V[bh, k, d]  (bf16 x bf16 MXU).
    attended = jnp.einsum('bqk,bkd->bqd', attn.astype(jnp.bfloat16), vh,
                          preferred_element_type=jnp.float32)

    # Merge heads back: (Bb*H, S, D) -> (Bb, S, H, D) -> (Bb*S, E).
    attended = (attended.reshape(Bb, H, S, D)
                        .transpose(0, 2, 1, 3)
                        .reshape(Bb * S, E))

    # Output projection (bf16 x bf16 MXU, f32 accumulation + bias).
    out = jnp.dot(attended.astype(wo_ref.dtype), wo_ref[...],
                  preferred_element_type=jnp.float32) + bo_ref[0]

    # bf16 store: halves HBM writeback; lane width = E (lane-dense for E>=128).
    o_ref[...] = out.astype(o_ref.dtype)


def _vmem_estimate_bytes(bb: int, seq: int, embed: int, heads: int) -> int:
    """Rough per-step VMEM footprint for the chosen batch block."""
    rows = bb * seq
    weights = (3 * embed * embed + embed * embed) * 2 + 4 * embed * 4  # single-buffered
    x_blk = rows * embed * 2          # bf16 input tile (per buffer)
    out_blk = rows * embed * 2        # bf16 output tile (per buffer)
    inter = (rows * 3 * embed * 4     # qkv f32
             + bb * heads * seq * seq * 4   # scores f32
             + rows * embed * 4       # attended f32
             + rows * 3 * embed * 2)  # bf16 head copies
    # 3 x-buffers (room for Buffered(3) if DMA ever exposed), 2 out buffers,
    # 2x margin on intermediates for relayout temps.
    return weights + 3 * x_blk + 2 * out_blk + 2 * inter


def _choose_batch_block(batch: int, seq: int, embed: int, heads: int,
                        *, target_rows: int = 512,
                        vmem_budget: int = 44 * 1024 * 1024) -> int:
    """Pick Bb | batch with Bb*seq ~ target_rows, within the VMEM budget,
    preferring grid >= 2 so the batch axis shards across v7x's 2 TensorCores."""
    divisors = [d for d in range(1, batch + 1) if batch % d == 0]
    if batch >= 2:
        two_core = [d for d in divisors if batch // d >= 2]
        if two_core:
            divisors = two_core
    best = divisors[0]
    for d in divisors:  # ascending -> last admissible (largest) wins
        if d * seq <= max(target_rows, seq) and \
                _vmem_estimate_bytes(d, seq, embed, heads) <= vmem_budget:
            best = d
    return best


def attention_layer(x, params, num_heads: int, *, out_dtype=jnp.bfloat16):
    """x: (B, S, E) float32. params: dict of (transposed) weights + biases.
    Returns (B, S, E) in out_dtype (bf16 by default; cast downstream if f32
    is required)."""
    B, S, E = x.shape
    head_dim = E // num_heads
    assert head_dim * num_heads == E
    scale = 1.0 / math.sqrt(head_dim)

    # Fused Q/K/V operand with 1/sqrt(D) folded into the Q slice (and bq).
    w_qkv = jnp.concatenate(
        [params['wq_t'] * scale, params['wk_t'], params['wv_t']], axis=1)
    b_qkv = jnp.concatenate(
        [params['bq'] * scale, params['bk'], params['bv']])[None, :]
    w_o = params['wo_t']
    b_o = params['bo'][None, :]

    # bf16 MXU operands (cast once, in the wrapper); biases stay f32 since they
    # add into the f32 accumulator.
    x_bf = x.astype(jnp.bfloat16)
    w_qkv = w_qkv.astype(jnp.bfloat16)
    w_o = w_o.astype(jnp.bfloat16)
    b_qkv = b_qkv.astype(jnp.float32)
    b_o = b_o.astype(jnp.float32)

    Bb = _choose_batch_block(B, S, E, num_heads)
    if S % 8 != 0 and B // Bb > 1:
        # (Bb*S, E) output block needs Bb*S % 8 == 0 unless it spans the full
        # array; fall back to one full-batch block for ragged S.
        # TODO(synk): pad S to a multiple of 8 instead of collapsing the grid.
        Bb = B
    grid = (B // Bb,)

    est = _vmem_estimate_bytes(Bb, S, E, num_heads)
    # 2x margin, 16 MiB floor, ceiling kept v7x-safe (64 MiB phys VMEM);
    # on v5e/v6e (128 MiB) this ceiling can be raised toward ~100 MiB.
    vmem_limit = int(min(max(2 * est, 16 * 1024 * 1024), 56 * 1024 * 1024))

    kernel = partial(_attention_kernel, num_heads=num_heads, head_dim=head_dim)

    def build(single_buffer_weights: bool):
        # Weights/biases have a constant index_map -> single-buffer them so
        # their VMEM footprint is not doubled (matters at realistic E on v7x).
        wkw = dict(pipeline_mode=pl.Buffered(1)) if single_buffer_weights else {}
        return pl.pallas_call(
            kernel,
            out_shape=jax.ShapeDtypeStruct((B * S, E), out_dtype),
            grid_spec=pltpu.PrefetchScalarGridSpec(
                num_scalar_prefetch=0,
                grid=grid,
                in_specs=[
                    pl.BlockSpec((Bb, S, E), lambda i: (i, 0, 0)),        # x
                    pl.BlockSpec((E, 3 * E), lambda i: (0, 0), **wkw),    # fused QKV W
                    pl.BlockSpec((1, 3 * E), lambda i: (0, 0), **wkw),    # fused QKV b
                    pl.BlockSpec((E, E), lambda i: (0, 0), **wkw),        # out W
                    pl.BlockSpec((1, E), lambda i: (0, 0), **wkw),        # out b
                ],
                out_specs=pl.BlockSpec((Bb * S, E), lambda i: (i, 0)),
            ),
            compiler_params=pltpu.CompilerParams(
                dimension_semantics=("parallel",),   # shards across TCs on v7x
                vmem_limit_bytes=vmem_limit,
            ),
        )

    args = (x_bf, w_qkv, b_qkv, w_o, b_o)
    try:
        out_flat = build(True)(*args)
    except Exception:
        # pipeline_mode=pl.Buffered not supported by this jax version; fall back
        # to default double-buffered weights (extra VMEM, never correctness).
        out_flat = build(False)(*args)

    return out_flat.reshape(B, S, E)


def attention_reference(x, params, num_heads: int):
    """Pure-JAX f32 reference mirroring the PyTorch forward, for verification."""
    B, S, E = x.shape
    D = E // num_heads

    def lin(x, wt, b):
        return x @ wt + b

    q = lin(x, params['wq_t'], params['bq']).reshape(B, S, num_heads, D).transpose(0, 2, 1, 3)
    k = lin(x, params['wk_t'], params['bk']).reshape(B, S, num_heads, D).transpose(0, 2, 1, 3)
    v = lin(x, params['wv_t'], params['bv']).reshape(B, S, num_heads, D).transpose(0, 2, 1, 3)
    scores = (q @ k.transpose(0, 1, 3, 2)) / math.sqrt(D)
    attn = jax.nn.softmax(scores, axis=-1)
    attended = (attn @ v).transpose(0, 2, 1, 3).reshape(B, S, E)
    return lin(attended, params['wo_t'], params['bo'])


def init_params(key, embed_dim: int):
    """Deterministic synthetic params. Stored transposed as [E_in, E_out]."""
    ks = jax.random.split(key, 8)
    bound = 1.0 / math.sqrt(embed_dim)

    def w(k):
        return jax.random.uniform(k, (embed_dim, embed_dim), jnp.float32, -bound, bound)

    def b(k):
        return jax.random.uniform(k, (embed_dim,), jnp.float32, -bound, bound)

    return {
        'wq_t': w(ks[0]), 'bq': b(ks[1]),
        'wk_t': w(ks[2]), 'bk': b(ks[3]),
        'wv_t': w(ks[4]), 'bv': b(ks[5]),
        'wo_t': w(ks[6]), 'bo': b(ks[7]),
    }


if __name__ == "__main__":
    B, S, E, H = 2, 8, 32, 8   # batch, seq, embed_dim, num_heads (head_dim = 4)

    key = jax.random.PRNGKey(0)
    kx, kp = jax.random.split(key)
    x = jax.random.normal(kx, (B, S, E), dtype=jnp.float32)
    params = init_params(kp, E)

    out = attention_layer(x, params, num_heads=H)
    out = jax.block_until_ready(out)

    ref = attention_reference(x, params, num_heads=H)
    assert out.shape == (B, S, E)
    # bf16 MXU operands + bf16 output with f32 accumulation -> loosened tolerance.
    assert jnp.allclose(out.astype(jnp.float32), ref, atol=2e-2, rtol=2e-2), \
        "Pallas output mismatch vs reference"

    print("KERNEL_OK")
</pallas_src>

<mosaic_0001>
module attributes {stable_mosaic.version = 11 : i64} {
  func.func @_attention_kernel(%arg0: i32, %arg1: memref<1x8x32xbf16, #tpu.memory_space<vmem>>, %arg2: memref<32x96xbf16, #tpu.memory_space<vmem>>, %arg3: memref<1x96xf32, #tpu.memory_space<vmem>>, %arg4: memref<32x32xbf16, #tpu.memory_space<vmem>>, %arg5: memref<1x32xf32, #tpu.memory_space<vmem>>, %arg6: memref<8x32xbf16, #tpu.memory_space<vmem>>) attributes {dimension_semantics = [#tpu.dimension_semantics<parallel>], iteration_bounds = array<i64: 2>, scalar_prefetch = 0 : i64, scratch_operands = 0 : i64, tpu.core_type = #tpu.core_type<tc>, window_params = [{transform_indices = @transform_0, window_bounds = array<i64: 1, 8, 32>}, {pipeline_mode = #tpu.pipeline_mode<synchronous>, transform_indices = @transform_1, window_bounds = array<i64: 32, 96>}, {pipeline_mode = #tpu.pipeline_mode<synchronous>, transform_indices = @transform_2, window_bounds = array<i64: 1, 96>}, {pipeline_mode = #tpu.pipeline_mode<synchronous>, transform_indices = @transform_3, window_bounds = array<i64: 32, 32>}, {pipeline_mode = #tpu.pipeline_mode<synchronous>, transform_indices = @transform_4, window_bounds = array<i64: 1, 32>}, {transform_indices = @transform_5, window_bounds = array<i64: 8, 32>}]} {
    %c0 = arith.constant 0 : index
    %c0_0 = arith.constant 0 : index
    %c0_1 = arith.constant 0 : index
    %0 = vector.load %arg1[%c0, %c0_0, %c0_1] : memref<1x8x32xbf16, #tpu.memory_space<vmem>>, vector<1x8x32xbf16>
    %1 = vector.shape_cast %0 : vector<1x8x32xbf16> to vector<8x32xbf16>
    %c0_2 = arith.constant 0 : index
    %c0_3 = arith.constant 0 : index
    %2 = vector.load %arg2[%c0_2, %c0_3] : memref<32x96xbf16, #tpu.memory_space<vmem>>, vector<32x96xbf16>
    %cst = arith.constant dense<0.000000e+00> : vector<8x96xf32>
    %3 = tpu.matmul %1, %2, %cst {dimension_numbers = #tpu.dot_dimension_numbers<[1], [0], [0], [1], [0, 0, 1, 1], [], []>} : vector<8x32xbf16>, vector<32x96xbf16>, vector<8x96xf32> -> vector<8x96xf32>
    %c0_4 = arith.constant 0 : index
    %c0_5 = arith.constant 0 : index
    %4 = vector.load %arg3[%c0_4, %c0_5] : memref<1x96xf32, #tpu.memory_space<vmem>>, vector<1x96xf32>
    %5 = vector.shape_cast %4 : vector<1x96xf32> to vector<96xf32>
    %6 = vector.shape_cast %5 : vector<96xf32> to vector<1x96xf32>
    %7 = vector.broadcast %6 : vector<1x96xf32> to vector<8x96xf32>
    %8 = arith.addf %3, %7 : vector<8x96xf32>
    %9 = vector.extract_strided_slice %8 {offsets = [0, 0], sizes = [8, 32], strides = [1, 1]} : vector<8x96xf32> to vector<8x32xf32>
    %10 = vector.extract_strided_slice %8 {offsets = [0, 32], sizes = [8, 32], strides = [1, 1]} : vector<8x96xf32> to vector<8x32xf32>
    %11 = vector.extract_strided_slice %8 {offsets = [0, 64], sizes = [8, 32], strides = [1, 1]} : vector<8x96xf32> to vector<8x32xf32>
    %12 = vector.shape_cast %9 : vector<8x32xf32> to vector<1x8x8x4xf32>
    %13 = tpu.transpose %12, [0, 2, 1, 3] : vector<1x8x8x4xf32> -> vector<1x8x8x4xf32>
    %14 = vector.shape_cast %13 : vector<1x8x8x4xf32> to vector<8x8x4xf32>
    %15 = arith.truncf %14 : vector<8x8x4xf32> to vector<8x8x4xbf16>
    %16 = vector.shape_cast %10 : vector<8x32xf32> to vector<1x8x8x4xf32>
    %17 = tpu.transpose %16, [0, 2, 1, 3] : vector<1x8x8x4xf32> -> vector<1x8x8x4xf32>
    %18 = vector.shape_cast %17 : vector<1x8x8x4xf32> to vector<8x8x4xf32>
    %19 = arith.truncf %18 : vector<8x8x4xf32> to vector<8x8x4xbf16>
    %20 = vector.shape_cast %11 : vector<8x32xf32> to vector<1x8x8x4xf32>
    %21 = tpu.transpose %20, [0, 2, 1, 3] : vector<1x8x8x4xf32> -> vector<1x8x8x4xf32>
    %22 = vector.shape_cast %21 : vector<1x8x8x4xf32> to vector<8x8x4xf32>
    %23 = arith.truncf %22 : vector<8x8x4xf32> to vector<8x8x4xbf16>
    "tpu.trace_start"() <{level = 10 : i32, message = "bqd,bkd->bqk"}> : () -> ()
    %cst_6 = arith.constant dense<0.000000e+00> : vector<8x8x8xf32>
    %24 = tpu.matmul %15, %19, %cst_6 {dimension_numbers = #tpu.dot_dimension_numbers<[2], [2], [1], [1], [0, 0, 0, 1, 1, 1], [0], [0]>} : vector<8x8x4xbf16>, vector<8x8x4xbf16>, vector<8x8x8xf32> -> vector<8x8x8xf32>
    "tpu.trace_stop"() : () -> ()
    %cst_7 = arith.constant dense<0xFF800000> : vector<8x8xf32>
    %25 = vector.multi_reduction <maximumf>, %24, %cst_7 [2] : vector<8x8x8xf32> to vector<8x8xf32>
    %26 = vector.shape_cast %25 : vector<8x8xf32> to vector<8x8x1xf32>
    %27 = vector.broadcast %26 : vector<8x8x1xf32> to vector<8x8x8xf32>
    %28 = arith.subf %24, %27 : vector<8x8x8xf32>
    %29 = math.exp %28 : vector<8x8x8xf32>
    %cst_8 = arith.constant dense<0.000000e+00> : vector<8x8xf32>
    %30 = vector.multi_reduction <add>, %29, %cst_8 [2] : vector<8x8x8xf32> to vector<8x8xf32>
    %31 = vector.shape_cast %30 : vector<8x8xf32> to vector<8x8x1xf32>
    %32 = tpu.reciprocal %31 {approx = true} : vector<8x8x1xf32> -> vector<8x8x1xf32>
    %33 = vector.broadcast %32 : vector<8x8x1xf32> to vector<8x8x8xf32>
    %34 = arith.mulf %29, %33 : vector<8x8x8xf32>
    %35 = arith.truncf %34 : vector<8x8x8xf32> to vector<8x8x8xbf16>
    "tpu.trace_start"() <{level = 10 : i32, message = "bqk,bkd->bqd"}> : () -> ()
    %cst_9 = arith.constant dense<0.000000e+00> : vector<8x8x4xf32>
    %36 = tpu.matmul %35, %23, %cst_9 {dimension_numbers = #tpu.dot_dimension_numbers<[2], [1], [1], [2], [0, 0, 0, 1, 1, 2], [0], [0]>} : vector<8x8x8xbf16>, vector<8x8x4xbf16>, vector<8x8x4xf32> -> vector<8x8x4xf32>
    "tpu.trace_stop"() : () -> ()
    %37 = vector.shape_cast %36 : vector<8x8x4xf32> to vector<1x8x8x4xf32>
    %38 = tpu.transpose %37, [0, 2, 1, 3] : vector<1x8x8x4xf32> -> vector<1x8x8x4xf32>
    %39 = vector.shape_cast %38 : vector<1x8x8x4xf32> to vector<8x32xf32>
    %40 = arith.truncf %39 : vector<8x32xf32> to vector<8x32xbf16>
    %c0_10 = arith.constant 0 : index
    %c0_11 = arith.constant 0 : index
    %41 = vector.load %arg4[%c0_10, %c0_11] : memref<32x32xbf16, #tpu.memory_space<vmem>>, vector<32x32xbf16>
    %cst_12 = arith.constant dense<0.000000e+00> : vector<8x32xf32>
    %42 = tpu.matmul %40, %41, %cst_12 {dimension_numbers = #tpu.dot_dimension_numbers<[1], [0], [0], [1], [0, 0, 1, 1], [], []>} : vector<8x32xbf16>, vector<32x32xbf16>, vector<8x32xf32> -> vector<8x32xf32>
    %c0_13 = arith.constant 0 : index
    %c0_14 = arith.constant 0 : index
    %43 = vector.load %arg5[%c0_13, %c0_14] : memref<1x32xf32, #tpu.memory_space<vmem>>, vector<1x32xf32>
    %44 = vector.shape_cast %43 : vector<1x32xf32> to vector<32xf32>
    %45 = vector.shape_cast %44 : vector<32xf32> to vector<1x32xf32>
    %46 = vector.broadcast %45 : vector<1x32xf32> to vector<8x32xf32>
    %47 = arith.addf %42, %46 : vector<8x32xf32>
    %48 = arith.truncf %47 : vector<8x32xf32> to vector<8x32xbf16>
    %c0_15 = arith.constant 0 : index
    %c0_16 = arith.constant 0 : index
    %49 = vector.load %arg6[%c0_15, %c0_16] : memref<8x32xbf16, #tpu.memory_space<vmem>>, vector<8x32xbf16>
    tpu.vector_store %arg6[%c0_15, %c0_16], %48 {strides = array<i32>} : memref<8x32xbf16, #tpu.memory_space<vmem>>, vector<8x32xbf16>,
    return
  }
  func.func @transform_0(%arg0: i32) -> (i32, i32, i32) {
    %c0_i32 = arith.constant 0 : i32
    %c0_i32_0 = arith.constant 0 : i32
    %c0_i32_1 = arith.constant 0 : i32
    return %arg0, %c0_i32, %c0_i32_0 : i32, i32, i32
  }
  func.func @transform_1(%arg0: i32) -> (i32, i32) {
    %c0_i32 = arith.constant 0 : i32
    %c0_i32_0 = arith.constant 0 : i32
    %c0_i32_1 = arith.constant 0 : i32
    return %c0_i32, %c0_i32_0 : i32, i32
  }
  func.func @transform_2(%arg0: i32) -> (i32, i32) {
    %c0_i32 = arith.constant 0 : i32
    %c0_i32_0 = arith.constant 0 : i32
    %c0_i32_1 = arith.constant 0 : i32
    return %c0_i32, %c0_i32_0 : i32, i32
  }
  func.func @transform_3(%arg0: i32) -> (i32, i32) {
    %c0_i32 = arith.constant 0 : i32
    %c0_i32_0 = arith.constant 0 : i32
    %c0_i32_1 = arith.constant 0 : i32
    return %c0_i32, %c0_i32_0 : i32, i32
  }
  func.func @transform_4(%arg0: i32) -> (i32, i32) {
    %c0_i32 = arith.constant 0 : i32
    %c0_i32_0 = arith.constant 0 : i32
    %c0_i32_1 = arith.constant 0 : i32
    return %c0_i32, %c0_i32_0 : i32, i32
  }
  func.func @transform_5(%arg0: i32) -> (i32, i32) {
    %c0_i32 = arith.constant 0 : i32
    %c0_i32_0 = arith.constant 0 : i32
    return %arg0, %c0_i32 : i32, i32
  }
}

module attributes {stable_mosaic.version = 11 : i64} {
  func.func @_attention_kernel(%arg0: i32, %arg1: memref<1x8x32xbf16, #tpu.memory_space<vmem>>, %arg2: memref<32x96xbf16, #tpu.memory_space<vmem>>, %arg3: memref<1x96xf32, #tpu.memory_space<vmem>>, %arg4: memref<32x32xbf16, #tpu.memory_space<vmem>>, %arg5: memref<1x32xf32, #tpu.memory_space<vmem>>, %arg6: memref<8x32xbf16, #tpu.memory_space<vmem>>) attributes {dimension_semantics = [#tpu.dimension_semantics<parallel>], iteration_bounds = array<i64: 2>, scalar_prefetch = 0 : i64, scratch_operands = 0 : i64, tpu.core_type = #tpu.core_type<tc>, window_params = [{transform_indices = @transform_0, window_bounds = array<i64: 1, 8, 32>}, {pipeline_mode = #tpu.pipeline_mode<synchronous>, transform_indices = @transform_1, window_bounds = array<i64: 32, 96>}, {pipeline_mode = #tpu.pipeline_mode<synchronous>, transform_indices = @transform_2, window_bounds = array<i64: 1, 96>}, {pipeline_mode = #tpu.pipeline_mode<synchronous>, transform_indices = @transform_3, window_bounds = array<i64: 32, 32>}, {pipeline_mode = #tpu.pipeline_mode<synchronous>, transform_indices = @transform_4, window_bounds = array<i64: 1, 32>}, {transform_indices = @transform_5, window_bounds = array<i64: 8, 32>}]} {
    %c0 = arith.constant 0 : index
    %c0_0 = arith.constant 0 : index
    %c0_1 = arith.constant 0 : index
    %0 = vector.load %arg1[%c0, %c0_0, %c0_1] : memref<1x8x32xbf16, #tpu.memory_space<vmem>>, vector<1x8x32xbf16>
    %1 = vector.shape_cast %0 : vector<1x8x32xbf16> to vector<8x32xbf16>
    %c0_2 = arith.constant 0 : index
    %c0_3 = arith.constant 0 : index
    %2 = vector.load %arg2[%c0_2, %c0_3] : memref<32x96xbf16, #tpu.memory_space<vmem>>, vector<32x96xbf16>
    %cst = arith.constant dense<0.000000e+00> : vector<8x96xf32>
    %3 = tpu.matmul %1, %2, %cst {dimension_numbers = #tpu.dot_dimension_numbers<[1], [0], [0], [1], [0, 0, 1, 1], [], []>} : vector<8x32xbf16>, vector<32x96xbf16>, vector<8x96xf32> -> vector<8x96xf32>
    %c0_4 = arith.constant 0 : index
    %c0_5 = arith.constant 0 : index
    %4 = vector.load %arg3[%c0_4, %c0_5] : memref<1x96xf32, #tpu.memory_space<vmem>>, vector<1x96xf32>
    %5 = vector.shape_cast %4 : vector<1x96xf32> to vector<96xf32>
    %6 = vector.shape_cast %5 : vector<96xf32> to vector<1x96xf32>
    %7 = vector.broadcast %6 : vector<1x96xf32> to vector<8x96xf32>
    %8 = arith.addf %3, %7 : vector<8x96xf32>
    %9 = vector.extract_strided_slice %8 {offsets = [0, 0], sizes = [8, 32], strides = [1, 1]} : vector<8x96xf32> to vector<8x32xf32>
    %10 = vector.extract_strided_slice %8 {offsets = [0, 32], sizes = [8, 32], strides = [1, 1]} : vector<8x96xf32> to vector<8x32xf32>
    %11 = vector.extract_strided_slice %8 {offsets = [0, 64], sizes = [8, 32], strides = [1, 1]} : vector<8x96xf32> to vector<8x32xf32>
    %12 = vector.shape_cast %9 : vector<8x32xf32> to vector<1x8x8x4xf32>
    %13 = tpu.transpose %12, [0, 2, 1, 3] : vector<1x8x8x4xf32> -> vector<1x8x8x4xf32>
    %14 = vector.shape_cast %13 : vector<1x8x8x4xf32> to vector<8x8x4xf32>
    %15 = arith.truncf %14 : vector<8x8x4xf32> to vector<8x8x4xbf16>
    %16 = vector.shape_cast %10 : vector<8x32xf32> to vector<1x8x8x4xf32>
    %17 = tpu.transpose %16, [0, 2, 1, 3] : vector<1x8x8x4xf32> -> vector<1x8x8x4xf32>
    %18 = vector.shape_cast %17 : vector<1x8x8x4xf32> to vector<8x8x4xf32>
    %19 = arith.truncf %18 : vector<8x8x4xf32> to vector<8x8x4xbf16>
    %20 = vector.shape_cast %11 : vector<8x32xf32> to vector<1x8x8x4xf32>
    %21 = tpu.transpose %20, [0, 2, 1, 3] : vector<1x8x8x4xf32> -> vector<1x8x8x4xf32>
    %22 = vector.shape_cast %21 : vector<1x8x8x4xf32> to vector<8x8x4xf32>
    %23 = arith.truncf %22 : vector<8x8x4xf32> to vector<8x8x4xbf16>
    "tpu.trace_start"() <{level = 10 : i32, message = "bqd,bkd->bqk"}> : () -> ()
    %cst_6 = arith.constant dense<0.000000e+00> : vector<8x8x8xf32>
    %24 = tpu.matmul %15, %19, %cst_6 {dimension_numbers = #tpu.dot_dimension_numbers<[2], [2], [1], [1], [0, 0, 0, 1, 1, 1], [0], [0]>} : vector<8x8x4xbf16>, vector<8x8x4xbf16>, vector<8x8x8xf32> -> vector<8x8x8xf32>
    "tpu.trace_stop"() : () -> ()
    %cst_7 = arith.constant dense<0xFF800000> : vector<8x8xf32>
    %25 = vector.multi_reduction <maximumf>, %24, %cst_7 [2] : vector<8x8x8xf32> to vector<8x8xf32>
    %26 = vector.shape_cast %25 : vector<8x8xf32> to vector<8x8x1xf32>
    %27 = vector.broadcast %26 : vector<8x8x1xf32> to vector<8x8x8xf32>
    %28 = arith.subf %24, %27 : vector<8x8x8xf32>
    %29 = math.exp %28 : vector<8x8x8xf32>
    %cst_8 = arith.constant dense<0.000000e+00> : vector<8x8xf32>
    %30 = vector.multi_reduction <add>, %29, %cst_8 [2] : vector<8x8x8xf32> to vector<8x8xf32>
    %31 = vector.shape_cast %30 : vector<8x8xf32> to vector<8x8x1xf32>
    %32 = tpu.reciprocal %31 {approx = true} : vector<8x8x1xf32> -> vector<8x8x1xf32>
    %33 = vector.broadcast %32 : vector<8x8x1xf32> to vector<8x8x8xf32>
    %34 = arith.mulf %29, %33 : vector<8x8x8xf32>
    %35 = arith.truncf %34 : vector<8x8x8xf32> to vector<8x8x8xbf16>
    "tpu.trace_start"() <{level = 10 : i32, message = "bqk,bkd->bqd"}> : () -> ()
    %cst_9 = arith.constant dense<0.000000e+00> : vector<8x8x4xf32>
    %36 = tpu.matmul %35, %23, %cst_9 {dimension_numbers = #tpu.dot_dimension_numbers<[2], [1], [1], [2], [0, 0, 0, 1, 1, 2], [0], [0]>} : vector<8x8x8xbf16>, vector<8x8x4xbf16>, vector<8x8x4xf32> -> vector<8x8x4xf32>
    "tpu.trace_stop"() : () -> ()
    %37 = vector.shape_cast %36 : vector<8x8x4xf32> to vector<1x8x8x4xf32>
    %38 = tpu.transpose %37, [0, 2, 1, 3] : vector<1x8x8x4xf32> -> vector<1x8x8x4xf32>
    %39 = vector.shape_cast %38 : vector<1x8x8x4xf32> to vector<8x32xf32>
    %40 = arith.truncf %39 : vector<8x32xf32> to vector<8x32xbf16>
    %c0_10 = arith.constant 0 : index
    %c0_11 = arith.constant 0 : index
    %41 = vector.load %arg4[%c0_10, %c0_11] : memref<32x32xbf16, #tpu.memory_space<vmem>>, vector<32x32xbf16>
    %cst_12 = arith.constant dense<0.000000e+00> : vector<8x32xf32>
    %42 = tpu.matmul %40, %41, %cst_12 {dimension_numbers = #tpu.dot_dimension_numbers<[1], [0], [0], [1], [0, 0, 1, 1], [], []>} : vector<8x32xbf16>, vector<32x32xbf16>, vector<8x32xf32> -> vector<8x32xf32>
    %c0_13 = arith.constant 0 : index
    %c0_14 = arith.constant 0 : index
    %43 = vector.load %arg5[%c0_13, %c0_14] : memref<1x32xf32, #tpu.memory_space<vmem>>, vector<1x32xf32>
    %44 = vector.shape_cast %43 : vector<1x32xf32> to vector<32xf32>
    %45 = vector.shape_cast %44 : vector<32xf32> to vector<1x32xf32>
    %46 = vector.broadcast %45 : vector<1x32xf32> to vector<8x32xf32>
    %47 = arith.addf %42, %46 : vector<8x32xf32>
    %48 = arith.truncf %47 : vector<8x32xf32> to vector<8x32xbf16>
    %c0_15 = arith.constant 0 : index
    %c0_16 = arith.constant 0 : index
    %49 = vector.load %arg6[%c0_15, %c0_16] : memref<8x32xbf16, #tpu.memory_space<vmem>>, vector<8x32xbf16>
    tpu.vector_store %arg6[%c0_15, %c0_16], %48 {strides = array<i32>} : memref<8x32xbf16, #tpu.memory_space<vmem>>, vector<8x32xbf16>,
    return
  }
  func.func @transform_0(%arg0: i32) -> (i32, i32, i32) {
    %c0_i32 = arith.constant 0 : i32
    %c0_i32_0 = arith.constant 0 : i32
    %c0_i32_1 = arith.constant 0 : i32
    return %arg0, %c0_i32, %c0_i32_0 : i32, i32, i32
  }
  func.func @transform_1(%arg0: i32) -> (i32, i32) {
    %c0_i32 = arith.constant 0 : i32
    %c0_i32_0 = arith.constant 0 : i32
    %c0_i32_1 = arith.constant 0 : i32
    return %c0_i32, %c0_i32_0 : i32, i32
  }
  func.func @transform_2(%arg0: i32) -> (i32, i32) {
    %c0_i32 = arith.constant 0 : i32
    %c0_i32_0 = arith.constant 0 : i32
    %c0_i32_1 = arith.constant 0 : i32
    return %c0_i32, %c0_i32_0 : i32, i32
  }
  func.func @transform_3(%arg0: i32) -> (i32, i32) {
    %c0_i32 = arith.constant 0 : i32
    %c0_i32_0 = arith.constant 0 : i32
    %c0_i32_1 = arith.constant 0 : i32
    return %c0_i32, %c0_i32_0 : i32, i32
  }
  func.func @transform_4(%arg0: i32) -> (i32, i32) {
    %c0_i32 = arith.constant 0 : i32
    %c0_i32_0 = arith.constant 0 : i32
    %c0_i32_1 = arith.constant 0 : i32
    return %c0_i32, %c0_i32_0 : i32, i32
  }
  func.func @transform_5(%arg0: i32) -> (i32, i32) {
    %c0_i32 = arith.constant 0 : i32
    %c0_i32_0 = arith.constant 0 : i32
    return %arg0, %c0_i32 : i32, i32
  }
}

</mosaic_0001>

<llo_original>
// kernel: tpu_custom_call.1
$region0: #{tpu_custom_call.1}
  #allocation0 [shape = 'u32[]', space=smem, size = 0x4, offset = 0x4, fixed_abs, tag = 'smem constant byte address 0x4 - core index']
  #allocation1 [shape = 'u32[144,128]{1,0:T(1,128)}', space=vmem, size = 0x12000, scoped, tag = 'internal scratch']
  %s0 = inlined_call_operand.hbm [shape: bf16[2,8,32], index: 0, kind: input, shape index: {}]
  %s1 = inlined_call_operand.hbm [shape: bf16[32,96], index: 1, kind: input, shape index: {}]
  %s2 = inlined_call_operand.vmem [shape: f32[1,96], index: 2, kind: input, shape index: {}]
  %s3 = inlined_call_operand.hbm [shape: bf16[32,32], index: 3, kind: input, shape index: {}]
  %s4 = inlined_call_operand.vmem [shape: f32[1,32], index: 4, kind: input, shape index: {}]
  %s5 = inlined_call_operand.hbm [shape: bf16[16,32], index: 5, kind: output, shape index: {}]
  %s6 = sld [smem:[#allocation0]]
  $region65: #{tpu_custom_call.1} parent=0
    _
  %s8 = ssub.s32 1, %s6
  %s9 = scalar_select 0, %s8, %s6
  $region1: #{tpu_custom_call.1} parent=0
    #allocation2 [shape = 'u8[4096]{0}', space=vmem, size = 0x1000, scoped, tag = 'input window, operand 0']
    #allocation3 [shape = 's32[2]{0}', space=sflag, size = 0x8, scoped, tag = 'scoped memory for tpu_custom_call.1']
    #allocation4 [shape = 's32[2]{0}', space=sflag, size = 0x8, scoped, tag = 'scoped memory for tpu_custom_call.1']
    #allocation5 [shape = 'u8[8192]{0}', space=vmem, size = 0x2000, scoped, tag = 'input window, operand 1, single buffered']
    #allocation6 [shape = 's32[1]{0}', space=sflag, size = 0x4, scoped, tag = 'scoped memory for tpu_custom_call.1']
    #allocation7 [shape = 'u8[8192]{0}', space=vmem, size = 0x2000, scoped, tag = 'input window, operand 3, single buffered']
    #allocation8 [shape = 'u8[4096]{0}', space=vmem, size = 0x1000, scoped, tag = 'output window, operand 0']
    %10 = vsyncpa [#allocation3], 0
    %s11 = scalar_lea.sflag [#allocation3], 1
    %12 = vsyncpa %s11, 0
    %13 = vsyncpa [#allocation6], 0
    %14 = vsyncpa [#allocation4], 0
    %s15 = scalar_lea.sflag [#allocation4], 1
    %16 = vsyncpa %s15, 0
    loop: start=0, step=1, limit=4
    $region2: #{tpu_custom_call.1} parent=1 // loop_pre_header
      _
    $region3: #{tpu_custom_call.1} parent=1 // loop_header
      %s18 = sphi 0, %s22
      %p19 = scmp.ge.s32.totalorder %s18, 4
      %s28 = sphi 0, %s30
      %s31 = sphi 0, %s28
      %s32 = sphi 0, %s31
      %s48 = sphi 0, %s32
      %s52 = sphi 0, %s52
      %s54 = sphi 0, %s52
      %s55 = sphi 0, %s54
      %s69 = sphi 0, %s55
      %s73 = sphi 0, %s73
      %s75 = sphi 0, %s73
      %s76 = sphi 0, %s75
      %s90 = sphi 0, %s76
      %s94 = sphi 0, %s94
      %s96 = sphi 0, %s94
      %s97 = sphi 0, %s96
      %s111 = sphi 0, %s97
      %s115 = sphi 0, %s115
      %s117 = sphi 0, %s115
      %s118 = sphi 0, %s117
      %s132 = sphi 0, %s118
      %s138 = sphi 0, %s140
      %s141 = sphi 0, %s138
      %s142 = sphi 0, %s141
      %s158 = sphi 0, %s142
    $region4: #{tpu_custom_call.1} parent=1 // loop_header_branch
      %21 = sbr.rel (%p19) target = $region8
    $region5: #{tpu_custom_call.1} parent=1 // loop_body
      %s23 = ssub.s32 %s18, 1
      %s24 = ssub.s32 %s18, 2
      %s25 = sadd.s32 %s18, 1
      %s26 = ssub.s32 %s18, %s25
      %p27 = scmp.eq.s32.totalorder %s26, 0
      %s29 = sadd.s32 %s28, 1
      %s30 = scalar_select %p27, %s28, %s29
      %p33 = pneg %p27
      %p34 = scmp.eq.s32.totalorder %s18, 1
      %p35 = por %p33, %p34
      %p36 = scmp.ne.s32.totalorder %s28, %s31
      %p37 = scmp.eq.s32.totalorder %s18, 0
      %p38 = por %p36, %p37
      %p39 = scmp.ne.s32.totalorder %s28, %s31
      %p40 = scmp.eq.s32.totalorder %s23, 1
      %p41 = por %p39, %p40
      %p42 = scmp.ne.s32.totalorder %s31, %s32
      %p43 = scmp.eq.s32.totalorder %s23, 0
      %p44 = por %p42, %p43
      %p45 = scmp.ne.s32.totalorder %s31, %s32
      %p46 = scmp.eq.s32.totalorder %s24, 1
      %p47 = por %p45, %p46
      %p49 = scmp.ne.s32.totalorder %s32, %s48
      %p50 = scmp.eq.s32.totalorder %s24, 0
      %p51 = por %p49, %p50
      %s53 = sadd.s32 %s52, 1
      %p56 = scmp.eq.s32.totalorder %s18, 1
      %p57 = scmp.ne.s32.totalorder %s52, %s54
      %p58 = scmp.eq.s32.totalorder %s18, 0
      %p59 = por %p57, %p58
      %p60 = scmp.ne.s32.totalorder %s52, %s54
      %p61 = scmp.eq.s32.totalorder %s23, 1
      %p62 = por %p60, %p61
      %p63 = scmp.ne.s32.totalorder %s54, %s55
      %p64 = scmp.eq.s32.totalorder %s23, 0
      %p65 = por %p63, %p64
      %p66 = scmp.ne.s32.totalorder %s54, %s55
      %p67 = scmp.eq.s32.totalorder %s24, 1
      %p68 = por %p66, %p67
      %p70 = scmp.ne.s32.totalorder %s55, %s69
      %p71 = scmp.eq.s32.totalorder %s24, 0
      %p72 = por %p70, %p71
      %s74 = sadd.s32 %s73, 1
      %p77 = scmp.eq.s32.totalorder %s18, 1
      %p78 = scmp.ne.s32.totalorder %s73, %s75
      %p79 = scmp.eq.s32.totalorder %s18, 0
      %p80 = por %p78, %p79
      %p81 = scmp.ne.s32.totalorder %s73, %s75
      %p82 = scmp.eq.s32.totalorder %s23, 1
      %p83 = por %p81, %p82
      %p84 = scmp.ne.s32.totalorder %s75, %s76
      %p85 = scmp.eq.s32.totalorder %s23, 0
      %p86 = por %p84, %p85
      %p87 = scmp.ne.s32.totalorder %s75, %s76
      %p88 = scmp.eq.s32.totalorder %s24, 1
      %p89 = por %p87, %p88
      %p91 = scmp.ne.s32.totalorder %s76, %s90
      %p92 = scmp.eq.s32.totalorder %s24, 0
      %p93 = por %p91, %p92
      %s95 = sadd.s32 %s94, 1
      %p98 = scmp.eq.s32.totalorder %s18, 1
      %p99 = scmp.ne.s32.totalorder %s94, %s96
      %p100 = scmp.eq.s32.totalorder %s18, 0
      %p101 = por %p99, %p100
      %p102 = scmp.ne.s32.totalorder %s94, %s96
      %p103 = scmp.eq.s32.totalorder %s23, 1
      %p104 = por %p102, %p103
      %p105 = scmp.ne.s32.totalorder %s96, %s97
      %p106 = scmp.eq.s32.totalorder %s23, 0
      %p107 = por %p105, %p106
      %p108 = scmp.ne.s32.totalorder %s96, %s97
      %p109 = scmp.eq.s32.totalorder %s24, 1
      %p110 = por %p108, %p109
      %p112 = scmp.ne.s32.totalorder %s97, %s111
      %p113 = scmp.eq.s32.totalorder %s24, 0
      %p114 = por %p112, %p113
      %s116 = sadd.s32 %s115, 1
      %p119 = scmp.eq.s32.totalorder %s18, 1
      %p120 = scmp.ne.s32.totalorder %s115, %s117
      %p121 = scmp.eq.s32.totalorder %s18, 0
      %p122 = por %p120, %p121
      %p123 = scmp.ne.s32.totalorder %s115, %s117
      %p124 = scmp.eq.s32.totalorder %s23, 1
      %p125 = por %p123, %p124
      %p126 = scmp.ne.s32.totalorder %s117, %s118
      %p127 = scmp.eq.s32.totalorder %s23, 0
      %p128 = por %p126, %p127
      %p129 = scmp.ne.s32.totalorder %s117, %s118
      %p130 = scmp.eq.s32.totalorder %s24, 1
      %p131 = por %p129, %p130
      %p133 = scmp.ne.s32.totalorder %s118, %s132
      %p134 = scmp.eq.s32.totalorder %s24, 0
      %p135 = por %p133, %p134
      %s136 = ssub.s32 %s18, %s25
      %p137 = scmp.eq.s32.totalorder %s136, 0
      %s139 = sadd.s32 %s138, 1
      %s140 = scalar_select %p137, %s138, %s139
      %p143 = pneg %p137
      %p144 = scmp.eq.s32.totalorder %s18, 1
      %p145 = por %p143, %p144
      %p146 = scmp.ne.s32.totalorder %s138, %s141
      %p147 = scmp.eq.s32.totalorder %s18, 0
      %p148 = por %p146, %p147
      %p149 = scmp.ne.s32.totalorder %s138, %s141
      %p150 = scmp.eq.s32.totalorder %s23, 1
      %p151 = por %p149, %p150
      %p152 = scmp.ne.s32.totalorder %s141, %s142
      %p153 = scmp.eq.s32.totalorder %s23, 0
      %p154 = por %p152, %p153
      %p155 = scmp.ne.s32.totalorder %s141, %s142
      %p156 = scmp.eq.s32.totalorder %s24, 1
      %p157 = por %p155, %p156
      %p159 = scmp.ne.s32.totalorder %s142, %s158
      %p160 = scmp.eq.s32.totalorder %s24, 0
      %p161 = por %p159, %p160
      %p162 = scmp.le.s32.totalorder 1, %s18
      %p163 = scmp.lt.s32.totalorder %s18, 3
      %p164 = pnand %p162, %p163
      %p165 = pneg %p164
      // Predicated region
      $region9: #{tpu_custom_call.1} parent=5 // pred_check
        _
      $region10: #{tpu_custom_call.1} parent=5 // pred_check_branch
        %167 = sbr.rel (%p164) target = $region12
      $region11: #{tpu_custom_call.1} parent=5 // pred_region
        %s168 = ssub.s32 %s18, 1
        // Predicated region
        $region13: #{tpu_custom_call.1} parent=11 // pred_check
          %p169 = pneg %p65
        $region14: #{tpu_custom_call.1} parent=11 // pred_check_branch
          %171 = sbr.rel (%p169) target = $region16
        $region15: #{tpu_custom_call.1} parent=11 // pred_region
          %s173 = ssub.s32 256, 256
          %174 = vsyncadd [#allocation6], %s173
          %s175 = sshll.u32 [#allocation5], 4
          %s176 = int_to_ptr.vmem [resolvable:$true] %s175
          %181 = dma.hbm_to_vmem [thread:$0]  %s1, 256, %s176, [#allocation6], 64, 64, 4
        $region16: #{tpu_custom_call.1} parent=11 // pred_fallthru
          _
        // Predicated region
        $region17: #{tpu_custom_call.1} parent=11 // pred_check
          %p182 = pneg %p86
        $region18: #{tpu_custom_call.1} parent=11 // pred_check_branch
          %184 = sbr.rel (%p182) target = $region20
        $region19: #{tpu_custom_call.1} parent=11 // pred_region
          _
        $region20: #{tpu_custom_call.1} parent=11 // pred_fallthru
          _
        // Predicated region
        $region21: #{tpu_custom_call.1} parent=11 // pred_check
          %p185 = pneg %p107
        $region22: #{tpu_custom_call.1} parent=11 // pred_check_branch
          %187 = sbr.rel (%p185) target = $region24
        $region23: #{tpu_custom_call.1} parent=11 // pred_region
          %s189 = ssub.s32 256, 256
          %190 = vsyncadd [#allocation6], %s189
          %s191 = sshll.u32 [#allocation7], 4
          %s192 = int_to_ptr.vmem [resolvable:$true] %s191
          %197 = dma.hbm_to_vmem [thread:$0]  %s3, 256, %s192, [#allocation6], 64, 64, 4
        $region24: #{tpu_custom_call.1} parent=11 // pred_fallthru
          _
        // Predicated region
        $region25: #{tpu_custom_call.1} parent=11 // pred_check
          %p198 = pneg %p128
        $region26: #{tpu_custom_call.1} parent=11 // pred_check_branch
          %200 = sbr.rel (%p198) target = $region28
        $region27: #{tpu_custom_call.1} parent=11 // pred_region
          _
        $region28: #{tpu_custom_call.1} parent=11 // pred_fallthru
          _
      $region12: #{tpu_custom_call.1} parent=5 // pred_fallthru
        _
      %p201 = scmp.lt.s32.totalorder %s18, 2
      // Predicated region
      $region29: #{tpu_custom_call.1} parent=5 // pred_check
        %p202 = pneg %p201
      $region30: #{tpu_custom_call.1} parent=5 // pred_check_branch
        %204 = sbr.rel (%p202) target = $region32
      $region31: #{tpu_custom_call.1} parent=5 // pred_region
        // Predicated region
        $region33: #{tpu_custom_call.1} parent=31 // pred_check
          %p205 = pneg %p38
        $region34: #{tpu_custom_call.1} parent=31 // pred_check_branch
          %207 = sbr.rel (%p205) target = $region36
        $region35: #{tpu_custom_call.1} parent=31 // pred_region
          %s208 = sand.u32 %s28, 1
          %s209 = scalar_lea.sflag [#allocation3], %s208
          %s210 = sand.u32 %s28, 1
          %s211 = smul.addr %s210, 4
          %s212 = scalar_lea.vmem [#allocation2], %s211
          %s214 = ssub.s32 64, 64
          %215 = vsyncadd %s209, %s214
          %s216 = smul.addr %s18, 64
          %s217 = scalar_lea.hbm %s0, %s216
          %s219 = sshll.u32 %s212, 4
          %s220 = int_to_ptr.vmem [resolvable:$true] %s219
          %222 = dma.hbm_to_vmem [thread:$0]  %s217, 64, %s220, %s209
        $region36: #{tpu_custom_call.1} parent=31 // pred_fallthru
          _
      $region32: #{tpu_custom_call.1} parent=5 // pred_fallthru
        _
      %p223 = scmp.le.s32.totalorder 1, %s18
      %p224 = scmp.lt.s32.totalorder %s18, 3
      %p225 = pnand %p223, %p224
      %p226 = pneg %p225
      // Predicated region
      $region37: #{tpu_custom_call.1} parent=5 // pred_check
        _
      $region38: #{tpu_custom_call.1} parent=5 // pred_check_branch
        %228 = sbr.rel (%p225) target = $region40
      $region39: #{tpu_custom_call.1} parent=5 // pred_region
        %s229 = ssub.s32 %s18, 1
        %s230 = sand.u32 %s31, 1
        %s231 = scalar_lea.sflag [#allocation3], %s230
        %s232 = sand.u32 %s31, 1
        %s233 = smul.addr %s232, 4
        %s234 = scalar_lea.vmem [#allocation2], %s233
        // Predicated region
        $region41: #{tpu_custom_call.1} parent=39 // pred_check
          %p235 = pneg %p44
        $region42: #{tpu_custom_call.1} parent=39 // pred_check_branch
          %237 = sbr.rel (%p235) target = $region44
        $region43: #{tpu_custom_call.1} parent=39 // pred_region
          %238 = dma.done %s231, 64
        $region44: #{tpu_custom_call.1} parent=39 // pred_fallthru
          _
        // Predicated region
        $region45: #{tpu_custom_call.1} parent=39 // pred_check
          %p239 = pneg %p65
        $region46: #{tpu_custom_call.1} parent=39 // pred_check_branch
          %241 = sbr.rel (%p239) target = $region48
        $region47: #{tpu_custom_call.1} parent=39 // pred_region
          %242 = dma.done [#allocation6], 256
        $region48: #{tpu_custom_call.1} parent=39 // pred_fallthru
          _
        // Predicated region
        $region49: #{tpu_custom_call.1} parent=39 // pred_check
          %p243 = pneg %p107
        $region50: #{tpu_custom_call.1} parent=39 // pred_check_branch
          %245 = sbr.rel (%p243) target = $region52
        $region51: #{tpu_custom_call.1} parent=39 // pred_region
          %246 = dma.done [#allocation6], 256
        $region52: #{tpu_custom_call.1} parent=39 // pred_fallthru
          _
        %s247 = sand.u32 %s31, 1
        %s248 = scalar_lea.sflag [#allocation3], %s247
        %s249 = sand.u32 %s31, 1
        %s250 = smul.addr %s249, 4
        %s251 = scalar_lea.vmem [#allocation2], %s250
        %p252 = pneg %p44
        %p253 = pneg %p41
        %p254 = pneg %p65
        %p255 = pneg %p62
        %p256 = pneg %p86
        %p257 = pneg %p83
        %p258 = pneg %p107
        %p259 = pneg %p104
        %p260 = pneg %p128
        %p261 = pneg %p125
        %p262 = pneg %p154
        %p263 = pneg %p151
        %s264 = sand.u32 %s141, 1
        %s265 = scalar_lea.sflag [#allocation4], %s264
        %s266 = sand.u32 %s141, 1
        %s267 = smul.addr %s266, 4
        %s268 = scalar_lea.vmem [#allocation8], %s267
        %v270 = vld [vmem:[%s234] sm:$0xf]
        %v271 = vld [vmem:[#allocation5] sm:$0xf]
        %v272 = vld [vmem:[#allocation5 + $0x4] sm:$0xf]
        %v273 = vld [vmem:[#allocation5 + $0x8] sm:$0xf]
        %v274 = vld [vmem:[#allocation5 + $0xc] sm:$0xf]
        %v275 = vld [vmem:[%s2] sm:$0x1]
        %v277 = vlaneseq
        %v278 = vshrl.u32 %v277, 7
        %v279 = vsub.s32 0, %v278
        %v280 = vrot.slane %v275, %v279
        %v286 = vunpack.c.l.b16 %v271
        %v287 = vunpack.c.l.b16 %v272
        %v288 = vunpack.c.l.b16 %v273
        %v289 = vunpack.c.l.b16 %v274
        %v290 = vpack.c.b16 %v287, %v286
        %v291 = vpack.c.b16 %v289, %v288
        %vm294 = vcmask 261120
        %v296 = vsel %vm294, %v270, 0
        %298 = vmatprep.subr.bf16.mxu0 0
        %299 = vmatpush1.bf16.msra.mxu0 %v290
        %300 = vmatprep.subr.bf16.mxu0 0
        %301 = vmatpush1.bf16.msra.mxu0 %v291
        %302 = vmatprep.subr.bf16.mxu0 0
        %303 = vmatpush1.bf16.msra.mxu0 0
        %304 = vmatprep.subr.bf16.mxu0 0
        %305 = vmatpush1.bf16.msra.mxu0 0
        %306 = vmatprep.subr.bf16.mxu0 0
        %307 = vmatpush1.bf16.msra.mxu0 0
        %308 = vmatprep.subr.bf16.mxu0 0
        %309 = vmatpush1.bf16.msra.mxu0 0
        %310 = vmatprep.subr.bf16.mxu0 0
        %311 = vmatpush1.bf16.msra.mxu0 0
        %312 = vmatprep.subr.bf16.mxu0 0
        %313 = vmatpush1.bf16.msra.mxu0 0
        %314 = vmatprep.subr.bf16.mxu0 0
        %315 = vmatpush1.bf16.msra.mxu0 0
        %316 = vmatprep.subr.bf16.mxu0 0
        %317 = vmatpush1.bf16.msra.mxu0 0
        %318 = vmatprep.subr.bf16.mxu0 0
        %319 = vmatpush1.bf16.msra.mxu0 0
        %320 = vmatprep.subr.bf16.mxu0 0
        %321 = vmatpush1.bf16.msra.mxu0 0
        %322 = vmatprep.subr.bf16.mxu0 0
        %323 = vmatpush1.bf16.msra.mxu0 0
        %324 = vmatprep.subr.bf16.mxu0 0
        %325 = vmatpush1.bf16.msra.mxu0 0
        %326 = vmatprep.subr.bf16.mxu0 0
        %327 = vmatpush1.bf16.msra.mxu0 0
        %328 = vmatprep.subr.bf16.mxu0 0
        %329 = vmatpush1.bf16.msra.mxu0 0
        %330 = vmatprep.mubr.bf16.mxu0 0
        %331 = vmatmul.mubr.bf16.gmra.mrb[0].mxu0 %v296
        %v332 = vpop.f32.mrb[0].mxu0
        %v333 = vadd.f32 %v280, %v332
        %v334 = vpop.f32.mrb[0].mxu0
        %v335 = vpop.f32.mrb[0].mxu0
        %v336 = vpop.f32.mrb[0].mxu0
        %337 = vdwg.mxu0
        %339 = vrot.lane.b32.xlu0 %v333, 124
        %v340 = vpop.permute.xlu0 %339
        %342 = vrot.lane.b32.xlu0 %v333, 120
        %v343 = vpop.permute.xlu0 %342
        %345 = vrot.lane.b32.xlu0 %v333, 116
        %v346 = vpop.permute.xlu0 %345
        %348 = vrot.lane.b32.xlu0 %v333, 112
        %v349 = vpop.permute.xlu0 %348
        %351 = vrot.lane.b32.xlu0 %v333, 108
        %v352 = vpop.permute.xlu0 %351
        %354 = vrot.lane.b32.xlu0 %v333, 104
        %v355 = vpop.permute.xlu0 %354
        %357 = vrot.lane.b32.xlu0 %v333, 100
        %v358 = vpop.permute.xlu0 %357
        %v360 = vcombine.low %v333, %v343
        %v361 = vcombine.high %v333, %v343
        %v363 = vunpack.c.l.s4 1983009808
        %v364 = vunpack.c.0.s8 %v363
        %v365 = vlaneseq
        %v366 = vshrl.u32 %v365, 7
        %v367 = vsub.s32 %v364, %v366
        %v368 = vrot.slane %v360, %v367
        %v370 = vunpack.c.l.s4 1983009808
        %v371 = vunpack.c.0.s8 %v370
        %v372 = vlaneseq
        %v373 = vshrl.u32 %v372, 7
        %v374 = vsub.s32 %v371, %v373
        %v375 = vrot.slane %v361, %v374
        %v376 = vcombine.low %v340, %v346
        %v377 = vcombine.high %v340, %v346
        %v379 = vunpack.c.l.s4 1983009808
        %v380 = vunpack.c.0.s8 %v379
        %v381 = vlaneseq
        %v382 = vshrl.u32 %v381, 7
        %v383 = vsub.s32 %v380, %v382
        %v384 = vrot.slane %v376, %v383
        %v386 = vunpack.c.l.s4 1983009808
        %v387 = vunpack.c.0.s8 %v386
        %v388 = vlaneseq
        %v389 = vshrl.u32 %v388, 7
        %v390 = vsub.s32 %v387, %v389
        %v391 = vrot.slane %v377, %v390
        %v392 = vcombine.low %v349, %v355
        %v393 = vcombine.high %v349, %v355
        %v395 = vunpack.c.l.s4 1983009808
        %v396 = vunpack.c.0.s8 %v395
        %v397 = vlaneseq
        %v398 = vshrl.u32 %v397, 7
        %v399 = vsub.s32 %v396, %v398
        %v400 = vrot.slane %v392, %v399
        %v402 = vunpack.c.l.s4 1983009808
        %v403 = vunpack.c.0.s8 %v402
        %v404 = vlaneseq
        %v405 = vshrl.u32 %v404, 7
        %v406 = vsub.s32 %v403, %v405
        %v407 = vrot.slane %v393, %v406
        %v408 = vcombine.low %v352, %v358
        %v409 = vcombine.high %v352, %v358
        %v411 = vunpack.c.l.s4 1983009808
        %v412 = vunpack.c.0.s8 %v411
        %v413 = vlaneseq
        %v414 = vshrl.u32 %v413, 7
        %v415 = vsub.s32 %v412, %v414
        %v416 = vrot.slane %v408, %v415
        %v418 = vunpack.c.l.s4 1983009808
        %v419 = vunpack.c.0.s8 %v418
        %v420 = vlaneseq
        %v421 = vshrl.u32 %v420, 7
        %v422 = vsub.s32 %v419, %v421
        %v423 = vrot.slane %v409, %v422
        %v424 = vcombine.low %v368, %v384
        %v425 = vcombine.high %v368, %v384
        %v427 = vunpack.c.l.s4 1934713408
        %v428 = vunpack.c.0.s8 %v427
        %v429 = vlaneseq
        %v430 = vshrl.u32 %v429, 7
        %v431 = vsub.s32 %v428, %v430
        %v432 = vrot.slane %v424, %v431
        %v434 = vunpack.c.l.s4 1934713408
        %v435 = vunpack.c.0.s8 %v434
        %v436 = vlaneseq
        %v437 = vshrl.u32 %v436, 7
        %v438 = vsub.s32 %v435, %v437
        %v439 = vrot.slane %v425, %v438
        %v440 = vcombine.low %v375, %v391
        %v441 = vcombine.high %v375, %v391
        %v443 = vunpack.c.l.s4 1934713408
        %v444 = vunpack.c.0.s8 %v443
        %v445 = vlaneseq
        %v446 = vshrl.u32 %v445, 7
        %v447 = vsub.s32 %v444, %v446
        %v448 = vrot.slane %v440, %v447
        %v450 = vunpack.c.l.s4 1934713408
        %v451 = vunpack.c.0.s8 %v450
        %v452 = vlaneseq
        %v453 = vshrl.u32 %v452, 7
        %v454 = vsub.s32 %v451, %v453
        %v455 = vrot.slane %v441, %v454
        %v456 = vcombine.low %v400, %v416
        %v457 = vcombine.high %v400, %v416
        %v459 = vunpack.c.l.s4 1934713408
        %v460 = vunpack.c.0.s8 %v459
        %v461 = vlaneseq
        %v462 = vshrl.u32 %v461, 7
        %v463 = vsub.s32 %v460, %v462
        %v464 = vrot.slane %v456, %v463
        %v466 = vunpack.c.l.s4 1934713408
        %v467 = vunpack.c.0.s8 %v466
        %v468 = vlaneseq
        %v469 = vshrl.u32 %v468, 7
        %v470 = vsub.s32 %v467, %v469
        %v471 = vrot.slane %v457, %v470
        %v472 = vcombine.low %v407, %v423
        %v473 = vcombine.high %v407, %v423
        %v475 = vunpack.c.l.s4 1934713408
        %v476 = vunpack.c.0.s8 %v475
        %v477 = vlaneseq
        %v478 = vshrl.u32 %v477, 7
        %v479 = vsub.s32 %v476, %v478
        %v480 = vrot.slane %v472, %v479
        %v482 = vunpack.c.l.s4 1934713408
        %v483 = vunpack.c.0.s8 %v482
        %v484 = vlaneseq
        %v485 = vshrl.u32 %v484, 7
        %v486 = vsub.s32 %v483, %v485
        %v487 = vrot.slane %v473, %v486
        %v488 = vcombine.low %v432, %v464
        %v489 = vcombine.high %v432, %v464
        %v490 = vcombine.low %v439, %v471
        %v491 = vcombine.high %v439, %v471
        %v492 = vcombine.low %v448, %v480
        %v493 = vcombine.high %v448, %v480
        %v494 = vcombine.low %v455, %v487
        %v495 = vcombine.high %v455, %v487
        %v496 = vcombine.low %v488, %v490
        %v497 = vcombine.high %v488, %v490
        %v499 = vunpack.c.l.s4 1983009808
        %v500 = vunpack.c.0.s8 %v499
        %v501 = vlaneseq
        %v502 = vshrl.u32 %v501, 7
        %v503 = vsub.s32 %v500, %v502
        %v504 = vrot.slane %v496, %v503
        %v506 = vunpack.c.l.s4 1983009808
        %v507 = vunpack.c.0.s8 %v506
        %v508 = vlaneseq
        %v509 = vshrl.u32 %v508, 7
        %v510 = vsub.s32 %v507, %v509
        %v511 = vrot.slane %v497, %v510
        %v512 = vcombine.low %v489, %v491
        %v513 = vcombine.high %v489, %v491
        %v515 = vunpack.c.l.s4 1983009808
        %v516 = vunpack.c.0.s8 %v515
        %v517 = vlaneseq
        %v518 = vshrl.u32 %v517, 7
        %v519 = vsub.s32 %v516, %v518
        %v520 = vrot.slane %v512, %v519
        %v522 = vunpack.c.l.s4 1983009808
        %v523 = vunpack.c.0.s8 %v522
        %v524 = vlaneseq
        %v525 = vshrl.u32 %v524, 7
        %v526 = vsub.s32 %v523, %v525
        %v527 = vrot.slane %v513, %v526
        %v528 = vcombine.low %v492, %v494
        %v529 = vcombine.high %v492, %v494
        %v531 = vunpack.c.l.s4 1983009808
        %v532 = vunpack.c.0.s8 %v531
        %v533 = vlaneseq
        %v534 = vshrl.u32 %v533, 7
        %v535 = vsub.s32 %v532, %v534
        %v536 = vrot.slane %v528, %v535
        %v538 = vunpack.c.l.s4 1983009808
        %v539 = vunpack.c.0.s8 %v538
        %v540 = vlaneseq
        %v541 = vshrl.u32 %v540, 7
        %v542 = vsub.s32 %v539, %v541
        %v543 = vrot.slane %v529, %v542
        %v544 = vcombine.low %v493, %v495
        %v545 = vcombine.high %v493, %v495
        %v547 = vunpack.c.l.s4 1983009808
        %v548 = vunpack.c.0.s8 %v547
        %v549 = vlaneseq
        %v550 = vshrl.u32 %v549, 7
        %v551 = vsub.s32 %v548, %v550
        %v552 = vrot.slane %v544, %v551
        %v554 = vunpack.c.l.s4 1983009808
        %v555 = vunpack.c.0.s8 %v554
        %v556 = vlaneseq
        %v557 = vshrl.u32 %v556, 7
        %v558 = vsub.s32 %v555, %v557
        %v559 = vrot.slane %v545, %v558
        %v560 = vcombine.low %v504, %v520
        %v561 = vcombine.high %v504, %v520
        %v563 = vunpack.c.l.s4 1934713408
        %v564 = vunpack.c.0.s8 %v563
        %v565 = vlaneseq
        %v566 = vshrl.u32 %v565, 7
        %v567 = vsub.s32 %v564, %v566
        %v568 = vrot.slane %v560, %v567
        %v570 = vunpack.c.l.s4 1934713408
        %v571 = vunpack.c.0.s8 %v570
        %v572 = vlaneseq
        %v573 = vshrl.u32 %v572, 7
        %v574 = vsub.s32 %v571, %v573
        %v575 = vrot.slane %v561, %v574
        %v576 = vcombine.low %v511, %v527
        %v577 = vcombine.high %v511, %v527
        %v579 = vunpack.c.l.s4 1934713408
        %v580 = vunpack.c.0.s8 %v579
        %v581 = vlaneseq
        %v582 = vshrl.u32 %v581, 7
        %v583 = vsub.s32 %v580, %v582
        %v584 = vrot.slane %v576, %v583
        %v586 = vunpack.c.l.s4 1934713408
        %v587 = vunpack.c.0.s8 %v586
        %v588 = vlaneseq
        %v589 = vshrl.u32 %v588, 7
        %v590 = vsub.s32 %v587, %v589
        %v591 = vrot.slane %v577, %v590
        %v592 = vcombine.low %v536, %v552
        %v593 = vcombine.high %v536, %v552
        %v595 = vunpack.c.l.s4 1934713408
        %v596 = vunpack.c.0.s8 %v595
        %v597 = vlaneseq
        %v598 = vshrl.u32 %v597, 7
        %v599 = vsub.s32 %v596, %v598
        %v600 = vrot.slane %v592, %v599
        %v602 = vunpack.c.l.s4 1934713408
        %v603 = vunpack.c.0.s8 %v602
        %v604 = vlaneseq
        %v605 = vshrl.u32 %v604, 7
        %v606 = vsub.s32 %v603, %v605
        %v607 = vrot.slane %v593, %v606
        %v608 = vcombine.low %v543, %v559
        %v609 = vcombine.high %v543, %v559
        %v611 = vunpack.c.l.s4 1934713408
        %v612 = vunpack.c.0.s8 %v611
        %v613 = vlaneseq
        %v614 = vshrl.u32 %v613, 7
        %v615 = vsub.s32 %v612, %v614
        %v616 = vrot.slane %v608, %v615
        %v618 = vunpack.c.l.s4 1934713408
        %v619 = vunpack.c.0.s8 %v618
        %v620 = vlaneseq
        %v621 = vshrl.u32 %v620, 7
        %v622 = vsub.s32 %v619, %v621
        %v623 = vrot.slane %v609, %v622
        %v624 = vcombine.low %v568, %v600
        %v625 = vcombine.high %v568, %v600
        %v626 = vcombine.low %v575, %v607
        %v627 = vcombine.high %v575, %v607
        %v628 = vcombine.low %v584, %v616
        %v629 = vcombine.high %v584, %v616
        %v630 = vcombine.low %v591, %v623
        %v631 = vcombine.high %v591, %v623
        %v632 = vpack.c.bf16 %v624, %v624
        %v633 = vpack.c.bf16 %v625, %v625
        %v634 = vpack.c.bf16 %v626, %v626
        %v635 = vpack.c.bf16 %v627, %v627
        %v636 = vpack.c.bf16 %v628, %v628
        %v637 = vpack.c.bf16 %v629, %v629
        %v638 = vpack.c.bf16 %v630, %v630
        %v639 = vpack.c.bf16 %v631, %v631
        %640 = vrot.lane.b32.xlu0 %v333, 96
        %v641 = vpop.permute.xlu0 %640
        %642 = vrot.lane.b32.xlu0 %v340, 96
        %v643 = vpop.permute.xlu0 %642
        %644 = vrot.lane.b32.xlu0 %v343, 96
        %v645 = vpop.permute.xlu0 %644
        %646 = vrot.lane.b32.xlu0 %v346, 96
        %v647 = vpop.permute.xlu0 %646
        %648 = vrot.lane.b32.xlu0 %v349, 96
        %v649 = vpop.permute.xlu0 %648
        %650 = vrot.lane.b32.xlu0 %v352, 96
        %v651 = vpop.permute.xlu0 %650
        %652 = vrot.lane.b32.xlu0 %v355, 96
        %v653 = vpop.permute.xlu0 %652
        %654 = vrot.lane.b32.xlu0 %v358, 96
        %v655 = vpop.permute.xlu0 %654
        %v664 = vcombine.low %v641, %v645
        %v665 = vcombine.high %v641, %v645
        %v667 = vunpack.c.l.s4 1983009808
        %v668 = vunpack.c.0.s8 %v667
        %v669 = vlaneseq
        %v670 = vshrl.u32 %v669, 7
        %v671 = vsub.s32 %v668, %v670
        %v672 = vrot.slane %v664, %v671
        %v674 = vunpack.c.l.s4 1983009808
        %v675 = vunpack.c.0.s8 %v674
        %v676 = vlaneseq
        %v677 = vshrl.u32 %v676, 7
        %v678 = vsub.s32 %v675, %v677
        %v679 = vrot.slane %v665, %v678
        %v680 = vcombine.low %v643, %v647
        %v681 = vcombine.high %v643, %v647
        %v683 = vunpack.c.l.s4 1983009808
        %v684 = vunpack.c.0.s8 %v683
        %v685 = vlaneseq
        %v686 = vshrl.u32 %v685, 7
        %v687 = vsub.s32 %v684, %v686
        %v688 = vrot.slane %v680, %v687
        %v690 = vunpack.c.l.s4 1983009808
        %v691 = vunpack.c.0.s8 %v690
        %v692 = vlaneseq
        %v693 = vshrl.u32 %v692, 7
        %v694 = vsub.s32 %v691, %v693
        %v695 = vrot.slane %v681, %v694
        %v696 = vcombine.low %v649, %v653
        %v697 = vcombine.high %v649, %v653
        %v699 = vunpack.c.l.s4 1983009808
        %v700 = vunpack.c.0.s8 %v699
        %v701 = vlaneseq
        %v702 = vshrl.u32 %v701, 7
        %v703 = vsub.s32 %v700, %v702
        %v704 = vrot.slane %v696, %v703
        %v706 = vunpack.c.l.s4 1983009808
        %v707 = vunpack.c.0.s8 %v706
        %v708 = vlaneseq
        %v709 = vshrl.u32 %v708, 7
        %v710 = vsub.s32 %v707, %v709
        %v711 = vrot.slane %v697, %v710
        %v712 = vcombine.low %v651, %v655
        %v713 = vcombine.high %v651, %v655
        %v715 = vunpack.c.l.s4 1983009808
        %v716 = vunpack.c.0.s8 %v715
        %v717 = vlaneseq
        %v718 = vshrl.u32 %v717, 7
        %v719 = vsub.s32 %v716, %v718
        %v720 = vrot.slane %v712, %v719
        %v722 = vunpack.c.l.s4 1983009808
        %v723 = vunpack.c.0.s8 %v722
        %v724 = vlaneseq
        %v725 = vshrl.u32 %v724, 7
        %v726 = vsub.s32 %v723, %v725
        %v727 = vrot.slane %v713, %v726
        %v728 = vcombine.low %v672, %v688
        %v729 = vcombine.high %v672, %v688
        %v731 = vunpack.c.l.s4 1934713408
        %v732 = vunpack.c.0.s8 %v731
        %v733 = vlaneseq
        %v734 = vshrl.u32 %v733, 7
        %v735 = vsub.s32 %v732, %v734
        %v736 = vrot.slane %v728, %v735
        %v738 = vunpack.c.l.s4 1934713408
        %v739 = vunpack.c.0.s8 %v738
        %v740 = vlaneseq
        %v741 = vshrl.u32 %v740, 7
        %v742 = vsub.s32 %v739, %v741
        %v743 = vrot.slane %v729, %v742
        %v744 = vcombine.low %v679, %v695
        %v745 = vcombine.high %v679, %v695
        %v747 = vunpack.c.l.s4 1934713408
        %v748 = vunpack.c.0.s8 %v747
        %v749 = vlaneseq
        %v750 = vshrl.u32 %v749, 7
        %v751 = vsub.s32 %v748, %v750
        %v752 = vrot.slane %v744, %v751
        %v754 = vunpack.c.l.s4 1934713408
        %v755 = vunpack.c.0.s8 %v754
        %v756 = vlaneseq
        %v757 = vshrl.u32 %v756, 7
        %v758 = vsub.s32 %v755, %v757
        %v759 = vrot.slane %v745, %v758
        %v760 = vcombine.low %v704, %v720
        %v761 = vcombine.high %v704, %v720
        %v763 = vunpack.c.l.s4 1934713408
        %v764 = vunpack.c.0.s8 %v763
        %v765 = vlaneseq
        %v766 = vshrl.u32 %v765, 7
        %v767 = vsub.s32 %v764, %v766
        %v768 = vrot.slane %v760, %v767
        %v770 = vunpack.c.l.s4 1934713408
        %v771 = vunpack.c.0.s8 %v770
        %v772 = vlaneseq
        %v773 = vshrl.u32 %v772, 7
        %v774 = vsub.s32 %v771, %v773
        %v775 = vrot.slane %v761, %v774
        %v776 = vcombine.low %v711, %v727
        %v777 = vcombine.high %v711, %v727
        %v779 = vunpack.c.l.s4 1934713408
        %v780 = vunpack.c.0.s8 %v779
        %v781 = vlaneseq
        %v782 = vshrl.u32 %v781, 7
        %v783 = vsub.s32 %v780, %v782
        %v784 = vrot.slane %v776, %v783
        %v786 = vunpack.c.l.s4 1934713408
        %v787 = vunpack.c.0.s8 %v786
        %v788 = vlaneseq
        %v789 = vshrl.u32 %v788, 7
        %v790 = vsub.s32 %v787, %v789
        %v791 = vrot.slane %v777, %v790
        %v792 = vcombine.low %v736, %v768
        %v793 = vcombine.high %v736, %v768
        %v794 = vcombine.low %v743, %v775
        %v795 = vcombine.high %v743, %v775
        %v796 = vcombine.low %v752, %v784
        %v797 = vcombine.high %v752, %v784
        %v798 = vcombine.low %v759, %v791
        %v799 = vcombine.high %v759, %v791
        %v800 = vcombine.low %v792, %v794
        %v801 = vcombine.high %v792, %v794
        %v803 = vunpack.c.l.s4 1983009808
        %v804 = vunpack.c.0.s8 %v803
        %v805 = vlaneseq
        %v806 = vshrl.u32 %v805, 7
        %v807 = vsub.s32 %v804, %v806
        %v808 = vrot.slane %v800, %v807
        %v810 = vunpack.c.l.s4 1983009808
        %v811 = vunpack.c.0.s8 %v810
        %v812 = vlaneseq
        %v813 = vshrl.u32 %v812, 7
        %v814 = vsub.s32 %v811, %v813
        %v815 = vrot.slane %v801, %v814
        %v816 = vcombine.low %v793, %v795
        %v817 = vcombine.high %v793, %v795
        %v819 = vunpack.c.l.s4 1983009808
        %v820 = vunpack.c.0.s8 %v819
        %v821 = vlaneseq
        %v822 = vshrl.u32 %v821, 7
        %v823 = vsub.s32 %v820, %v822
        %v824 = vrot.slane %v816, %v823
        %v826 = vunpack.c.l.s4 1983009808
        %v827 = vunpack.c.0.s8 %v826
        %v828 = vlaneseq
        %v829 = vshrl.u32 %v828, 7
        %v830 = vsub.s32 %v827, %v829
        %v831 = vrot.slane %v817, %v830
        %v832 = vcombine.low %v796, %v798
        %v833 = vcombine.high %v796, %v798
        %v835 = vunpack.c.l.s4 1983009808
        %v836 = vunpack.c.0.s8 %v835
        %v837 = vlaneseq
        %v838 = vshrl.u32 %v837, 7
        %v839 = vsub.s32 %v836, %v838
        %v840 = vrot.slane %v832, %v839
        %v842 = vunpack.c.l.s4 1983009808
        %v843 = vunpack.c.0.s8 %v842
        %v844 = vlaneseq
        %v845 = vshrl.u32 %v844, 7
        %v846 = vsub.s32 %v843, %v845
        %v847 = vrot.slane %v833, %v846
        %v848 = vcombine.low %v797, %v799
        %v849 = vcombine.high %v797, %v799
        %v851 = vunpack.c.l.s4 1983009808
        %v852 = vunpack.c.0.s8 %v851
        %v853 = vlaneseq
        %v854 = vshrl.u32 %v853, 7
        %v855 = vsub.s32 %v852, %v854
        %v856 = vrot.slane %v848, %v855
        %v858 = vunpack.c.l.s4 1983009808
        %v859 = vunpack.c.0.s8 %v858
        %v860 = vlaneseq
        %v861 = vshrl.u32 %v860, 7
        %v862 = vsub.s32 %v859, %v861
        %v863 = vrot.slane %v849, %v862
        %v864 = vcombine.low %v808, %v824
        %v865 = vcombine.high %v808, %v824
        %v867 = vunpack.c.l.s4 1934713408
        %v868 = vunpack.c.0.s8 %v867
        %v869 = vlaneseq
        %v870 = vshrl.u32 %v869, 7
        %v871 = vsub.s32 %v868, %v870
        %v872 = vrot.slane %v864, %v871
        %v874 = vunpack.c.l.s4 1934713408
        %v875 = vunpack.c.0.s8 %v874
        %v876 = vlaneseq
        %v877 = vshrl.u32 %v876, 7
        %v878 = vsub.s32 %v875, %v877
        %v879 = vrot.slane %v865, %v878
        %v880 = vcombine.low %v815, %v831
        %v881 = vcombine.high %v815, %v831
        %v883 = vunpack.c.l.s4 1934713408
        %v884 = vunpack.c.0.s8 %v883
        %v885 = vlaneseq
        %v886 = vshrl.u32 %v885, 7
        %v887 = vsub.s32 %v884, %v886
        %v888 = vrot.slane %v880, %v887
        %v890 = vunpack.c.l.s4 1934713408
        %v891 = vunpack.c.0.s8 %v890
        %v892 = vlaneseq
        %v893 = vshrl.u32 %v892, 7
        %v894 = vsub.s32 %v891, %v893
        %v895 = vrot.slane %v881, %v894
        %v896 = vcombine.low %v840, %v856
        %v897 = vcombine.high %v840, %v856
        %v899 = vunpack.c.l.s4 1934713408
        %v900 = vunpack.c.0.s8 %v899
        %v901 = vlaneseq
        %v902 = vshrl.u32 %v901, 7
        %v903 = vsub.s32 %v900, %v902
        %v904 = vrot.slane %v896, %v903
        %v906 = vunpack.c.l.s4 1934713408
        %v907 = vunpack.c.0.s8 %v906
        %v908 = vlaneseq
        %v909 = vshrl.u32 %v908, 7
        %v910 = vsub.s32 %v907, %v909
        %v911 = vrot.slane %v897, %v910
        %v912 = vcombine.low %v847, %v863
        %v913 = vcombine.high %v847, %v863
        %v915 = vunpack.c.l.s4 1934713408
        %v916 = vunpack.c.0.s8 %v915
        %v917 = vlaneseq
        %v918 = vshrl.u32 %v917, 7
        %v919 = vsub.s32 %v916, %v918
        %v920 = vrot.slane %v912, %v919
        %v922 = vunpack.c.l.s4 1934713408
        %v923 = vunpack.c.0.s8 %v922
        %v924 = vlaneseq
        %v925 = vshrl.u32 %v924, 7
        %v926 = vsub.s32 %v923, %v925
        %v927 = vrot.slane %v913, %v926
        %v928 = vcombine.low %v872, %v904
        %v929 = vcombine.high %v872, %v904
        %v930 = vcombine.low %v879, %v911
        %v931 = vcombine.high %v879, %v911
        %v932 = vcombine.low %v888, %v920
        %v933 = vcombine.high %v888, %v920
        %v934 = vcombine.low %v895, %v927
        %v935 = vcombine.high %v895, %v927
        %v936 = vpack.c.bf16 %v928, %v928
        %v937 = vpack.c.bf16 %v929, %v929
        %v938 = vpack.c.bf16 %v930, %v930
        %v939 = vpack.c.bf16 %v931, %v931
        %v940 = vpack.c.bf16 %v932, %v932
        %v941 = vpack.c.bf16 %v933, %v933
        %v942 = vpack.c.bf16 %v934, %v934
        %v943 = vpack.c.bf16 %v935, %v935
        %944 = vrot.lane.b32.xlu0 %v333, 64
        %v945 = vpop.permute.xlu0 %944
        %946 = vrot.lane.b32.xlu0 %v340, 64
        %v947 = vpop.permute.xlu0 %946
        %948 = vrot.lane.b32.xlu0 %v343, 64
        %v949 = vpop.permute.xlu0 %948
        %950 = vrot.lane.b32.xlu0 %v346, 64
        %v951 = vpop.permute.xlu0 %950
        %952 = vrot.lane.b32.xlu0 %v349, 64
        %v953 = vpop.permute.xlu0 %952
        %954 = vrot.lane.b32.xlu0 %v352, 64
        %v955 = vpop.permute.xlu0 %954
        %956 = vrot.lane.b32.xlu0 %v355, 64
        %v957 = vpop.permute.xlu0 %956
        %958 = vrot.lane.b32.xlu0 %v358, 64
        %v959 = vpop.permute.xlu0 %958
        %v968 = vcombine.low %v945, %v949
        %v969 = vcombine.high %v945, %v949
        %v971 = vunpack.c.l.s4 1983009808
        %v972 = vunpack.c.0.s8 %v971
        %v973 = vlaneseq
        %v974 = vshrl.u32 %v973, 7
        %v975 = vsub.s32 %v972, %v974
        %v976 = vrot.slane %v968, %v975
        %v978 = vunpack.c.l.s4 1983009808
        %v979 = vunpack.c.0.s8 %v978
        %v980 = vlaneseq
        %v981 = vshrl.u32 %v980, 7
        %v982 = vsub.s32 %v979, %v981
        %v983 = vrot.slane %v969, %v982
        %v984 = vcombine.low %v947, %v951
        %v985 = vcombine.high %v947, %v951
        %v987 = vunpack.c.l.s4 1983009808
        %v988 = vunpack.c.0.s8 %v987
        %v989 = vlaneseq
        %v990 = vshrl.u32 %v989, 7
        %v991 = vsub.s32 %v988, %v990
        %v992 = vrot.slane %v984, %v991
        %v994 = vunpack.c.l.s4 1983009808
        %v995 = vunpack.c.0.s8 %v994
        %v996 = vlaneseq
        %v997 = vshrl.u32 %v996, 7
        %v998 = vsub.s32 %v995, %v997
        %v999 = vrot.slane %v985, %v998
        %v1000 = vcombine.low %v953, %v957
        %v1001 = vcombine.high %v953, %v957
        %v1003 = vunpack.c.l.s4 1983009808
        %v1004 = vunpack.c.0.s8 %v1003
        %v1005 = vlaneseq
        %v1006 = vshrl.u32 %v1005, 7
        %v1007 = vsub.s32 %v1004, %v1006
        %v1008 = vrot.slane %v1000, %v1007
        %v1010 = vunpack.c.l.s4 1983009808
        %v1011 = vunpack.c.0.s8 %v1010
        %v1012 = vlaneseq
        %v1013 = vshrl.u32 %v1012, 7
        %v1014 = vsub.s32 %v1011, %v1013
        %v1015 = vrot.slane %v1001, %v1014
        %v1016 = vcombine.low %v955, %v959
        %v1017 = vcombine.high %v955, %v959
        %v1019 = vunpack.c.l.s4 1983009808
        %v1020 = vunpack.c.0.s8 %v1019
        %v1021 = vlaneseq
        %v1022 = vshrl.u32 %v1021, 7
        %v1023 = vsub.s32 %v1020, %v1022
        %v1024 = vrot.slane %v1016, %v1023
        %v1026 = vunpack.c.l.s4 1983009808
        %v1027 = vunpack.c.0.s8 %v1026
        %v1028 = vlaneseq
        %v1029 = vshrl.u32 %v1028, 7
        %v1030 = vsub.s32 %v1027, %v1029
        %v1031 = vrot.slane %v1017, %v1030
        %v1032 = vcombine.low %v976, %v992
        %v1033 = vcombine.high %v976, %v992
        %v1035 = vunpack.c.l.s4 1934713408
        %v1036 = vunpack.c.0.s8 %v1035
        %v1037 = vlaneseq
        %v1038 = vshrl.u32 %v1037, 7
        %v1039 = vsub.s32 %v1036, %v1038
        %v1040 = vrot.slane %v1032, %v1039
        %v1042 = vunpack.c.l.s4 1934713408
        %v1043 = vunpack.c.0.s8 %v1042
        %v1044 = vlaneseq
        %v1045 = vshrl.u32 %v1044, 7
        %v1046 = vsub.s32 %v1043, %v1045
        %v1047 = vrot.slane %v1033, %v1046
        %v1048 = vcombine.low %v983, %v999
        %v1049 = vcombine.high %v983, %v999
        %v1051 = vunpack.c.l.s4 1934713408
        %v1052 = vunpack.c.0.s8 %v1051
        %v1053 = vlaneseq
        %v1054 = vshrl.u32 %v1053, 7
        %v1055 = vsub.s32 %v1052, %v1054
        %v1056 = vrot.slane %v1048, %v1055
        %v1058 = vunpack.c.l.s4 1934713408
        %v1059 = vunpack.c.0.s8 %v1058
        %v1060 = vlaneseq
        %v1061 = vshrl.u32 %v1060, 7
        %v1062 = vsub.s32 %v1059, %v1061
        %v1063 = vrot.slane %v1049, %v1062
        %v1064 = vcombine.low %v1008, %v1024
        %v1065 = vcombine.high %v1008, %v1024
        %v1067 = vunpack.c.l.s4 1934713408
        %v1068 = vunpack.c.0.s8 %v1067
        %v1069 = vlaneseq
        %v1070 = vshrl.u32 %v1069, 7
        %v1071 = vsub.s32 %v1068, %v1070
        %v1072 = vrot.slane %v1064, %v1071
        %v1074 = vunpack.c.l.s4 1934713408
        %v1075 = vunpack.c.0.s8 %v1074
        %v1076 = vlaneseq
        %v1077 = vshrl.u32 %v1076, 7
        %v1078 = vsub.s32 %v1075, %v1077
        %v1079 = vrot.slane %v1065, %v1078
        %v1080 = vcombine.low %v1015, %v1031
        %v1081 = vcombine.high %v1015, %v1031
        %v1083 = vunpack.c.l.s4 1934713408
        %v1084 = vunpack.c.0.s8 %v1083
        %v1085 = vlaneseq
        %v1086 = vshrl.u32 %v1085, 7
        %v1087 = vsub.s32 %v1084, %v1086
        %v1088 = vrot.slane %v1080, %v1087
        %v1090 = vunpack.c.l.s4 1934713408
        %v1091 = vunpack.c.0.s8 %v1090
        %v1092 = vlaneseq
        %v1093 = vshrl.u32 %v1092, 7
        %v1094 = vsub.s32 %v1091, %v1093
        %v1095 = vrot.slane %v1081, %v1094
        %v1096 = vcombine.low %v1040, %v1072
        %v1097 = vcombine.high %v1040, %v1072
        %v1098 = vcombine.low %v1047, %v1079
        %v1099 = vcombine.high %v1047, %v1079
        %v1100 = vcombine.low %v1056, %v1088
        %v1101 = vcombine.high %v1056, %v1088
        %v1102 = vcombine.low %v1063, %v1095
        %v1103 = vcombine.high %v1063, %v1095
        %v1104 = vcombine.low %v1096, %v1098
        %v1105 = vcombine.high %v1096, %v1098
        %v1107 = vunpack.c.l.s4 1983009808
        %v1108 = vunpack.c.0.s8 %v1107
        %v1109 = vlaneseq
        %v1110 = vshrl.u32 %v1109, 7
        %v1111 = vsub.s32 %v1108, %v1110
        %v1112 = vrot.slane %v1104, %v1111
        %v1114 = vunpack.c.l.s4 1983009808
        %v1115 = vunpack.c.0.s8 %v1114
        %v1116 = vlaneseq
        %v1117 = vshrl.u32 %v1116, 7
        %v1118 = vsub.s32 %v1115, %v1117
        %v1119 = vrot.slane %v1105, %v1118
        %v1120 = vcombine.low %v1097, %v1099
        %v1121 = vcombine.high %v1097, %v1099
        %v1123 = vunpack.c.l.s4 1983009808
        %v1124 = vunpack.c.0.s8 %v1123
        %v1125 = vlaneseq
        %v1126 = vshrl.u32 %v1125, 7
        %v1127 = vsub.s32 %v1124, %v1126
        %v1128 = vrot.slane %v1120, %v1127
        %v1130 = vunpack.c.l.s4 1983009808
        %v1131 = vunpack.c.0.s8 %v1130
        %v1132 = vlaneseq
        %v1133 = vshrl.u32 %v1132, 7
        %v1134 = vsub.s32 %v1131, %v1133
        %v1135 = vrot.slane %v1121, %v1134
        %v1136 = vcombine.low %v1100, %v1102
        %v1137 = vcombine.high %v1100, %v1102
        %v1139 = vunpack.c.l.s4 1983009808
        %v1140 = vunpack.c.0.s8 %v1139
        %v1141 = vlaneseq
        %v1142 = vshrl.u32 %v1141, 7
        %v1143 = vsub.s32 %v1140, %v1142
        %v1144 = vrot.slane %v1136, %v1143
        %v1146 = vunpack.c.l.s4 1983009808
        %v1147 = vunpack.c.0.s8 %v1146
        %v1148 = vlaneseq
        %v1149 = vshrl.u32 %v1148, 7
        %v1150 = vsub.s32 %v1147, %v1149
        %v1151 = vrot.slane %v1137, %v1150
        %v1152 = vcombine.low %v1101, %v1103
        %v1153 = vcombine.high %v1101, %v1103
        %v1155 = vunpack.c.l.s4 1983009808
        %v1156 = vunpack.c.0.s8 %v1155
        %v1157 = vlaneseq
        %v1158 = vshrl.u32 %v1157, 7
        %v1159 = vsub.s32 %v1156, %v1158
        %v1160 = vrot.slane %v1152, %v1159
        %v1162 = vunpack.c.l.s4 1983009808
        %v1163 = vunpack.c.0.s8 %v1162
        %v1164 = vlaneseq
        %v1165 = vshrl.u32 %v1164, 7
        %v1166 = vsub.s32 %v1163, %v1165
        %v1167 = vrot.slane %v1153, %v1166
        %v1168 = vcombine.low %v1112, %v1128
        %v1169 = vcombine.high %v1112, %v1128
        %v1171 = vunpack.c.l.s4 1934713408
        %v1172 = vunpack.c.0.s8 %v1171
        %v1173 = vlaneseq
        %v1174 = vshrl.u32 %v1173, 7
        %v1175 = vsub.s32 %v1172, %v1174
        %v1176 = vrot.slane %v1168, %v1175
        %v1178 = vunpack.c.l.s4 1934713408
        %v1179 = vunpack.c.0.s8 %v1178
        %v1180 = vlaneseq
        %v1181 = vshrl.u32 %v1180, 7
        %v1182 = vsub.s32 %v1179, %v1181
        %v1183 = vrot.slane %v1169, %v1182
        %v1184 = vcombine.low %v1119, %v1135
        %v1185 = vcombine.high %v1119, %v1135
        %v1187 = vunpack.c.l.s4 1934713408
        %v1188 = vunpack.c.0.s8 %v1187
        %v1189 = vlaneseq
        %v1190 = vshrl.u32 %v1189, 7
        %v1191 = vsub.s32 %v1188, %v1190
        %v1192 = vrot.slane %v1184, %v1191
        %v1194 = vunpack.c.l.s4 1934713408
        %v1195 = vunpack.c.0.s8 %v1194
        %v1196 = vlaneseq
        %v1197 = vshrl.u32 %v1196, 7
        %v1198 = vsub.s32 %v1195, %v1197
        %v1199 = vrot.slane %v1185, %v1198
        %v1200 = vcombine.low %v1144, %v1160
        %v1201 = vcombine.high %v1144, %v1160
        %v1203 = vunpack.c.l.s4 1934713408
        %v1204 = vunpack.c.0.s8 %v1203
        %v1205 = vlaneseq
        %v1206 = vshrl.u32 %v1205, 7
        %v1207 = vsub.s32 %v1204, %v1206
        %v1208 = vrot.slane %v1200, %v1207
        %v1210 = vunpack.c.l.s4 1934713408
        %v1211 = vunpack.c.0.s8 %v1210
        %v1212 = vlaneseq
        %v1213 = vshrl.u32 %v1212, 7
        %v1214 = vsub.s32 %v1211, %v1213
        %v1215 = vrot.slane %v1201, %v1214
        %v1216 = vcombine.low %v1151, %v1167
        %v1217 = vcombine.high %v1151, %v1167
        %v1219 = vunpack.c.l.s4 1934713408
        %v1220 = vunpack.c.0.s8 %v1219
        %v1221 = vlaneseq
        %v1222 = vshrl.u32 %v1221, 7
        %v1223 = vsub.s32 %v1220, %v1222
        %v1224 = vrot.slane %v1216, %v1223
        %v1226 = vunpack.c.l.s4 1934713408
        %v1227 = vunpack.c.0.s8 %v1226
        %v1228 = vlaneseq
        %v1229 = vshrl.u32 %v1228, 7
        %v1230 = vsub.s32 %v1227, %v1229
        %v1231 = vrot.slane %v1217, %v1230
        %v1232 = vcombine.low %v1176, %v1208
        %v1233 = vcombine.high %v1176, %v1208
        %v1234 = vcombine.low %v1183, %v1215
        %v1235 = vcombine.high %v1183, %v1215
        %v1236 = vcombine.low %v1192, %v1224
        %v1237 = vcombine.high %v1192, %v1224
        %v1238 = vcombine.low %v1199, %v1231
        %v1239 = vcombine.high %v1199, %v1231
        %v1240 = vpack.c.bf16 %v1232, %v1232
        %v1241 = vpack.c.bf16 %v1233, %v1233
        %v1242 = vpack.c.bf16 %v1234, %v1234
        %v1243 = vpack.c.bf16 %v1235, %v1235
        %v1244 = vpack.c.bf16 %v1236, %v1236
        %v1245 = vpack.c.bf16 %v1237, %v1237
        %v1246 = vpack.c.bf16 %v1238, %v1238
        %v1247 = vpack.c.bf16 %v1239, %v1239
        %vm1248 = vcmask 31744
        %v1250 = vsel %vm1248, %v632, 0
        %v1253 = vsel %vm1248, %v936, 0
        %1255 = vmatprep.subr.bf16.mxu0 0
        %1256 = vmatpush1.bf16.xpose.msra.mxu0 %v1253
        %1257 = vmatprep.subr.bf16.mxu0 0
        %1258 = vmatpush1.bf16.xpose.msra.mxu0 0
        %1259 = vmatprep.subr.bf16.mxu0 0
        %1260 = vmatpush1.bf16.xpose.msra.mxu0 0
        %1261 = vmatprep.subr.bf16.mxu0 0
        %1262 = vmatpush1.bf16.xpose.msra.mxu0 0
        %1263 = vmatprep.subr.bf16.mxu0 0
        %1264 = vmatpush1.bf16.xpose.msra.mxu0 0
        %1265 = vmatprep.subr.bf16.mxu0 0
        %1266 = vmatpush1.bf16.xpose.msra.mxu0 0
        %1267 = vmatprep.subr.bf16.mxu0 0
        %1268 = vmatpush1.bf16.xpose.msra.mxu0 0
        %1269 = vmatprep.subr.bf16.mxu0 0
        %1270 = vmatpush1.bf16.xpose.msra.mxu0 0
        %1271 = vmatprep.subr.bf16.mxu0 0
        %1272 = vmatpush1.bf16.xpose.msra.mxu0 0
        %1273 = vmatprep.subr.bf16.mxu0 0
        %1274 = vmatpush1.bf16.xpose.msra.mxu0 0
        %1275 = vmatprep.subr.bf16.mxu0 0
        %1276 = vmatpush1.bf16.xpose.msra.mxu0 0
        %1277 = vmatprep.subr.bf16.mxu0 0
        %1278 = vmatpush1.bf16.xpose.msra.mxu0 0
        %1279 = vmatprep.subr.bf16.mxu0 0
        %1280 = vmatpush1.bf16.xpose.msra.mxu0 0
        %1281 = vmatprep.subr.bf16.mxu0 0
        %1282 = vmatpush1.bf16.xpose.msra.mxu0 0
        %1283 = vmatprep.subr.bf16.mxu0 0
        %1284 = vmatpush1.bf16.xpose.msra.mxu0 0
        %1285 = vmatprep.subr.bf16.mxu0 0
        %1286 = vmatpush1.bf16.xpose.msra.mxu0 0
        %1287 = vmatprep.mubr.bf16.mxu0 0
        %1288 = vmatmul.mubr.bf16.gmra.mrb[0].mxu0 %v1250
        %v1289 = vpop.f32.mrb[0].mxu0
        %v1290 = vadd.f32 0.0, %v1289
        %v1291 = vpop.f32.mrb[0].mxu0
        %v1292 = vpop.f32.mrb[0].mxu0
        %v1293 = vpop.f32.mrb[0].mxu0
        %1294 = vdwg.mxu0
        %v1296 = vsel %vm1248, %v633, 0
        %v1299 = vsel %vm1248, %v937, 0
        %1301 = vmatprep.subr.bf16.mxu0 0
        %1302 = vmatpush1.bf16.xpose.msra.mxu0 %v1299
        %1303 = vmatprep.subr.bf16.mxu0 0
        %1304 = vmatpush1.bf16.xpose.msra.mxu0 0
        %1305 = vmatprep.subr.bf16.mxu0 0
        %1306 = vmatpush1.bf16.xpose.msra.mxu0 0
        %1307 = vmatprep.subr.bf16.mxu0 0
        %1308 = vmatpush1.bf16.xpose.msra.mxu0 0
        %1309 = vmatprep.subr.bf16.mxu0 0
        %1310 = vmatpush1.bf16.xpose.msra.mxu0 0
        %1311 = vmatprep.subr.bf16.mxu0 0
        %1312 = vmatpush1.bf16.xpose.msra.mxu0 0
        %1313 = vmatprep.subr.bf16.mxu0 0
        %1314 = vmatpush1.bf16.xpose.msra.mxu0 0
        %1315 = vmatprep.subr.bf16.mxu0 0
        %1316 = vmatpush1.bf16.xpose.msra.mxu0 0
        %1317 = vmatprep.subr.bf16.mxu0 0
        %1318 = vmatpush1.bf16.xpose.msra.mxu0 0
        %1319 = vmatprep.subr.bf16.mxu0 0
        %1320 = vmatpush1.bf16.xpose.msra.mxu0 0
        %1321 = vmatprep.subr.bf16.mxu0 0
        %1322 = vmatpush1.bf16.xpose.msra.mxu0 0
        %1323 = vmatprep.subr.bf16.mxu0 0
        %1324 = vmatpush1.bf16.xpose.msra.mxu0 0
        %1325 = vmatprep.subr.bf16.mxu0 0
        %1326 = vmatpush1.bf16.xpose.msra.mxu0 0
        %1327 = vmatprep.subr.bf16.mxu0 0
        %1328 = vmatpush1.bf16.xpose.msra.mxu0 0
        %1329 = vmatprep.subr.bf16.mxu0 0
        %1330 = vmatpush1.bf16.xpose.msra.mxu0 0
        %1331 = vmatprep.subr.bf16.mxu0 0
        %1332 = vmatpush1.bf16.xpose.msra.mxu0 0
        %1333 = vmatprep.mubr.bf16.mxu0 0
        %1334 = vmatmul.mubr.bf16.gmra.mrb[0].mxu0 %v1296
        %v1335 = vpop.f32.mrb[0].mxu0
        %v1336 = vadd.f32 0.0, %v1335
        %v1337 = vpop.f32.mrb[0].mxu0
        %v1338 = vpop.f32.mrb[0].mxu0
        %v1339 = vpop.f32.mrb[0].mxu0
        %1340 = vdwg.mxu0
        %v1342 = vsel %vm1248, %v634, 0
        %v1345 = vsel %vm1248, %v938, 0
        %1347 = vmatprep.subr.bf16.mxu0 0
        %1348 = vmatpush1.bf16.xpose.msra.mxu0 %v1345
        %1349 = vmatprep.subr.bf16.mxu0 0
        %1350 = vmatpush1.bf16.xpose.msra.mxu0 0
        %1351 = vmatprep.subr.bf16.mxu0 0
        %1352 = vmatpush1.bf16.xpose.msra.mxu0 0
        %1353 = vmatprep.subr.bf16.mxu0 0
        %1354 = vmatpush1.bf16.xpose.msra.mxu0 0
        %1355 = vmatprep.subr.bf16.mxu0 0
        %1356 = vmatpush1.bf16.xpose.msra.mxu0 0
        %1357 = vmatprep.subr.bf16.mxu0 0
        %1358 = vmatpush1.bf16.xpose.msra.mxu0 0
        %1359 = vmatprep.subr.bf16.mxu0 0
        %1360 = vmatpush1.bf16.xpose.msra.mxu0 0
        %1361 = vmatprep.subr.bf16.mxu0 0
        %1362 = vmatpush1.bf16.xpose.msra.mxu0 0
        %1363 = vmatprep.subr.bf16.mxu0 0
        %1364 = vmatpush1.bf16.xpose.msra.mxu0 0
        %1365 = vmatprep.subr.bf16.mxu0 0
        %1366 = vmatpush1.bf16.xpose.msra.mxu0 0
        %1367 = vmatprep.subr.bf16.mxu0 0
        %1368 = vmatpush1.bf16.xpose.msra.mxu0 0
        %1369 = vmatprep.subr.bf16.mxu0 0
        %1370 = vmatpush1.bf16.xpose.msra.mxu0 0
        %1371 = vmatprep.subr.bf16.mxu0 0
        %1372 = vmatpush1.bf16.xpose.msra.mxu0 0
        %1373 = vmatprep.subr.bf16.mxu0 0
        %1374 = vmatpush1.bf16.xpose.msra.mxu0 0
        %1375 = vmatprep.subr.bf16.mxu0 0
        %1376 = vmatpush1.bf16.xpose.msra.mxu0 0
        %1377 = vmatprep.subr.bf16.mxu0 0
        %1378 = vmatpush1.bf16.xpose.msra.mxu0 0
        %1379 = vmatprep.mubr.bf16.mxu0 0
        %1380 = vmatmul.mubr.bf16.gmra.mrb[0].mxu0 %v1342
        %v1381 = vpop.f32.mrb[0].mxu0
        %v1382 = vadd.f32 0.0, %v1381
        %v1383 = vpop.f32.mrb[0].mxu0
        %v1384 = vpop.f32.mrb[0].mxu0
        %v1385 = vpop.f32.mrb[0].mxu0
        %1386 = vdwg.mxu0
        %v1388 = vsel %vm1248, %v635, 0
        %v1391 = vsel %vm1248, %v939, 0
        %1393 = vmatprep.subr.bf16.mxu0 0
        %1394 = vmatpush1.bf16.xpose.msra.mxu0 %v1391
        %1395 = vmatprep.subr.bf16.mxu0 0
        %1396 = vmatpush1.bf16.xpose.msra.mxu0 0
        %1397 = vmatprep.subr.bf16.mxu0 0
        %1398 = vmatpush1.bf16.xpose.msra.mxu0 0
        %1399 = vmatprep.subr.bf16.mxu0 0
        %1400 = vmatpush1.bf16.xpose.msra.mxu0 0
        %1401 = vmatprep.subr.bf16.mxu0 0
        %1402 = vmatpush1.bf16.xpose.msra.mxu0 0
        %1403 = vmatprep.subr.bf16.mxu0 0
        %1404 = vmatpush1.bf16.xpose.msra.mxu0 0
        %1405 = vmatprep.subr.bf16.mxu0 0
        %1406 = vmatpush1.bf16.xpose.msra.mxu0 0
        %1407 = vmatprep.subr.bf16.mxu0 0
        %1408 = vmatpush1.bf16.xpose.msra.mxu0 0
        %1409 = vmatprep.subr.bf16.mxu0 0
        %1410 = vmatpush1.bf16.xpose.msra.mxu0 0
        %1411 = vmatprep.subr.bf16.mxu0 0
        %1412 = vmatpush1.bf16.xpose.msra.mxu0 0
        %1413 = vmatprep.subr.bf16.mxu0 0
        %1414 = vmatpush1.bf16.xpose.msra.mxu0 0
        %1415 = vmatprep.subr.bf16.mxu0 0
        %1416 = vmatpush1.bf16.xpose.msra.mxu0 0
        %1417 = vmatprep.subr.bf16.mxu0 0
        %1418 = vmatpush1.bf16.xpose.msra.mxu0 0
        %1419 = vmatprep.subr.bf16.mxu0 0
        %1420 = vmatpush1.bf16.xpose.msra.mxu0 0
        %1421 = vmatprep.subr.bf16.mxu0 0
        %1422 = vmatpush1.bf16.xpose.msra.mxu0 0
        %1423 = vmatprep.subr.bf16.mxu0 0
        %1424 = vmatpush1.bf16.xpose.msra.mxu0 0
        %1425 = vmatprep.mubr.bf16.mxu0 0
        %1426 = vmatmul.mubr.bf16.gmra.mrb[0].mxu0 %v1388
        %v1427 = vpop.f32.mrb[0].mxu0
        %v1428 = vadd.f32 0.0, %v1427
        %v1429 = vpop.f32.mrb[0].mxu0
        %v1430 = vpop.f32.mrb[0].mxu0
        %v1431 = vpop.f32.mrb[0].mxu0
        %1432 = vdwg.mxu0
        %v1434 = vsel %vm1248, %v636, 0
        %v1437 = vsel %vm1248, %v940, 0
        %1439 = vmatprep.subr.bf16.mxu0 0
        %1440 = vmatpush1.bf16.xpose.msra.mxu0 %v1437
        %1441 = vmatprep.subr.bf16.mxu0 0
        %1442 = vmatpush1.bf16.xpose.msra.mxu0 0
        %1443 = vmatprep.subr.bf16.mxu0 0
        %1444 = vmatpush1.bf16.xpose.msra.mxu0 0
        %1445 = vmatprep.subr.bf16.mxu0 0
        %1446 = vmatpush1.bf16.xpose.msra.mxu0 0
        %1447 = vmatprep.subr.bf16.mxu0 0
        %1448 = vmatpush1.bf16.xpose.msra.mxu0 0
        %1449 = vmatprep.subr.bf16.mxu0 0
        %1450 = vmatpush1.bf16.xpose.msra.mxu0 0
        %1451 = vmatprep.subr.bf16.mxu0 0
        %1452 = vmatpush1.bf16.xpose.msra.mxu0 0
        %1453 = vmatprep.subr.bf16.mxu0 0
        %1454 = vmatpush1.bf16.xpose.msra.mxu0 0
        %1455 = vmatprep.subr.bf16.mxu0 0
        %1456 = vmatpush1.bf16.xpose.msra.mxu0 0
        %1457 = vmatprep.subr.bf16.mxu0 0
        %1458 = vmatpush1.bf16.xpose.msra.mxu0 0
        %1459 = vmatprep.subr.bf16.mxu0 0
        %1460 = vmatpush1.bf16.xpose.msra.mxu0 0
        %1461 = vmatprep.subr.bf16.mxu0 0
        %1462 = vmatpush1.bf16.xpose.msra.mxu0 0
        %1463 = vmatprep.subr.bf16.mxu0 0
        %1464 = vmatpush1.bf16.xpose.msra.mxu0 0
        %1465 = vmatprep.subr.bf16.mxu0 0
        %1466 = vmatpush1.bf16.xpose.msra.mxu0 0
        %1467 = vmatprep.subr.bf16.mxu0 0
        %1468 = vmatpush1.bf16.xpose.msra.mxu0 0
        %1469 = vmatprep.subr.bf16.mxu0 0
        %1470 = vmatpush1.bf16.xpose.msra.mxu0 0
        %1471 = vmatprep.mubr.bf16.mxu0 0
        %1472 = vmatmul.mubr.bf16.gmra.mrb[0].mxu0 %v1434
        %v1473 = vpop.f32.mrb[0].mxu0
        %v1474 = vadd.f32 0.0, %v1473
        %v1475 = vpop.f32.mrb[0].mxu0
        %v1476 = vpop.f32.mrb[0].mxu0
        %v1477 = vpop.f32.mrb[0].mxu0
        %1478 = vdwg.mxu0
        %v1480 = vsel %vm1248, %v637, 0
        %v1483 = vsel %vm1248, %v941, 0
        %1485 = vmatprep.subr.bf16.mxu0 0
        %1486 = vmatpush1.bf16.xpose.msra.mxu0 %v1483
        %1487 = vmatprep.subr.bf16.mxu0 0
        %1488 = vmatpush1.bf16.xpose.msra.mxu0 0
        %1489 = vmatprep.subr.bf16.mxu0 0
        %1490 = vmatpush1.bf16.xpose.msra.mxu0 0
        %1491 = vmatprep.subr.bf16.mxu0 0
        %1492 = vmatpush1.bf16.xpose.msra.mxu0 0
        %1493 = vmatprep.subr.bf16.mxu0 0
        %1494 = vmatpush1.bf16.xpose.msra.mxu0 0
        %1495 = vmatprep.subr.bf16.mxu0 0
        %1496 = vmatpush1.bf16.xpose.msra.mxu0 0
        %1497 = vmatprep.subr.bf16.mxu0 0
        %1498 = vmatpush1.bf16.xpose.msra.mxu0 0
        %1499 = vmatprep.subr.bf16.mxu0 0
        %1500 = vmatpush1.bf16.xpose.msra.mxu0 0
        %1501 = vmatprep.subr.bf16.mxu0 0
        %1502 = vmatpush1.bf16.xpose.msra.mxu0 0
        %1503 = vmatprep.subr.bf16.mxu0 0
        %1504 = vmatpush1.bf16.xpose.msra.mxu0 0
        %1505 = vmatprep.subr.bf16.mxu0 0
        %1506 = vmatpush1.bf16.xpose.msra.mxu0 0
        %1507 = vmatprep.subr.bf16.mxu0 0
        %1508 = vmatpush1.bf16.xpose.msra.mxu0 0
        %1509 = vmatprep.subr.bf16.mxu0 0
        %1510 = vmatpush1.bf16.xpose.msra.mxu0 0
        %1511 = vmatprep.subr.bf16.mxu0 0
        %1512 = vmatpush1.bf16.xpose.msra.mxu0 0
        %1513 = vmatprep.subr.bf16.mxu0 0
        %1514 = vmatpush1.bf16.xpose.msra.mxu0 0
        %1515 = vmatprep.subr.bf16.mxu0 0
        %1516 = vmatpush1.bf16.xpose.msra.mxu0 0
        %1517 = vmatprep.mubr.bf16.mxu0 0
        %1518 = vmatmul.mubr.bf16.gmra.mrb[0].mxu0 %v1480
        %v1519 = vpop.f32.mrb[0].mxu0
        %v1520 = vadd.f32 0.0, %v1519
        %v1521 = vpop.f32.mrb[0].mxu0
        %v1522 = vpop.f32.mrb[0].mxu0
        %v1523 = vpop.f32.mrb[0].mxu0
        %1524 = vdwg.mxu0
        %v1526 = vsel %vm1248, %v638, 0
        %v1529 = vsel %vm1248, %v942, 0
        %1531 = vmatprep.subr.bf16.mxu0 0
        %1532 = vmatpush1.bf16.xpose.msra.mxu0 %v1529
        %1533 = vmatprep.subr.bf16.mxu0 0
        %1534 = vmatpush1.bf16.xpose.msra.mxu0 0
        %1535 = vmatprep.subr.bf16.mxu0 0
        %1536 = vmatpush1.bf16.xpose.msra.mxu0 0
        %1537 = vmatprep.subr.bf16.mxu0 0
        %1538 = vmatpush1.bf16.xpose.msra.mxu0 0
        %1539 = vmatprep.subr.bf16.mxu0 0
        %1540 = vmatpush1.bf16.xpose.msra.mxu0 0
        %1541 = vmatprep.subr.bf16.mxu0 0
        %1542 = vmatpush1.bf16.xpose.msra.mxu0 0
        %1543 = vmatprep.subr.bf16.mxu0 0
        %1544 = vmatpush1.bf16.xpose.msra.mxu0 0
        %1545 = vmatprep.subr.bf16.mxu0 0
        %1546 = vmatpush1.bf16.xpose.msra.mxu0 0
        %1547 = vmatprep.subr.bf16.mxu0 0
        %1548 = vmatpush1.bf16.xpose.msra.mxu0 0
        %1549 = vmatprep.subr.bf16.mxu0 0
        %1550 = vmatpush1.bf16.xpose.msra.mxu0 0
        %1551 = vmatprep.subr.bf16.mxu0 0
        %1552 = vmatpush1.bf16.xpose.msra.mxu0 0
        %1553 = vmatprep.subr.bf16.mxu0 0
        %1554 = vmatpush1.bf16.xpose.msra.mxu0 0
        %1555 = vmatprep.subr.bf16.mxu0 0
        %1556 = vmatpush1.bf16.xpose.msra.mxu0 0
        %1557 = vmatprep.subr.bf16.mxu0 0
        %1558 = vmatpush1.bf16.xpose.msra.mxu0 0
        %1559 = vmatprep.subr.bf16.mxu0 0
        %1560 = vmatpush1.bf16.xpose.msra.mxu0 0
        %1561 = vmatprep.subr.bf16.mxu0 0
        %1562 = vmatpush1.bf16.xpose.msra.mxu0 0
        %1563 = vmatprep.mubr.bf16.mxu0 0
        %1564 = vmatmul.mubr.bf16.gmra.mrb[0].mxu0 %v1526
        %v1565 = vpop.f32.mrb[0].mxu0
        %v1566 = vadd.f32 0.0, %v1565
        %v1567 = vpop.f32.mrb[0].mxu0
        %v1568 = vpop.f32.mrb[0].mxu0
        %v1569 = vpop.f32.mrb[0].mxu0
        %1570 = vdwg.mxu0
        %v1572 = vsel %vm1248, %v639, 0
        %v1575 = vsel %vm1248, %v943, 0
        %1577 = vmatprep.subr.bf16.mxu0 0
        %1578 = vmatpush1.bf16.xpose.msra.mxu0 %v1575
        %1579 = vmatprep.subr.bf16.mxu0 0
        %1580 = vmatpush1.bf16.xpose.msra.mxu0 0
        %1581 = vmatprep.subr.bf16.mxu0 0
        %1582 = vmatpush1.bf16.xpose.msra.mxu0 0
        %1583 = vmatprep.subr.bf16.mxu0 0
        %1584 = vmatpush1.bf16.xpose.msra.mxu0 0
        %1585 = vmatprep.subr.bf16.mxu0 0
        %1586 = vmatpush1.bf16.xpose.msra.mxu0 0
        %1587 = vmatprep.subr.bf16.mxu0 0
        %1588 = vmatpush1.bf16.xpose.msra.mxu0 0
        %1589 = vmatprep.subr.bf16.mxu0 0
        %1590 = vmatpush1.bf16.xpose.msra.mxu0 0
        %1591 = vmatprep.subr.bf16.mxu0 0
        %1592 = vmatpush1.bf16.xpose.msra.mxu0 0
        %1593 = vmatprep.subr.bf16.mxu0 0
        %1594 = vmatpush1.bf16.xpose.msra.mxu0 0
        %1595 = vmatprep.subr.bf16.mxu0 0
        %1596 = vmatpush1.bf16.xpose.msra.mxu0 0
        %1597 = vmatprep.subr.bf16.mxu0 0
        %1598 = vmatpush1.bf16.xpose.msra.mxu0 0
        %1599 = vmatprep.subr.bf16.mxu0 0
        %1600 = vmatpush1.bf16.xpose.msra.mxu0 0
        %1601 = vmatprep.subr.bf16.mxu0 0
        %1602 = vmatpush1.bf16.xpose.msra.mxu0 0
        %1603 = vmatprep.subr.bf16.mxu0 0
        %1604 = vmatpush1.bf16.xpose.msra.mxu0 0
        %1605 = vmatprep.subr.bf16.mxu0 0
        %1606 = vmatpush1.bf16.xpose.msra.mxu0 0
        %1607 = vmatprep.subr.bf16.mxu0 0
        %1608 = vmatpush1.bf16.xpose.msra.mxu0 0
        %1609 = vmatprep.mubr.bf16.mxu0 0
        %1610 = vmatmul.mubr.bf16.gmra.mrb[0].mxu0 %v1572
        %v1611 = vpop.f32.mrb[0].mxu0
        %v1612 = vadd.f32 0.0, %v1611
        %v1613 = vpop.f32.mrb[0].mxu0
        %v1614 = vpop.f32.mrb[0].mxu0
        %v1615 = vpop.f32.mrb[0].mxu0
        %1616 = vdwg.mxu0
        %vm1617 = vcmask 64512
        %v1618 = vsel %vm1617, %v1290, -inf
        %1619 = vmax.xlane.f32.xlu0 %v1618
        %v1620 = vpop.xlane.xlu0 %1619
        %v1621 = vsel %vm1617, %v1336, -inf
        %1622 = vmax.xlane.f32.xlu0 %v1621
        %v1623 = vpop.xlane.xlu0 %1622
        %v1624 = vsel %vm1617, %v1382, -inf
        %1625 = vmax.xlane.f32.xlu0 %v1624
        %v1626 = vpop.xlane.xlu0 %1625
        %v1627 = vsel %vm1617, %v1428, -inf
        %1628 = vmax.xlane.f32.xlu0 %v1627
        %v1629 = vpop.xlane.xlu0 %1628
        %v1630 = vsel %vm1617, %v1474, -inf
        %1631 = vmax.xlane.f32.xlu0 %v1630
        %v1632 = vpop.xlane.xlu0 %1631
        %v1633 = vsel %vm1617, %v1520, -inf
        %1634 = vmax.xlane.f32.xlu0 %v1633
        %v1635 = vpop.xlane.xlu0 %1634
        %v1636 = vsel %vm1617, %v1566, -inf
        %1637 = vmax.xlane.f32.xlu0 %v1636
        %v1638 = vpop.xlane.xlu0 %1637
        %v1639 = vsel %vm1617, %v1612, -inf
        %1640 = vmax.xlane.f32.xlu0 %v1639
        %v1641 = vpop.xlane.xlu0 %1640
        %v1642 = vsub.f32 %v1290, %v1620
        %v1643 = vsub.f32 %v1336, %v1623
        %v1644 = vsub.f32 %v1382, %v1626
        %v1645 = vsub.f32 %v1428, %v1629
        %v1646 = vsub.f32 %v1474, %v1632
        %v1647 = vsub.f32 %v1520, %v1635
        %v1648 = vsub.f32 %v1566, %v1638
        %v1649 = vsub.f32 %v1612, %v1641
        %v1650 = vmul.f32 %v1642, 1.442695
        %v1651 = vpow.pop %v1650
        %v1652 = vmul.f32 %v1643, 1.442695
        %v1653 = vpow.pop %v1652
        %v1654 = vmul.f32 %v1644, 1.442695
        %v1655 = vpow.pop %v1654
        %v1656 = vmul.f32 %v1645, 1.442695
        %v1657 = vpow.pop %v1656
        %v1658 = vmul.f32 %v1646, 1.442695
        %v1659 = vpow.pop %v1658
        %v1660 = vmul.f32 %v1647, 1.442695
        %v1661 = vpow.pop %v1660
        %v1662 = vmul.f32 %v1648, 1.442695
        %v1663 = vpow.pop %v1662
        %v1664 = vmul.f32 %v1649, 1.442695
        %v1665 = vpow.pop %v1664
        %v1666 = vsel %vm1617, %v1651, 0.0
        %1667 = vadd.xlane.f32.xlu0 %v1666
        %v1668 = vpop.xlane.xlu0 %1667
        %v1669 = vsel %vm1617, %v1653, 0.0
        %1670 = vadd.xlane.f32.xlu0 %v1669
        %v1671 = vpop.xlane.xlu0 %1670
        %v1672 = vsel %vm1617, %v1655, 0.0
        %1673 = vadd.xlane.f32.xlu0 %v1672
        %v1674 = vpop.xlane.xlu0 %1673
        %v1675 = vsel %vm1617, %v1657, 0.0
        %1676 = vadd.xlane.f32.xlu0 %v1675
        %v1677 = vpop.xlane.xlu0 %1676
        %v1678 = vsel %vm1617, %v1659, 0.0
        %1679 = vadd.xlane.f32.xlu0 %v1678
        %v1680 = vpop.xlane.xlu0 %1679
        %v1681 = vsel %vm1617, %v1661, 0.0
        %1682 = vadd.xlane.f32.xlu0 %v1681
        %v1683 = vpop.xlane.xlu0 %1682
        %v1684 = vsel %vm1617, %v1663, 0.0
        %1685 = vadd.xlane.f32.xlu0 %v1684
        %v1686 = vpop.xlane.xlu0 %1685
        %v1687 = vsel %vm1617, %v1665, 0.0
        %1688 = vadd.xlane.f32.xlu0 %v1687
        %v1689 = vpop.xlane.xlu0 %1688
        %v1690 = vrcp.pop %v1668
        %v1691 = vrcp.pop %v1671
        %v1692 = vrcp.pop %v1674
        %v1693 = vrcp.pop %v1677
        %v1694 = vrcp.pop %v1680
        %v1695 = vrcp.pop %v1683
        %v1696 = vrcp.pop %v1686
        %v1697 = vrcp.pop %v1689
        %v1698 = vmul.f32 %v1651, %v1690
        %v1699 = vmul.f32 %v1653, %v1691
        %v1700 = vmul.f32 %v1655, %v1692
        %v1701 = vmul.f32 %v1657, %v1693
        %v1702 = vmul.f32 %v1659, %v1694
        %v1703 = vmul.f32 %v1661, %v1695
        %v1704 = vmul.f32 %v1663, %v1696
        %v1705 = vmul.f32 %v1665, %v1697
        %v1706 = vpack.c.bf16 %v1698, %v1698
        %v1707 = vpack.c.bf16 %v1699, %v1699
        %v1708 = vpack.c.bf16 %v1700, %v1700
        %v1709 = vpack.c.bf16 %v1701, %v1701
        %v1710 = vpack.c.bf16 %v1702, %v1702
        %v1711 = vpack.c.bf16 %v1703, %v1703
        %v1712 = vpack.c.bf16 %v1704, %v1704
        %v1713 = vpack.c.bf16 %v1705, %v1705
        %v1715 = vsel %vm1617, %v1706, 0
        %vm1717 = vcmask 1043456
        %v1719 = vsel %vm1717, %v1240, 0
        %1721 = vmatprep.subr.bf16.mxu0 0
        %1722 = vmatpush1.bf16.msra.mxu0 %v1719
        %1723 = vmatprep.subr.bf16.mxu0 0
        %1724 = vmatpush1.bf16.msra.mxu0 0
        %1725 = vmatprep.subr.bf16.mxu0 0
        %1726 = vmatpush1.bf16.msra.mxu0 0
        %1727 = vmatprep.subr.bf16.mxu0 0
        %1728 = vmatpush1.bf16.msra.mxu0 0
        %1729 = vmatprep.subr.bf16.mxu0 0
        %1730 = vmatpush1.bf16.msra.mxu0 0
        %1731 = vmatprep.subr.bf16.mxu0 0
        %1732 = vmatpush1.bf16.msra.mxu0 0
        %1733 = vmatprep.subr.bf16.mxu0 0
        %1734 = vmatpush1.bf16.msra.mxu0 0
        %1735 = vmatprep.subr.bf16.mxu0 0
        %1736 = vmatpush1.bf16.msra.mxu0 0
        %1737 = vmatprep.subr.bf16.mxu0 0
        %1738 = vmatpush1.bf16.msra.mxu0 0
        %1739 = vmatprep.subr.bf16.mxu0 0
        %1740 = vmatpush1.bf16.msra.mxu0 0
        %1741 = vmatprep.subr.bf16.mxu0 0
        %1742 = vmatpush1.bf16.msra.mxu0 0
        %1743 = vmatprep.subr.bf16.mxu0 0
        %1744 = vmatpush1.bf16.msra.mxu0 0
        %1745 = vmatprep.subr.bf16.mxu0 0
        %1746 = vmatpush1.bf16.msra.mxu0 0
        %1747 = vmatprep.subr.bf16.mxu0 0
        %1748 = vmatpush1.bf16.msra.mxu0 0
        %1749 = vmatprep.subr.bf16.mxu0 0
        %1750 = vmatpush1.bf16.msra.mxu0 0
        %1751 = vmatprep.subr.bf16.mxu0 0
        %1752 = vmatpush1.bf16.msra.mxu0 0
        %1753 = vmatprep.mubr.bf16.mxu0 0
        %1754 = vmatmul.mubr.bf16.gmra.mrb[0].mxu0 %v1715
        %v1755 = vpop.f32.mrb[0].mxu0
        %v1756 = vadd.f32 0.0, %v1755
        %v1757 = vpop.f32.mrb[0].mxu0
        %v1758 = vpop.f32.mrb[0].mxu0
        %v1759 = vpop.f32.mrb[0].mxu0
        %1760 = vdwg.mxu0
        %v1762 = vsel %vm1617, %v1707, 0
        %v1765 = vsel %vm1717, %v1241, 0
        %1767 = vmatprep.subr.bf16.mxu0 0
        %1768 = vmatpush1.bf16.msra.mxu0 %v1765
        %1769 = vmatprep.subr.bf16.mxu0 0
        %1770 = vmatpush1.bf16.msra.mxu0 0
        %1771 = vmatprep.subr.bf16.mxu0 0
        %1772 = vmatpush1.bf16.msra.mxu0 0
        %1773 = vmatprep.subr.bf16.mxu0 0
        %1774 = vmatpush1.bf16.msra.mxu0 0
        %1775 = vmatprep.subr.bf16.mxu0 0
        %1776 = vmatpush1.bf16.msra.mxu0 0
        %1777 = vmatprep.subr.bf16.mxu0 0
        %1778 = vmatpush1.bf16.msra.mxu0 0
        %1779 = vmatprep.subr.bf16.mxu0 0
        %1780 = vmatpush1.bf16.msra.mxu0 0
        %1781 = vmatprep.subr.bf16.mxu0 0
        %1782 = vmatpush1.bf16.msra.mxu0 0
        %1783 = vmatprep.subr.bf16.mxu0 0
        %1784 = vmatpush1.bf16.msra.mxu0 0
        %1785 = vmatprep.subr.bf16.mxu0 0
        %1786 = vmatpush1.bf16.msra.mxu0 0
        %1787 = vmatprep.subr.bf16.mxu0 0
        %1788 = vmatpush1.bf16.msra.mxu0 0
        %1789 = vmatprep.subr.bf16.mxu0 0
        %1790 = vmatpush1.bf16.msra.mxu0 0
        %1791 = vmatprep.subr.bf16.mxu0 0
        %1792 = vmatpush1.bf16.msra.mxu0 0
        %1793 = vmatprep.subr.bf16.mxu0 0
        %1794 = vmatpush1.bf16.msra.mxu0 0
        %1795 = vmatprep.subr.bf16.mxu0 0
        %1796 = vmatpush1.bf16.msra.mxu0 0
        %1797 = vmatprep.subr.bf16.mxu0 0
        %1798 = vmatpush1.bf16.msra.mxu0 0
        %1799 = vmatprep.mubr.bf16.mxu0 0
        %1800 = vmatmul.mubr.bf16.gmra.mrb[0].mxu0 %v1762
        %v1801 = vpop.f32.mrb[0].mxu0
        %v1802 = vadd.f32 0.0, %v1801
        %v1803 = vpop.f32.mrb[0].mxu0
        %v1804 = vpop.f32.mrb[0].mxu0
        %v1805 = vpop.f32.mrb[0].mxu0
        %1806 = vdwg.mxu0
        %v1808 = vsel %vm1617, %v1708, 0
        %v1811 = vsel %vm1717, %v1242, 0
        %1813 = vmatprep.subr.bf16.mxu0 0
        %1814 = vmatpush1.bf16.msra.mxu0 %v1811
        %1815 = vmatprep.subr.bf16.mxu0 0
        %1816 = vmatpush1.bf16.msra.mxu0 0
        %1817 = vmatprep.subr.bf16.mxu0 0
        %1818 = vmatpush1.bf16.msra.mxu0 0
        %1819 = vmatprep.subr.bf16.mxu0 0
        %1820 = vmatpush1.bf16.msra.mxu0 0
        %1821 = vmatprep.subr.bf16.mxu0 0
        %1822 = vmatpush1.bf16.msra.mxu0 0
        %1823 = vmatprep.subr.bf16.mxu0 0
        %1824 = vmatpush1.bf16.msra.mxu0 0
        %1825 = vmatprep.subr.bf16.mxu0 0
        %1826 = vmatpush1.bf16.msra.mxu0 0
        %1827 = vmatprep.subr.bf16.mxu0 0
        %1828 = vmatpush1.bf16.msra.mxu0 0
        %1829 = vmatprep.subr.bf16.mxu0 0
        %1830 = vmatpush1.bf16.msra.mxu0 0
        %1831 = vmatprep.subr.bf16.mxu0 0
        %1832 = vmatpush1.bf16.msra.mxu0 0
        %1833 = vmatprep.subr.bf16.mxu0 0
        %1834 = vmatpush1.bf16.msra.mxu0 0
        %1835 = vmatprep.subr.bf16.mxu0 0
        %1836 = vmatpush1.bf16.msra.mxu0 0
        %1837 = vmatprep.subr.bf16.mxu0 0
        %1838 = vmatpush1.bf16.msra.mxu0 0
        %1839 = vmatprep.subr.bf16.mxu0 0
        %1840 = vmatpush1.bf16.msra.mxu0 0
        %1841 = vmatprep.subr.bf16.mxu0 0
        %1842 = vmatpush1.bf16.msra.mxu0 0
        %1843 = vmatprep.subr.bf16.mxu0 0
        %1844 = vmatpush1.bf16.msra.mxu0 0
        %1845 = vmatprep.mubr.bf16.mxu0 0
        %1846 = vmatmul.mubr.bf16.gmra.mrb[0].mxu0 %v1808
        %v1847 = vpop.f32.mrb[0].mxu0
        %v1848 = vadd.f32 0.0, %v1847
        %v1849 = vpop.f32.mrb[0].mxu0
        %v1850 = vpop.f32.mrb[0].mxu0
        %v1851 = vpop.f32.mrb[0].mxu0
        %1852 = vdwg.mxu0
        %v1854 = vsel %vm1617, %v1709, 0
        %v1857 = vsel %vm1717, %v1243, 0
        %1859 = vmatprep.subr.bf16.mxu0 0
        %1860 = vmatpush1.bf16.msra.mxu0 %v1857
        %1861 = vmatprep.subr.bf16.mxu0 0
        %1862 = vmatpush1.bf16.msra.mxu0 0
        %1863 = vmatprep.subr.bf16.mxu0 0
        %1864 = vmatpush1.bf16.msra.mxu0 0
        %1865 = vmatprep.subr.bf16.mxu0 0
        %1866 = vmatpush1.bf16.msra.mxu0 0
        %1867 = vmatprep.subr.bf16.mxu0 0
        %1868 = vmatpush1.bf16.msra.mxu0 0
        %1869 = vmatprep.subr.bf16.mxu0 0
        %1870 = vmatpush1.bf16.msra.mxu0 0
        %1871 = vmatprep.subr.bf16.mxu0 0
        %1872 = vmatpush1.bf16.msra.mxu0 0
        %1873 = vmatprep.subr.bf16.mxu0 0
        %1874 = vmatpush1.bf16.msra.mxu0 0
        %1875 = vmatprep.subr.bf16.mxu0 0
        %1876 = vmatpush1.bf16.msra.mxu0 0
        %1877 = vmatprep.subr.bf16.mxu0 0
        %1878 = vmatpush1.bf16.msra.mxu0 0
        %1879 = vmatprep.subr.bf16.mxu0 0
        %1880 = vmatpush1.bf16.msra.mxu0 0
        %1881 = vmatprep.subr.bf16.mxu0 0
        %1882 = vmatpush1.bf16.msra.mxu0 0
        %1883 = vmatprep.subr.bf16.mxu0 0
        %1884 = vmatpush1.bf16.msra.mxu0 0
        %1885 = vmatprep.subr.bf16.mxu0 0
        %1886 = vmatpush1.bf16.msra.mxu0 0
        %1887 = vmatprep.subr.bf16.mxu0 0
        %1888 = vmatpush1.bf16.msra.mxu0 0
        %1889 = vmatprep.subr.bf16.mxu0 0
        %1890 = vmatpush1.bf16.msra.mxu0 0
        %1891 = vmatprep.mubr.bf16.mxu0 0
        %1892 = vmatmul.mubr.bf16.gmra.mrb[0].mxu0 %v1854
        %v1893 = vpop.f32.mrb[0].mxu0
        %v1894 = vadd.f32 0.0, %v1893
        %v1895 = vpop.f32.mrb[0].mxu0
        %v1896 = vpop.f32.mrb[0].mxu0
        %v1897 = vpop.f32.mrb[0].mxu0
        %1898 = vdwg.mxu0
        %v1900 = vsel %vm1617, %v1710, 0
        %v1903 = vsel %vm1717, %v1244, 0
        %1905 = vmatprep.subr.bf16.mxu0 0
        %1906 = vmatpush1.bf16.msra.mxu0 %v1903
        %1907 = vmatprep.subr.bf16.mxu0 0
        %1908 = vmatpush1.bf16.msra.mxu0 0
        %1909 = vmatprep.subr.bf16.mxu0 0
        %1910 = vmatpush1.bf16.msra.mxu0 0
        %1911 = vmatprep.subr.bf16.mxu0 0
        %1912 = vmatpush1.bf16.msra.mxu0 0
        %1913 = vmatprep.subr.bf16.mxu0 0
        %1914 = vmatpush1.bf16.msra.mxu0 0
        %1915 = vmatprep.subr.bf16.mxu0 0
        %1916 = vmatpush1.bf16.msra.mxu0 0
        %1917 = vmatprep.subr.bf16.mxu0 0
        %1918 = vmatpush1.bf16.msra.mxu0 0
        %1919 = vmatprep.subr.bf16.mxu0 0
        %1920 = vmatpush1.bf16.msra.mxu0 0
        %1921 = vmatprep.subr.bf16.mxu0 0
        %1922 = vmatpush1.bf16.msra.mxu0 0
        %1923 = vmatprep.subr.bf16.mxu0 0
        %1924 = vmatpush1.bf16.msra.mxu0 0
        %1925 = vmatprep.subr.bf16.mxu0 0
        %1926 = vmatpush1.bf16.msra.mxu0 0
        %1927 = vmatprep.subr.bf16.mxu0 0
        %1928 = vmatpush1.bf16.msra.mxu0 0
        %1929 = vmatprep.subr.bf16.mxu0 0
        %1930 = vmatpush1.bf16.msra.mxu0 0
        %1931 = vmatprep.subr.bf16.mxu0 0
        %1932 = vmatpush1.bf16.msra.mxu0 0
        %1933 = vmatprep.subr.bf16.mxu0 0
        %1934 = vmatpush1.bf16.msra.mxu0 0
        %1935 = vmatprep.subr.bf16.mxu0 0
        %1936 = vmatpush1.bf16.msra.mxu0 0
        %1937 = vmatprep.mubr.bf16.mxu0 0
        %1938 = vmatmul.mubr.bf16.gmra.mrb[0].mxu0 %v1900
        %v1939 = vpop.f32.mrb[0].mxu0
        %v1940 = vadd.f32 0.0, %v1939
        %v1941 = vpop.f32.mrb[0].mxu0
        %v1942 = vpop.f32.mrb[0].mxu0
        %v1943 = vpop.f32.mrb[0].mxu0
        %1944 = vdwg.mxu0
        %v1946 = vsel %vm1617, %v1711, 0
        %v1949 = vsel %vm1717, %v1245, 0
        %1951 = vmatprep.subr.bf16.mxu0 0
        %1952 = vmatpush1.bf16.msra.mxu0 %v1949
        %1953 = vmatprep.subr.bf16.mxu0 0
        %1954 = vmatpush1.bf16.msra.mxu0 0
        %1955 = vmatprep.subr.bf16.mxu0 0
        %1956 = vmatpush1.bf16.msra.mxu0 0
        %1957 = vmatprep.subr.bf16.mxu0 0
        %1958 = vmatpush1.bf16.msra.mxu0 0
        %1959 = vmatprep.subr.bf16.mxu0 0
        %1960 = vmatpush1.bf16.msra.mxu0 0
        %1961 = vmatprep.subr.bf16.mxu0 0
        %1962 = vmatpush1.bf16.msra.mxu0 0
        %1963 = vmatprep.subr.bf16.mxu0 0
        %1964 = vmatpush1.bf16.msra.mxu0 0
        %1965 = vmatprep.subr.bf16.mxu0 0
        %1966 = vmatpush1.bf16.msra.mxu0 0
        %1967 = vmatprep.subr.bf16.mxu0 0
        %1968 = vmatpush1.bf16.msra.mxu0 0
        %1969 = vmatprep.subr.bf16.mxu0 0
        %1970 = vmatpush1.bf16.msra.mxu0 0
        %1971 = vmatprep.subr.bf16.mxu0 0
        %1972 = vmatpush1.bf16.msra.mxu0 0
        %1973 = vmatprep.subr.bf16.mxu0 0
        %1974 = vmatpush1.bf16.msra.mxu0 0
        %1975 = vmatprep.subr.bf16.mxu0 0
        %1976 = vmatpush1.bf16.msra.mxu0 0
        %1977 = vmatprep.subr.bf16.mxu0 0
        %1978 = vmatpush1.bf16.msra.mxu0 0
        %1979 = vmatprep.subr.bf16.mxu0 0
        %1980 = vmatpush1.bf16.msra.mxu0 0
        %1981 = vmatprep.subr.bf16.mxu0 0
        %1982 = vmatpush1.bf16.msra.mxu0 0
        %1983 = vmatprep.mubr.bf16.mxu0 0
        %1984 = vmatmul.mubr.bf16.gmra.mrb[0].mxu0 %v1946
        %v1985 = vpop.f32.mrb[0].mxu0
        %v1986 = vadd.f32 0.0, %v1985
        %v1987 = vpop.f32.mrb[0].mxu0
        %v1988 = vpop.f32.mrb[0].mxu0
        %v1989 = vpop.f32.mrb[0].mxu0
        %1990 = vdwg.mxu0
        %v1992 = vsel %vm1617, %v1712, 0
        %v1995 = vsel %vm1717, %v1246, 0
        %1997 = vmatprep.subr.bf16.mxu0 0
        %1998 = vmatpush1.bf16.msra.mxu0 %v1995
        %1999 = vmatprep.subr.bf16.mxu0 0
        %2000 = vmatpush1.bf16.msra.mxu0 0
        %2001 = vmatprep.subr.bf16.mxu0 0
        %2002 = vmatpush1.bf16.msra.mxu0 0
        %2003 = vmatprep.subr.bf16.mxu0 0
        %2004 = vmatpush1.bf16.msra.mxu0 0
        %2005 = vmatprep.subr.bf16.mxu0 0
        %2006 = vmatpush1.bf16.msra.mxu0 0
        %2007 = vmatprep.subr.bf16.mxu0 0
        %2008 = vmatpush1.bf16.msra.mxu0 0
        %2009 = vmatprep.subr.bf16.mxu0 0
        %2010 = vmatpush1.bf16.msra.mxu0 0
        %2011 = vmatprep.subr.bf16.mxu0 0
        %2012 = vmatpush1.bf16.msra.mxu0 0
        %2013 = vmatprep.subr.bf16.mxu0 0
        %2014 = vmatpush1.bf16.msra.mxu0 0
        %2015 = vmatprep.subr.bf16.mxu0 0
        %2016 = vmatpush1.bf16.msra.mxu0 0
        %2017 = vmatprep.subr.bf16.mxu0 0
        %2018 = vmatpush1.bf16.msra.mxu0 0
        %2019 = vmatprep.subr.bf16.mxu0 0
        %2020 = vmatpush1.bf16.msra.mxu0 0
        %2021 = vmatprep.subr.bf16.mxu0 0
        %2022 = vmatpush1.bf16.msra.mxu0 0
        %2023 = vmatprep.subr.bf16.mxu0 0
        %2024 = vmatpush1.bf16.msra.mxu0 0
        %2025 = vmatprep.subr.bf16.mxu0 0
        %2026 = vmatpush1.bf16.msra.mxu0 0
        %2027 = vmatprep.subr.bf16.mxu0 0
        %2028 = vmatpush1.bf16.msra.mxu0 0
        %2029 = vmatprep.mubr.bf16.mxu0 0
        %2030 = vmatmul.mubr.bf16.gmra.mrb[0].mxu0 %v1992
        %v2031 = vpop.f32.mrb[0].mxu0
        %v2032 = vadd.f32 0.0, %v2031
        %v2033 = vpop.f32.mrb[0].mxu0
        %v2034 = vpop.f32.mrb[0].mxu0
        %v2035 = vpop.f32.mrb[0].mxu0
        %2036 = vdwg.mxu0
        %v2038 = vsel %vm1617, %v1713, 0
        %v2041 = vsel %vm1717, %v1247, 0
        %2043 = vmatprep.subr.bf16.mxu0 0
        %2044 = vmatpush1.bf16.msra.mxu0 %v2041
        %2045 = vmatprep.subr.bf16.mxu0 0
        %2046 = vmatpush1.bf16.msra.mxu0 0
        %2047 = vmatprep.subr.bf16.mxu0 0
        %2048 = vmatpush1.bf16.msra.mxu0 0
        %2049 = vmatprep.subr.bf16.mxu0 0
        %2050 = vmatpush1.bf16.msra.mxu0 0
        %2051 = vmatprep.subr.bf16.mxu0 0
        %2052 = vmatpush1.bf16.msra.mxu0 0
        %2053 = vmatprep.subr.bf16.mxu0 0
        %2054 = vmatpush1.bf16.msra.mxu0 0
        %2055 = vmatprep.subr.bf16.mxu0 0
        %2056 = vmatpush1.bf16.msra.mxu0 0
        %2057 = vmatprep.subr.bf16.mxu0 0
        %2058 = vmatpush1.bf16.msra.mxu0 0
        %2059 = vmatprep.subr.bf16.mxu0 0
        %2060 = vmatpush1.bf16.msra.mxu0 0
        %2061 = vmatprep.subr.bf16.mxu0 0
        %2062 = vmatpush1.bf16.msra.mxu0 0
        %2063 = vmatprep.subr.bf16.mxu0 0
        %2064 = vmatpush1.bf16.msra.mxu0 0
        %2065 = vmatprep.subr.bf16.mxu0 0
        %2066 = vmatpush1.bf16.msra.mxu0 0
        %2067 = vmatprep.subr.bf16.mxu0 0
        %2068 = vmatpush1.bf16.msra.mxu0 0
        %2069 = vmatprep.subr.bf16.mxu0 0
        %2070 = vmatpush1.bf16.msra.mxu0 0
        %2071 = vmatprep.subr.bf16.mxu0 0
        %2072 = vmatpush1.bf16.msra.mxu0 0
        %2073 = vmatprep.subr.bf16.mxu0 0
        %2074 = vmatpush1.bf16.msra.mxu0 0
        %2075 = vmatprep.mubr.bf16.mxu0 0
        %2076 = vmatmul.mubr.bf16.gmra.mrb[0].mxu0 %v2038
        %v2077 = vpop.f32.mrb[0].mxu0
        %v2078 = vadd.f32 0.0, %v2077
        %v2079 = vpop.f32.mrb[0].mxu0
        %v2080 = vpop.f32.mrb[0].mxu0
        %v2081 = vpop.f32.mrb[0].mxu0
        %2082 = vdwg.mxu0
        %v2083 = vcombine.low %v1756, %v1848
        %v2084 = vcombine.high %v1756, %v1848
        %v2086 = vunpack.c.l.s4 1983009808
        %v2087 = vunpack.c.0.s8 %v2086
        %v2088 = vlaneseq
        %v2089 = vshrl.u32 %v2088, 7
        %v2090 = vsub.s32 %v2087, %v2089
        %v2091 = vrot.slane %v2083, %v2090
        %v2093 = vunpack.c.l.s4 1983009808
        %v2094 = vunpack.c.0.s8 %v2093
        %v2095 = vlaneseq
        %v2096 = vshrl.u32 %v2095, 7
        %v2097 = vsub.s32 %v2094, %v2096
        %v2098 = vrot.slane %v2084, %v2097
        %v2099 = vcombine.low %v1802, %v1894
        %v2100 = vcombine.high %v1802, %v1894
        %v2102 = vunpack.c.l.s4 1983009808
        %v2103 = vunpack.c.0.s8 %v2102
        %v2104 = vlaneseq
        %v2105 = vshrl.u32 %v2104, 7
        %v2106 = vsub.s32 %v2103, %v2105
        %v2107 = vrot.slane %v2099, %v2106
        %v2109 = vunpack.c.l.s4 1983009808
        %v2110 = vunpack.c.0.s8 %v2109
        %v2111 = vlaneseq
        %v2112 = vshrl.u32 %v2111, 7
        %v2113 = vsub.s32 %v2110, %v2112
        %v2114 = vrot.slane %v2100, %v2113
        %v2115 = vcombine.low %v1940, %v2032
        %v2116 = vcombine.high %v1940, %v2032
        %v2118 = vunpack.c.l.s4 1983009808
        %v2119 = vunpack.c.0.s8 %v2118
        %v2120 = vlaneseq
        %v2121 = vshrl.u32 %v2120, 7
        %v2122 = vsub.s32 %v2119, %v2121
        %v2123 = vrot.slane %v2115, %v2122
        %v2125 = vunpack.c.l.s4 1983009808
        %v2126 = vunpack.c.0.s8 %v2125
        %v2127 = vlaneseq
        %v2128 = vshrl.u32 %v2127, 7
        %v2129 = vsub.s32 %v2126, %v2128
        %v2130 = vrot.slane %v2116, %v2129
        %v2131 = vcombine.low %v1986, %v2078
        %v2132 = vcombine.high %v1986, %v2078
        %v2134 = vunpack.c.l.s4 1983009808
        %v2135 = vunpack.c.0.s8 %v2134
        %v2136 = vlaneseq
        %v2137 = vshrl.u32 %v2136, 7
        %v2138 = vsub.s32 %v2135, %v2137
        %v2139 = vrot.slane %v2131, %v2138
        %v2141 = vunpack.c.l.s4 1983009808
        %v2142 = vunpack.c.0.s8 %v2141
        %v2143 = vlaneseq
        %v2144 = vshrl.u32 %v2143, 7
        %v2145 = vsub.s32 %v2142, %v2144
        %v2146 = vrot.slane %v2132, %v2145
        %v2147 = vcombine.low %v2091, %v2107
        %v2148 = vcombine.high %v2091, %v2107
        %v2150 = vunpack.c.l.s4 1934713408
        %v2151 = vunpack.c.0.s8 %v2150
        %v2152 = vlaneseq
        %v2153 = vshrl.u32 %v2152, 7
        %v2154 = vsub.s32 %v2151, %v2153
        %v2155 = vrot.slane %v2147, %v2154
        %v2157 = vunpack.c.l.s4 1934713408
        %v2158 = vunpack.c.0.s8 %v2157
        %v2159 = vlaneseq
        %v2160 = vshrl.u32 %v2159, 7
        %v2161 = vsub.s32 %v2158, %v2160
        %v2162 = vrot.slane %v2148, %v2161
        %v2163 = vcombine.low %v2098, %v2114
        %v2164 = vcombine.high %v2098, %v2114
        %v2166 = vunpack.c.l.s4 1934713408
        %v2167 = vunpack.c.0.s8 %v2166
        %v2168 = vlaneseq
        %v2169 = vshrl.u32 %v2168, 7
        %v2170 = vsub.s32 %v2167, %v2169
        %v2171 = vrot.slane %v2163, %v2170
        %v2173 = vunpack.c.l.s4 1934713408
        %v2174 = vunpack.c.0.s8 %v2173
        %v2175 = vlaneseq
        %v2176 = vshrl.u32 %v2175, 7
        %v2177 = vsub.s32 %v2174, %v2176
        %v2178 = vrot.slane %v2164, %v2177
        %v2179 = vcombine.low %v2123, %v2139
        %v2180 = vcombine.high %v2123, %v2139
        %v2182 = vunpack.c.l.s4 1934713408
        %v2183 = vunpack.c.0.s8 %v2182
        %v2184 = vlaneseq
        %v2185 = vshrl.u32 %v2184, 7
        %v2186 = vsub.s32 %v2183, %v2185
        %v2187 = vrot.slane %v2179, %v2186
        %v2189 = vunpack.c.l.s4 1934713408
        %v2190 = vunpack.c.0.s8 %v2189
        %v2191 = vlaneseq
        %v2192 = vshrl.u32 %v2191, 7
        %v2193 = vsub.s32 %v2190, %v2192
        %v2194 = vrot.slane %v2180, %v2193
        %v2195 = vcombine.low %v2130, %v2146
        %v2196 = vcombine.high %v2130, %v2146
        %v2198 = vunpack.c.l.s4 1934713408
        %v2199 = vunpack.c.0.s8 %v2198
        %v2200 = vlaneseq
        %v2201 = vshrl.u32 %v2200, 7
        %v2202 = vsub.s32 %v2199, %v2201
        %v2203 = vrot.slane %v2195, %v2202
        %v2205 = vunpack.c.l.s4 1934713408
        %v2206 = vunpack.c.0.s8 %v2205
        %v2207 = vlaneseq
        %v2208 = vshrl.u32 %v2207, 7
        %v2209 = vsub.s32 %v2206, %v2208
        %v2210 = vrot.slane %v2196, %v2209
        %v2211 = vcombine.low %v2155, %v2187
        %v2212 = vcombine.high %v2155, %v2187
        %v2213 = vcombine.low %v2162, %v2194
        %v2214 = vcombine.high %v2162, %v2194
        %v2215 = vcombine.low %v2171, %v2203
        %v2216 = vcombine.high %v2171, %v2203
        %v2217 = vcombine.low %v2178, %v2210
        %v2218 = vcombine.high %v2178, %v2210
        %v2219 = vcombine.low %v2211, %v2213
        %v2220 = vcombine.high %v2211, %v2213
        %v2222 = vunpack.c.l.s4 1983009808
        %v2223 = vunpack.c.0.s8 %v2222
        %v2224 = vlaneseq
        %v2225 = vshrl.u32 %v2224, 7
        %v2226 = vsub.s32 %v2223, %v2225
        %v2227 = vrot.slane %v2219, %v2226
        %v2229 = vunpack.c.l.s4 1983009808
        %v2230 = vunpack.c.0.s8 %v2229
        %v2231 = vlaneseq
        %v2232 = vshrl.u32 %v2231, 7
        %v2233 = vsub.s32 %v2230, %v2232
        %v2234 = vrot.slane %v2220, %v2233
        %v2235 = vcombine.low %v2212, %v2214
        %v2236 = vcombine.high %v2212, %v2214
        %v2238 = vunpack.c.l.s4 1983009808
        %v2239 = vunpack.c.0.s8 %v2238
        %v2240 = vlaneseq
        %v2241 = vshrl.u32 %v2240, 7
        %v2242 = vsub.s32 %v2239, %v2241
        %v2243 = vrot.slane %v2235, %v2242
        %v2245 = vunpack.c.l.s4 1983009808
        %v2246 = vunpack.c.0.s8 %v2245
        %v2247 = vlaneseq
        %v2248 = vshrl.u32 %v2247, 7
        %v2249 = vsub.s32 %v2246, %v2248
        %v2250 = vrot.slane %v2236, %v2249
        %v2251 = vcombine.low %v2215, %v2217
        %v2252 = vcombine.high %v2215, %v2217
        %v2254 = vunpack.c.l.s4 1983009808
        %v2255 = vunpack.c.0.s8 %v2254
        %v2256 = vlaneseq
        %v2257 = vshrl.u32 %v2256, 7
        %v2258 = vsub.s32 %v2255, %v2257
        %v2259 = vrot.slane %v2251, %v2258
        %v2261 = vunpack.c.l.s4 1983009808
        %v2262 = vunpack.c.0.s8 %v2261
        %v2263 = vlaneseq
        %v2264 = vshrl.u32 %v2263, 7
        %v2265 = vsub.s32 %v2262, %v2264
        %v2266 = vrot.slane %v2252, %v2265
        %v2267 = vcombine.low %v2216, %v2218
        %v2268 = vcombine.high %v2216, %v2218
        %v2270 = vunpack.c.l.s4 1983009808
        %v2271 = vunpack.c.0.s8 %v2270
        %v2272 = vlaneseq
        %v2273 = vshrl.u32 %v2272, 7
        %v2274 = vsub.s32 %v2271, %v2273
        %v2275 = vrot.slane %v2267, %v2274
        %v2277 = vunpack.c.l.s4 1983009808
        %v2278 = vunpack.c.0.s8 %v2277
        %v2279 = vlaneseq
        %v2280 = vshrl.u32 %v2279, 7
        %v2281 = vsub.s32 %v2278, %v2280
        %v2282 = vrot.slane %v2268, %v2281
        %v2283 = vcombine.low %v2227, %v2243
        %v2284 = vcombine.high %v2227, %v2243
        %v2286 = vunpack.c.l.s4 1934713408
        %v2287 = vunpack.c.0.s8 %v2286
        %v2288 = vlaneseq
        %v2289 = vshrl.u32 %v2288, 7
        %v2290 = vsub.s32 %v2287, %v2289
        %v2291 = vrot.slane %v2283, %v2290
        %v2293 = vunpack.c.l.s4 1934713408
        %v2294 = vunpack.c.0.s8 %v2293
        %v2295 = vlaneseq
        %v2296 = vshrl.u32 %v2295, 7
        %v2297 = vsub.s32 %v2294, %v2296
        %v2298 = vrot.slane %v2284, %v2297
        %v2299 = vcombine.low %v2234, %v2250
        %v2300 = vcombine.high %v2234, %v2250
        %v2302 = vunpack.c.l.s4 1934713408
        %v2303 = vunpack.c.0.s8 %v2302
        %v2304 = vlaneseq
        %v2305 = vshrl.u32 %v2304, 7
        %v2306 = vsub.s32 %v2303, %v2305
        %v2307 = vrot.slane %v2299, %v2306
        %v2309 = vunpack.c.l.s4 1934713408
        %v2310 = vunpack.c.0.s8 %v2309
        %v2311 = vlaneseq
        %v2312 = vshrl.u32 %v2311, 7
        %v2313 = vsub.s32 %v2310, %v2312
        %v2314 = vrot.slane %v2300, %v2313
        %v2315 = vcombine.low %v2259, %v2275
        %v2316 = vcombine.high %v2259, %v2275
        %v2318 = vunpack.c.l.s4 1934713408
        %v2319 = vunpack.c.0.s8 %v2318
        %v2320 = vlaneseq
        %v2321 = vshrl.u32 %v2320, 7
        %v2322 = vsub.s32 %v2319, %v2321
        %v2323 = vrot.slane %v2315, %v2322
        %v2325 = vunpack.c.l.s4 1934713408
        %v2326 = vunpack.c.0.s8 %v2325
        %v2327 = vlaneseq
        %v2328 = vshrl.u32 %v2327, 7
        %v2329 = vsub.s32 %v2326, %v2328
        %v2330 = vrot.slane %v2316, %v2329
        %v2331 = vcombine.low %v2266, %v2282
        %v2332 = vcombine.high %v2266, %v2282
        %v2334 = vunpack.c.l.s4 1934713408
        %v2335 = vunpack.c.0.s8 %v2334
        %v2336 = vlaneseq
        %v2337 = vshrl.u32 %v2336, 7
        %v2338 = vsub.s32 %v2335, %v2337
        %v2339 = vrot.slane %v2331, %v2338
        %v2341 = vunpack.c.l.s4 1934713408
        %v2342 = vunpack.c.0.s8 %v2341
        %v2343 = vlaneseq
        %v2344 = vshrl.u32 %v2343, 7
        %v2345 = vsub.s32 %v2342, %v2344
        %v2346 = vrot.slane %v2332, %v2345
        %v2347 = vcombine.low %v2291, %v2323
        %v2348 = vcombine.high %v2291, %v2323
        %v2349 = vcombine.low %v2298, %v2330
        %v2350 = vcombine.high %v2298, %v2330
        %v2351 = vcombine.low %v2307, %v2339
        %v2352 = vcombine.high %v2307, %v2339
        %v2353 = vcombine.low %v2314, %v2346
        %v2354 = vcombine.high %v2314, %v2346
        %2356 = vrot.lane.b32.xlu0 %v2348, 4
        %v2357 = vpop.permute.xlu0 %2356
        %2360 = vrot.lane.b32.xlu0 %v2349, 8
        %v2361 = vpop.permute.xlu0 %2360
        %2364 = vrot.lane.b32.xlu0 %v2350, 12
        %v2365 = vpop.permute.xlu0 %2364
        %2368 = vrot.lane.b32.xlu0 %v2351, 16
        %v2369 = vpop.permute.xlu0 %2368
        %2372 = vrot.lane.b32.xlu0 %v2352, 20
        %v2373 = vpop.permute.xlu0 %2372
        %2376 = vrot.lane.b32.xlu0 %v2353, 24
        %v2377 = vpop.permute.xlu0 %2376
        %2380 = vrot.lane.b32.xlu0 %v2354, 28
        %v2381 = vpop.permute.xlu0 %2380
        %v2383 = vsel %vm1248, %v2347, %v2357
        %v2384 = vsel %vm1617, %v2383, %v2361
        %vm2385 = vcmask 97280
        %v2386 = vsel %vm2385, %v2384, %v2365
        %vm2387 = vcmask 130048
        %v2388 = vsel %vm2387, %v2386, %v2369
        %vm2389 = vcmask 162816
        %v2390 = vsel %vm2389, %v2388, %v2373
        %vm2391 = vcmask 195584
        %v2392 = vsel %vm2391, %v2390, %v2377
        %vm2393 = vcmask 228352
        %v2394 = vsel %vm2393, %v2392, %v2381
        %v2395 = vpack.c.bf16 %v2394, %v2394
        %v2396 = vld [vmem:[#allocation7] sm:$0xf]
        %v2397 = vld [vmem:[#allocation7 + $0x4] sm:$0xf]
        %v2398 = vld [vmem:[#allocation7 + $0x8] sm:$0xf]
        %v2399 = vld [vmem:[#allocation7 + $0xc] sm:$0xf]
        %v2400 = vld [vmem:[%s4] sm:$0x1]
        %v2402 = vlaneseq
        %v2403 = vshrl.u32 %v2402, 7
        %v2404 = vsub.s32 0, %v2403
        %v2405 = vrot.slane %v2400, %v2404
        %v2411 = vunpack.c.l.b16 %v2396
        %v2412 = vunpack.c.l.b16 %v2397
        %v2413 = vunpack.c.l.b16 %v2398
        %v2414 = vunpack.c.l.b16 %v2399
        %v2415 = vpack.c.b16 %v2412, %v2411
        %v2416 = vpack.c.b16 %v2414, %v2413
        %v2420 = vsel %vm294, %v2395, 0
        %2422 = vmatprep.subr.bf16.mxu0 0
        %2423 = vmatpush1.bf16.msra.mxu0 %v2415
        %2424 = vmatprep.subr.bf16.mxu0 0
        %2425 = vmatpush1.bf16.msra.mxu0 %v2416
        %2426 = vmatprep.subr.bf16.mxu0 0
        %2427 = vmatpush1.bf16.msra.mxu0 0
        %2428 = vmatprep.subr.bf16.mxu0 0
        %2429 = vmatpush1.bf16.msra.mxu0 0
        %2430 = vmatprep.subr.bf16.mxu0 0
        %2431 = vmatpush1.bf16.msra.mxu0 0
        %2432 = vmatprep.subr.bf16.mxu0 0
        %2433 = vmatpush1.bf16.msra.mxu0 0
        %2434 = vmatprep.subr.bf16.mxu0 0
        %2435 = vmatpush1.bf16.msra.mxu0 0
        %2436 = vmatprep.subr.bf16.mxu0 0
        %2437 = vmatpush1.bf16.msra.mxu0 0
        %2438 = vmatprep.subr.bf16.mxu0 0
        %2439 = vmatpush1.bf16.msra.mxu0 0
        %2440 = vmatprep.subr.bf16.mxu0 0
        %2441 = vmatpush1.bf16.msra.mxu0 0
        %2442 = vmatprep.subr.bf16.mxu0 0
        %2443 = vmatpush1.bf16.msra.mxu0 0
        %2444 = vmatprep.subr.bf16.mxu0 0
        %2445 = vmatpush1.bf16.msra.mxu0 0
        %2446 = vmatprep.subr.bf16.mxu0 0
        %2447 = vmatpush1.bf16.msra.mxu0 0
        %2448 = vmatprep.subr.bf16.mxu0 0
        %2449 = vmatpush1.bf16.msra.mxu0 0
        %2450 = vmatprep.subr.bf16.mxu0 0
        %2451 = vmatpush1.bf16.msra.mxu0 0
        %2452 = vmatprep.subr.bf16.mxu0 0
        %2453 = vmatpush1.bf16.msra.mxu0 0
        %2454 = vmatprep.mubr.bf16.mxu0 0
        %2455 = vmatmul.mubr.bf16.gmra.mrb[0].mxu0 %v2420
        %v2456 = vpop.f32.mrb[0].mxu0
        %v2457 = vadd.f32 %v2405, %v2456
        %v2458 = vpop.f32.mrb[0].mxu0
        %v2459 = vpop.f32.mrb[0].mxu0
        %v2460 = vpop.f32.mrb[0].mxu0
        %2461 = vdwg.mxu0
        %v2462 = vpack.c.bf16 %v2457, %v2457
        %vm2463 = vcmask 257024
        %2464 = vst.msk [vmem:[%s268] sm:$0xf] %vm2463, %v2462
        %s2465 = sand.u32 %s141, 1
        %s2466 = scalar_lea.sflag [#allocation4], %s2465
        %s2467 = sand.u32 %s141, 1
        %s2468 = smul.addr %s2467, 4
        %s2469 = scalar_lea.vmem [#allocation8], %s2468
        // Predicated region
        $region53: #{tpu_custom_call.1} parent=39 // pred_check
          %p2470 = pneg %p151
        $region54: #{tpu_custom_call.1} parent=39 // pred_check_branch
          %2472 = sbr.rel (%p2470) target = $region56
        $region55: #{tpu_custom_call.1} parent=39 // pred_region
          %s2474 = ssub.s32 64, 64
          %2475 = vsyncadd %s2466, %s2474
          %s2476 = smul.addr %s23, 64
          %s2477 = scalar_lea.hbm %s5, %s2476
          %s2479 = sshll.u32 %s2469, 4
          %s2480 = int_to_ptr.vmem [resolvable:$true] %s2479
          %2482 = dma.vmem_to_hbm [thread:$0]  %s2480, 64, %s2477, %s2466
        $region56: #{tpu_custom_call.1} parent=39 // pred_fallthru
          _
      $region40: #{tpu_custom_call.1} parent=5 // pred_fallthru
        _
      %p2483 = scmp.le.s32.totalorder 2, %s18
      // Predicated region
      $region57: #{tpu_custom_call.1} parent=5 // pred_check
        %p2484 = pneg %p2483
      $region58: #{tpu_custom_call.1} parent=5 // pred_check_branch
        %2486 = sbr.rel (%p2484) target = $region60
      $region59: #{tpu_custom_call.1} parent=5 // pred_region
        %s2487 = ssub.s32 %s18, 2
        // Predicated region
        $region61: #{tpu_custom_call.1} parent=59 // pred_check
          %p2488 = pneg %p157
        $region62: #{tpu_custom_call.1} parent=59 // pred_check_branch
          %2490 = sbr.rel (%p2488) target = $region64
        $region63: #{tpu_custom_call.1} parent=59 // pred_region
          %s2491 = sand.u32 %s142, 1
          %s2492 = scalar_lea.sflag [#allocation4], %s2491
          %s2493 = sand.u32 %s142, 1
          %s2494 = smul.addr %s2493, 4
          %s2495 = scalar_lea.vmem [#allocation8], %s2494
          %2496 = dma.done %s2492, 64
        $region64: #{tpu_custom_call.1} parent=59 // pred_fallthru
          _
      $region60: #{tpu_custom_call.1} parent=5 // pred_fallthru
        _
    $region6: #{tpu_custom_call.1} parent=1 // loop_footer
      %s22 = sadd.s32 1, %s18
    $region7: #{tpu_custom_call.1} parent=1 // loop_footer_branch
      %17 = sbr.rel target = $region3
    $region8: #{tpu_custom_call.1} parent=1 // loop_exit
      _
    %2497 = vsyncpa [#allocation3], 1
    %s2498 = scalar_lea.sflag [#allocation3], 1
    %2499 = vsyncpa %s2498, 1
    %2500 = vsyncpa [#allocation6], 1
    %2501 = vsyncpa [#allocation4], 1
    %s2502 = scalar_lea.sflag [#allocation4], 1
    %2503 = vsyncpa %s2502, 1

// kernel: tpu_custom_call.1
$region0: #{tpu_custom_call.1}
  #allocation0 [shape = 'u32[]', space=smem, size = 0x4, offset = 0x4, fixed_abs, tag = 'smem constant byte address 0x4 - core index']
  #allocation1 [shape = 'u32[144,128]{1,0:T(1,128)}', space=vmem, size = 0x12000, scoped, tag = 'internal scratch']
  %s0 = inlined_call_operand.hbm [shape: bf16[2,8,32], index: 0, kind: input, shape index: {}]
  %s1 = inlined_call_operand.hbm [shape: bf16[32,96], index: 1, kind: input, shape index: {}]
  %s2 = inlined_call_operand.vmem [shape: f32[1,96], index: 2, kind: input, shape index: {}]
  %s3 = inlined_call_operand.hbm [shape: bf16[32,32], index: 3, kind: input, shape index: {}]
  %s4 = inlined_call_operand.vmem [shape: f32[1,32], index: 4, kind: input, shape index: {}]
  %s5 = inlined_call_operand.hbm [shape: bf16[16,32], index: 5, kind: output, shape index: {}]
  %s6 = sld [smem:[#allocation0]]
  $region65: #{tpu_custom_call.1} parent=0
    _
  %s8 = ssub.s32 1, %s6
  %s9 = scalar_select 0, %s8, %s6
  $region1: #{tpu_custom_call.1} parent=0
    #allocation2 [shape = 'u8[4096]{0}', space=vmem, size = 0x1000, scoped, tag = 'input window, operand 0']
    #allocation3 [shape = 's32[2]{0}', space=sflag, size = 0x8, scoped, tag = 'scoped memory for tpu_custom_call.1']
    #allocation4 [shape = 's32[2]{0}', space=sflag, size = 0x8, scoped, tag = 'scoped memory for tpu_custom_call.1']
    #allocation5 [shape = 'u8[8192]{0}', space=vmem, size = 0x2000, scoped, tag = 'input window, operand 1, single buffered']
    #allocation6 [shape = 's32[1]{0}', space=sflag, size = 0x4, scoped, tag = 'scoped memory for tpu_custom_call.1']
    #allocation7 [shape = 'u8[8192]{0}', space=vmem, size = 0x2000, scoped, tag = 'input window, operand 3, single buffered']
    #allocation8 [shape = 'u8[4096]{0}', space=vmem, size = 0x1000, scoped, tag = 'output window, operand 0']
    %10 = vsyncpa [#allocation3], 0
    %s11 = scalar_lea.sflag [#allocation3], 1
    %12 = vsyncpa %s11, 0
    %13 = vsyncpa [#allocation6], 0
    %14 = vsyncpa [#allocation4], 0
    %s15 = scalar_lea.sflag [#allocation4], 1
    %16 = vsyncpa %s15, 0
    loop: start=0, step=1, limit=4
    $region2: #{tpu_custom_call.1} parent=1 // loop_pre_header
      _
    $region3: #{tpu_custom_call.1} parent=1 // loop_header
      %s18 = sphi 0, %s22
      %p19 = scmp.ge.s32.totalorder %s18, 4
      %s28 = sphi 0, %s30
      %s31 = sphi 0, %s28
      %s32 = sphi 0, %s31
      %s48 = sphi 0, %s32
      %s52 = sphi 0, %s52
      %s54 = sphi 0, %s52
      %s55 = sphi 0, %s54
      %s69 = sphi 0, %s55
      %s73 = sphi 0, %s73
      %s75 = sphi 0, %s73
      %s76 = sphi 0, %s75
      %s90 = sphi 0, %s76
      %s94 = sphi 0, %s94
      %s96 = sphi 0, %s94
      %s97 = sphi 0, %s96
      %s111 = sphi 0, %s97
      %s115 = sphi 0, %s115
      %s117 = sphi 0, %s115
      %s118 = sphi 0, %s117
      %s132 = sphi 0, %s118
      %s138 = sphi 0, %s140
      %s141 = sphi 0, %s138
      %s142 = sphi 0, %s141
      %s158 = sphi 0, %s142
    $region4: #{tpu_custom_call.1} parent=1 // loop_header_branch
      %21 = sbr.rel (%p19) target = $region8
    $region5: #{tpu_custom_call.1} parent=1 // loop_body
      %s23 = ssub.s32 %s18, 1
      %s24 = ssub.s32 %s18, 2
      %s25 = sadd.s32 %s18, 1
      %s26 = ssub.s32 %s18, %s25
      %p27 = scmp.eq.s32.totalorder %s26, 0
      %s29 = sadd.s32 %s28, 1
      %s30 = scalar_select %p27, %s28, %s29
      %p33 = pneg %p27
      %p34 = scmp.eq.s32.totalorder %s18, 1
      %p35 = por %p33, %p34
      %p36 = scmp.ne.s32.totalorder %s28, %s31
      %p37 = scmp.eq.s32.totalorder %s18, 0
      %p38 = por %p36, %p37
      %p39 = scmp.ne.s32.totalorder %s28, %s31
      %p40 = scmp.eq.s32.totalorder %s23, 1
      %p41 = por %p39, %p40
      %p42 = scmp.ne.s32.totalorder %s31, %s32
      %p43 = scmp.eq.s32.totalorder %s23, 0
      %p44 = por %p42, %p43
      %p45 = scmp.ne.s32.totalorder %s31, %s32
      %p46 = scmp.eq.s32.totalorder %s24, 1
      %p47 = por %p45, %p46
      %p49 = scmp.ne.s32.totalorder %s32, %s48
      %p50 = scmp.eq.s32.totalorder %s24, 0
      %p51 = por %p49, %p50
      %s53 = sadd.s32 %s52, 1
      %p56 = scmp.eq.s32.totalorder %s18, 1
      %p57 = scmp.ne.s32.totalorder %s52, %s54
      %p58 = scmp.eq.s32.totalorder %s18, 0
      %p59 = por %p57, %p58
      %p60 = scmp.ne.s32.totalorder %s52, %s54
      %p61 = scmp.eq.s32.totalorder %s23, 1
      %p62 = por %p60, %p61
      %p63 = scmp.ne.s32.totalorder %s54, %s55
      %p64 = scmp.eq.s32.totalorder %s23, 0
      %p65 = por %p63, %p64
      %p66 = scmp.ne.s32.totalorder %s54, %s55
      %p67 = scmp.eq.s32.totalorder %s24, 1
      %p68 = por %p66, %p67
      %p70 = scmp.ne.s32.totalorder %s55, %s69
      %p71 = scmp.eq.s32.totalorder %s24, 0
      %p72 = por %p70, %p71
      %s74 = sadd.s32 %s73, 1
      %p77 = scmp.eq.s32.totalorder %s18, 1
      %p78 = scmp.ne.s32.totalorder %s73, %s75
      %p79 = scmp.eq.s32.totalorder %s18, 0
      %p80 = por %p78, %p79
      %p81 = scmp.ne.s32.totalorder %s73, %s75
      %p82 = scmp.eq.s32.totalorder %s23, 1
      %p83 = por %p81, %p82
      %p84 = scmp.ne.s32.totalorder %s75, %s76
      %p85 = scmp.eq.s32.totalorder %s23, 0
      %p86 = por %p84, %p85
      %p87 = scmp.ne.s32.totalorder %s75, %s76
      %p88 = scmp.eq.s32.totalorder %s24, 1
      %p89 = por %p87, %p88
      %p91 = scmp.ne.s32.totalorder %s76, %s90
      %p92 = scmp.eq.s32.totalorder %s24, 0
      %p93 = por %p91, %p92
      %s95 = sadd.s32 %s94, 1
      %p98 = scmp.eq.s32.totalorder %s18, 1
      %p99 = scmp.ne.s32.totalorder %s94, %s96
      %p100 = scmp.eq.s32.totalorder %s18, 0
      %p101 = por %p99, %p100
      %p102 = scmp.ne.s32.totalorder %s94, %s96
      %p103 = scmp.eq.s32.totalorder %s23, 1
      %p104 = por %p102, %p103
      %p105 = scmp.ne.s32.totalorder %s96, %s97
      %p106 = scmp.eq.s32.totalorder %s23, 0
      %p107 = por %p105, %p106
      %p108 = scmp.ne.s32.totalorder %s96, %s97
      %p109 = scmp.eq.s32.totalorder %s24, 1
      %p110 = por %p108, %p109
      %p112 = scmp.ne.s32.totalorder %s97, %s111
      %p113 = scmp.eq.s32.totalorder %s24, 0
      %p114 = por %p112, %p113
      %s116 = sadd.s32 %s115, 1
      %p119 = scmp.eq.s32.totalorder %s18, 1
      %p120 = scmp.ne.s32.totalorder %s115, %s117
      %p121 = scmp.eq.s32.totalorder %s18, 0
      %p122 = por %p120, %p121
      %p123 = scmp.ne.s32.totalorder %s115, %s117
      %p124 = scmp.eq.s32.totalorder %s23, 1
      %p125 = por %p123, %p124
      %p126 = scmp.ne.s32.totalorder %s117, %s118
      %p127 = scmp.eq.s32.totalorder %s23, 0
      %p128 = por %p126, %p127
      %p129 = scmp.ne.s32.totalorder %s117, %s118
      %p130 = scmp.eq.s32.totalorder %s24, 1
      %p131 = por %p129, %p130
      %p133 = scmp.ne.s32.totalorder %s118, %s132
      %p134 = scmp.eq.s32.totalorder %s24, 0
      %p135 = por %p133, %p134
      %s136 = ssub.s32 %s18, %s25
      %p137 = scmp.eq.s32.totalorder %s136, 0
      %s139 = sadd.s32 %s138, 1
      %s140 = scalar_select %p137, %s138, %s139
      %p143 = pneg %p137
      %p144 = scmp.eq.s32.totalorder %s18, 1
      %p145 = por %p143, %p144
      %p146 = scmp.ne.s32.totalorder %s138, %s141
      %p147 = scmp.eq.s32.totalorder %s18, 0
      %p148 = por %p146, %p147
      %p149 = scmp.ne.s32.totalorder %s138, %s141
      %p150 = scmp.eq.s32.totalorder %s23, 1
      %p151 = por %p149, %p150
      %p152 = scmp.ne.s32.totalorder %s141, %s142
      %p153 = scmp.eq.s32.totalorder %s23, 0
      %p154 = por %p152, %p153
      %p155 = scmp.ne.s32.totalorder %s141, %s142
      %p156 = scmp.eq.s32.totalorder %s24, 1
      %p157 = por %p155, %p156
      %p159 = scmp.ne.s32.totalorder %s142, %s158
      %p160 = scmp.eq.s32.totalorder %s24, 0
      %p161 = por %p159, %p160
      %p162 = scmp.le.s32.totalorder 1, %s18
      %p163 = scmp.lt.s32.totalorder %s18, 3
      %p164 = pnand %p162, %p163
      %p165 = pneg %p164
      // Predicated region
      $region9: #{tpu_custom_call.1} parent=5 // pred_check
        _
      $region10: #{tpu_custom_call.1} parent=5 // pred_check_branch
        %167 = sbr.rel (%p164) target = $region12
      $region11: #{tpu_custom_call.1} parent=5 // pred_region
        %s168 = ssub.s32 %s18, 1
        // Predicated region
        $region13: #{tpu_custom_call.1} parent=11 // pred_check
          %p169 = pneg %p65
        $region14: #{tpu_custom_call.1} parent=11 // pred_check_branch
          %171 = sbr.rel (%p169) target = $region16
        $region15: #{tpu_custom_call.1} parent=11 // pred_region
          %s173 = ssub.s32 256, 256
          %174 = vsyncadd [#allocation6], %s173
          %s175 = sshll.u32 [#allocation5], 4
          %s176 = int_to_ptr.vmem [resolvable:$true] %s175
          %181 = dma.hbm_to_vmem [thread:$0]  %s1, 256, %s176, [#allocation6], 64, 64, 4
        $region16: #{tpu_custom_call.1} parent=11 // pred_fallthru
          _
        // Predicated region
        $region17: #{tpu_custom_call.1} parent=11 // pred_check
          %p182 = pneg %p86
        $region18: #{tpu_custom_call.1} parent=11 // pred_check_branch
          %184 = sbr.rel (%p182) target = $region20
        $region19: #{tpu_custom_call.1} parent=11 // pred_region
          _
        $region20: #{tpu_custom_call.1} parent=11 // pred_fallthru
          _
        // Predicated region
        $region21: #{tpu_custom_call.1} parent=11 // pred_check
          %p185 = pneg %p107
        $region22: #{tpu_custom_call.1} parent=11 // pred_check_branch
          %187 = sbr.rel (%p185) target = $region24
        $region23: #{tpu_custom_call.1} parent=11 // pred_region
          %s189 = ssub.s32 256, 256
          %190 = vsyncadd [#allocation6], %s189
          %s191 = sshll.u32 [#allocation7], 4
          %s192 = int_to_ptr.vmem [resolvable:$true] %s191
          %197 = dma.hbm_to_vmem [thread:$0]  %s3, 256, %s192, [#allocation6], 64, 64, 4
        $region24: #{tpu_custom_call.1} parent=11 // pred_fallthru
          _
        // Predicated region
        $region25: #{tpu_custom_call.1} parent=11 // pred_check
          %p198 = pneg %p128
        $region26: #{tpu_custom_call.1} parent=11 // pred_check_branch
          %200 = sbr.rel (%p198) target = $region28
        $region27: #{tpu_custom_call.1} parent=11 // pred_region
          _
        $region28: #{tpu_custom_call.1} parent=11 // pred_fallthru
          _
      $region12: #{tpu_custom_call.1} parent=5 // pred_fallthru
        _
      %p201 = scmp.lt.s32.totalorder %s18, 2
      // Predicated region
      $region29: #{tpu_custom_call.1} parent=5 // pred_check
        %p202 = pneg %p201
      $region30: #{tpu_custom_call.1} parent=5 // pred_check_branch
        %204 = sbr.rel (%p202) target = $region32
      $region31: #{tpu_custom_call.1} parent=5 // pred_region
        // Predicated region
        $region33: #{tpu_custom_call.1} parent=31 // pred_check
          %p205 = pneg %p38
        $region34: #{tpu_custom_call.1} parent=31 // pred_check_branch
          %207 = sbr.rel (%p205) target = $region36
        $region35: #{tpu_custom_call.1} parent=31 // pred_region
          %s208 = sand.u32 %s28, 1
          %s209 = scalar_lea.sflag [#allocation3], %s208
          %s210 = sand.u32 %s28, 1
          %s211 = smul.addr %s210, 4
          %s212 = scalar_lea.vmem [#allocation2], %s211
          %s214 = ssub.s32 64, 64
          %215 = vsyncadd %s209, %s214
          %s216 = smul.addr %s18, 64
          %s217 = scalar_lea.hbm %s0, %s216
          %s219 = sshll.u32 %s212, 4
          %s220 = int_to_ptr.vmem [resolvable:$true] %s219
          %222 = dma.hbm_to_vmem [thread:$0]  %s217, 64, %s220, %s209
        $region36: #{tpu_custom_call.1} parent=31 // pred_fallthru
          _
      $region32: #{tpu_custom_call.1} parent=5 // pred_fallthru
        _
      %p223 = scmp.le.s32.totalorder 1, %s18
      %p224 = scmp.lt.s32.totalorder %s18, 3
      %p225 = pnand %p223, %p224
      %p226 = pneg %p225
      // Predicated region
      $region37: #{tpu_custom_call.1} parent=5 // pred_check
        _
      $region38: #{tpu_custom_call.1} parent=5 // pred_check_branch
        %228 = sbr.rel (%p225) target = $region40
      $region39: #{tpu_custom_call.1} parent=5 // pred_region
        %s229 = ssub.s32 %s18, 1
        %s230 = sand.u32 %s31, 1
        %s231 = scalar_lea.sflag [#allocation3], %s230
        %s232 = sand.u32 %s31, 1
        %s233 = smul.addr %s232, 4
        %s234 = scalar_lea.vmem [#allocation2], %s233
        // Predicated region
        $region41: #{tpu_custom_call.1} parent=39 // pred_check
          %p235 = pneg %p44
        $region42: #{tpu_custom_call.1} parent=39 // pred_check_branch
          %237 = sbr.rel (%p235) target = $region44
        $region43: #{tpu_custom_call.1} parent=39 // pred_region
          %238 = dma.done %s231, 64
        $region44: #{tpu_custom_call.1} parent=39 // pred_fallthru
          _
        // Predicated region
        $region45: #{tpu_custom_call.1} parent=39 // pred_check
          %p239 = pneg %p65
        $region46: #{tpu_custom_call.1} parent=39 // pred_check_branch
          %241 = sbr.rel (%p239) target = $region48
        $region47: #{tpu_custom_call.1} parent=39 // pred_region
          %242 = dma.done [#allocation6], 256
        $region48: #{tpu_custom_call.1} parent=39 // pred_fallthru
          _
        // Predicated region
        $region49: #{tpu_custom_call.1} parent=39 // pred_check
          %p243 = pneg %p107
        $region50: #{tpu_custom_call.1} parent=39 // pred_check_branch
          %245 = sbr.rel (%p243) target = $region52
        $region51: #{tpu_custom_call.1} parent=39 // pred_region
          %246 = dma.done [#allocation6], 256
        $region52: #{tpu_custom_call.1} parent=39 // pred_fallthru
          _
        %s247 = sand.u32 %s31, 1
        %s248 = scalar_lea.sflag [#allocation3], %s247
        %s249 = sand.u32 %s31, 1
        %s250 = smul.addr %s249, 4
        %s251 = scalar_lea.vmem [#allocation2], %s250
        %p252 = pneg %p44
        %p253 = pneg %p41
        %p254 = pneg %p65
        %p255 = pneg %p62
        %p256 = pneg %p86
        %p257 = pneg %p83
        %p258 = pneg %p107
        %p259 = pneg %p104
        %p260 = pneg %p128
        %p261 = pneg %p125
        %p262 = pneg %p154
        %p263 = pneg %p151
        %s264 = sand.u32 %s141, 1
        %s265 = scalar_lea.sflag [#allocation4], %s264
        %s266 = sand.u32 %s141, 1
        %s267 = smul.addr %s266, 4
        %s268 = scalar_lea.vmem [#allocation8], %s267
        %v270 = vld [vmem:[%s234] sm:$0xf]
        %v271 = vld [vmem:[#allocation5] sm:$0xf]
        %v272 = vld [vmem:[#allocation5 + $0x4] sm:$0xf]
        %v273 = vld [vmem:[#allocation5 + $0x8] sm:$0xf]
        %v274 = vld [vmem:[#allocation5 + $0xc] sm:$0xf]
        %v275 = vld [vmem:[%s2] sm:$0x1]
        %v277 = vlaneseq
        %v278 = vshrl.u32 %v277, 7
        %v279 = vsub.s32 0, %v278
        %v280 = vrot.slane %v275, %v279
        %v286 = vunpack.c.l.b16 %v271
        %v287 = vunpack.c.l.b16 %v272
        %v288 = vunpack.c.l.b16 %v273
        %v289 = vunpack.c.l.b16 %v274
        %v290 = vpack.c.b16 %v287, %v286
        %v291 = vpack.c.b16 %v289, %v288
        %vm294 = vcmask 261120
        %v296 = vsel %vm294, %v270, 0
        %298 = vmatprep.subr.bf16.mxu0 0
        %299 = vmatpush1.bf16.msra.mxu0 %v290
        %300 = vmatprep.subr.bf16.mxu0 0
        %301 = vmatpush1.bf16.msra.mxu0 %v291
        %302 = vmatprep.subr.bf16.mxu0 0
        %303 = vmatpush1.bf16.msra.mxu0 0
        %304 = vmatprep.subr.bf16.mxu0 0
        %305 = vmatpush1.bf16.msra.mxu0 0
        %306 = vmatprep.subr.bf16.mxu0 0
        %307 = vmatpush1.bf16.msra.mxu0 0
        %308 = vmatprep.subr.bf16.mxu0 0
        %309 = vmatpush1.bf16.msra.mxu0 0
        %310 = vmatprep.subr.bf16.mxu0 0
        %311 = vmatpush1.bf16.msra.mxu0 0
        %312 = vmatprep.subr.bf16.mxu0 0
        %313 = vmatpush1.bf16.msra.mxu0 0
        %314 = vmatprep.subr.bf16.mxu0 0
        %315 = vmatpush1.bf16.msra.mxu0 0
        %316 = vmatprep.subr.bf16.mxu0 0
        %317 = vmatpush1.bf16.msra.mxu0 0
        %318 = vmatprep.subr.bf16.mxu0 0
        %319 = vmatpush1.bf16.msra.mxu0 0
        %320 = vmatprep.subr.bf16.mxu0 0
        %321 = vmatpush1.bf16.msra.mxu0 0
        %322 = vmatprep.subr.bf16.mxu0 0
        %323 = vmatpush1.bf16.msra.mxu0 0
        %324 = vmatprep.subr.bf16.mxu0 0
        %325 = vmatpush1.bf16.msra.mxu0 0
        %326 = vmatprep.subr.bf16.mxu0 0
        %327 = vmatpush1.bf16.msra.mxu0 0
        %328 = vmatprep.subr.bf16.mxu0 0
        %329 = vmatpush1.bf16.msra.mxu0 0
        %330 = vmatprep.mubr.bf16.mxu0 0
        %331 = vmatmul.mubr.bf16.gmra.mrb[0].mxu0 %v296
        %v332 = vpop.f32.mrb[0].mxu0
        %v333 = vadd.f32 %v280, %v332
        %v334 = vpop.f32.mrb[0].mxu0
        %v335 = vpop.f32.mrb[0].mxu0
        %v336 = vpop.f32.mrb[0].mxu0
        %337 = vdwg.mxu0
        %339 = vrot.lane.b32.xlu0 %v333, 124
        %v340 = vpop.permute.xlu0 %339
        %342 = vrot.lane.b32.xlu0 %v333, 120
        %v343 = vpop.permute.xlu0 %342
        %345 = vrot.lane.b32.xlu0 %v333, 116
        %v346 = vpop.permute.xlu0 %345
        %348 = vrot.lane.b32.xlu0 %v333, 112
        %v349 = vpop.permute.xlu0 %348
        %351 = vrot.lane.b32.xlu0 %v333, 108
        %v352 = vpop.permute.xlu0 %351
        %354 = vrot.lane.b32.xlu0 %v333, 104
        %v355 = vpop.permute.xlu0 %354
        %357 = vrot.lane.b32.xlu0 %v333, 100
        %v358 = vpop.permute.xlu0 %357
        %v360 = vcombine.low %v333, %v343
        %v361 = vcombine.high %v333, %v343
        %v363 = vunpack.c.l.s4 1983009808
        %v364 = vunpack.c.0.s8 %v363
        %v365 = vlaneseq
        %v366 = vshrl.u32 %v365, 7
        %v367 = vsub.s32 %v364, %v366
        %v368 = vrot.slane %v360, %v367
        %v370 = vunpack.c.l.s4 1983009808
        %v371 = vunpack.c.0.s8 %v370
        %v372 = vlaneseq
        %v373 = vshrl.u32 %v372, 7
        %v374 = vsub.s32 %v371, %v373
        %v375 = vrot.slane %v361, %v374
        %v376 = vcombine.low %v340, %v346
        %v377 = vcombine.high %v340, %v346
        %v379 = vunpack.c.l.s4 1983009808
        %v380 = vunpack.c.0.s8 %v379
        %v381 = vlaneseq
        %v382 = vshrl.u32 %v381, 7
        %v383 = vsub.s32 %v380, %v382
        %v384 = vrot.slane %v376, %v383
        %v386 = vunpack.c.l.s4 1983009808
        %v387 = vunpack.c.0.s8 %v386
        %v388 = vlaneseq
        %v389 = vshrl.u32 %v388, 7
        %v390 = vsub.s32 %v387, %v389
        %v391 = vrot.slane %v377, %v390
        %v392 = vcombine.low %v349, %v355
        %v393 = vcombine.high %v349, %v355
        %v395 = vunpack.c.l.s4 1983009808
        %v396 = vunpack.c.0.s8 %v395
        %v397 = vlaneseq
        %v398 = vshrl.u32 %v397, 7
        %v399 = vsub.s32 %v396, %v398
        %v400 = vrot.slane %v392, %v399
        %v402 = vunpack.c.l.s4 1983009808
        %v403 = vunpack.c.0.s8 %v402
        %v404 = vlaneseq
        %v405 = vshrl.u32 %v404, 7
        %v406 = vsub.s32 %v403, %v405
        %v407 = vrot.slane %v393, %v406
        %v408 = vcombine.low %v352, %v358
        %v409 = vcombine.high %v352, %v358
        %v411 = vunpack.c.l.s4 1983009808
        %v412 = vunpack.c.0.s8 %v411
        %v413 = vlaneseq
        %v414 = vshrl.u32 %v413, 7
        %v415 = vsub.s32 %v412, %v414
        %v416 = vrot.slane %v408, %v415
        %v418 = vunpack.c.l.s4 1983009808
        %v419 = vunpack.c.0.s8 %v418
        %v420 = vlaneseq
        %v421 = vshrl.u32 %v420, 7
        %v422 = vsub.s32 %v419, %v421
        %v423 = vrot.slane %v409, %v422
        %v424 = vcombine.low %v368, %v384
        %v425 = vcombine.high %v368, %v384
        %v427 = vunpack.c.l.s4 1934713408
        %v428 = vunpack.c.0.s8 %v427
        %v429 = vlaneseq
        %v430 = vshrl.u32 %v429, 7
        %v431 = vsub.s32 %v428, %v430
        %v432 = vrot.slane %v424, %v431
        %v434 = vunpack.c.l.s4 1934713408
        %v435 = vunpack.c.0.s8 %v434
        %v436 = vlaneseq
        %v437 = vshrl.u32 %v436, 7
        %v438 = vsub.s32 %v435, %v437
        %v439 = vrot.slane %v425, %v438
        %v440 = vcombine.low %v375, %v391
        %v441 = vcombine.high %v375, %v391
        %v443 = vunpack.c.l.s4 1934713408
        %v444 = vunpack.c.0.s8 %v443
        %v445 = vlaneseq
        %v446 = vshrl.u32 %v445, 7
        %v447 = vsub.s32 %v444, %v446
        %v448 = vrot.slane %v440, %v447
        %v450 = vunpack.c.l.s4 1934713408
        %v451 = vunpack.c.0.s8 %v450
        %v452 = vlaneseq
        %v453 = vshrl.u32 %v452, 7
        %v454 = vsub.s32 %v451, %v453
        %v455 = vrot.slane %v441, %v454
        %v456 = vcombine.low %v400, %v416
        %v457 = vcombine.high %v400, %v416
        %v459 = vunpack.c.l.s4 1934713408
        %v460 = vunpack.c.0.s8 %v459
        %v461 = vlaneseq
        %v462 = vshrl.u32 %v461, 7
        %v463 = vsub.s32 %v460, %v462
        %v464 = vrot.slane %v456, %v463
        %v466 = vunpack.c.l.s4 1934713408
        %v467 = vunpack.c.0.s8 %v466
        %v468 = vlaneseq
        %v469 = vshrl.u32 %v468, 7
        %v470 = vsub.s32 %v467, %v469
        %v471 = vrot.slane %v457, %v470
        %v472 = vcombine.low %v407, %v423
        %v473 = vcombine.high %v407, %v423
        %v475 = vunpack.c.l.s4 1934713408
        %v476 = vunpack.c.0.s8 %v475
        %v477 = vlaneseq
        %v478 = vshrl.u32 %v477, 7
        %v479 = vsub.s32 %v476, %v478
        %v480 = vrot.slane %v472, %v479
        %v482 = vunpack.c.l.s4 1934713408
        %v483 = vunpack.c.0.s8 %v482
        %v484 = vlaneseq
        %v485 = vshrl.u32 %v484, 7
        %v486 = vsub.s32 %v483, %v485
        %v487 = vrot.slane %v473, %v486
        %v488 = vcombine.low %v432, %v464
        %v489 = vcombine.high %v432, %v464
        %v490 = vcombine.low %v439, %v471
        %v491 = vcombine.high %v439, %v471
        %v492 = vcombine.low %v448, %v480
        %v493 = vcombine.high %v448, %v480
        %v494 = vcombine.low %v455, %v487
        %v495 = vcombine.high %v455, %v487
        %v496 = vcombine.low %v488, %v490
        %v497 = vcombine.high %v488, %v490
        %v499 = vunpack.c.l.s4 1983009808
        %v500 = vunpack.c.0.s8 %v499
        %v501 = vlaneseq
        %v502 = vshrl.u32 %v501, 7
        %v503 = vsub.s32 %v500, %v502
        %v504 = vrot.slane %v496, %v503
        %v506 = vunpack.c.l.s4 1983009808
        %v507 = vunpack.c.0.s8 %v506
        %v508 = vlaneseq
        %v509 = vshrl.u32 %v508, 7
        %v510 = vsub.s32 %v507, %v509
        %v511 = vrot.slane %v497, %v510
        %v512 = vcombine.low %v489, %v491
        %v513 = vcombine.high %v489, %v491
        %v515 = vunpack.c.l.s4 1983009808
        %v516 = vunpack.c.0.s8 %v515
        %v517 = vlaneseq
        %v518 = vshrl.u32 %v517, 7
        %v519 = vsub.s32 %v516, %v518
        %v520 = vrot.slane %v512, %v519
        %v522 = vunpack.c.l.s4 1983009808
        %v523 = vunpack.c.0.s8 %v522
        %v524 = vlaneseq
        %v525 = vshrl.u32 %v524, 7
        %v526 = vsub.s32 %v523, %v525
        %v527 = vrot.slane %v513, %v526
        %v528 = vcombine.low %v492, %v494
        %v529 = vcombine.high %v492, %v494
        %v531 = vunpack.c.l.s4 1983009808
        %v532 = vunpack.c.0.s8 %v531
        %v533 = vlaneseq
        %v534 = vshrl.u32 %v533, 7
        %v535 = vsub.s32 %v532, %v534
        %v536 = vrot.slane %v528, %v535
        %v538 = vunpack.c.l.s4 1983009808
        %v539 = vunpack.c.0.s8 %v538
        %v540 = vlaneseq
        %v541 = vshrl.u32 %v540, 7
        %v542 = vsub.s32 %v539, %v541
        %v543 = vrot.slane %v529, %v542
        %v544 = vcombine.low %v493, %v495
        %v545 = vcombine.high %v493, %v495
        %v547 = vunpack.c.l.s4 1983009808
        %v548 = vunpack.c.0.s8 %v547
        %v549 = vlaneseq
        %v550 = vshrl.u32 %v549, 7
        %v551 = vsub.s32 %v548, %v550
        %v552 = vrot.slane %v544, %v551
        %v554 = vunpack.c.l.s4 1983009808
        %v555 = vunpack.c.0.s8 %v554
        %v556 = vlaneseq
        %v557 = vshrl.u32 %v556, 7
        %v558 = vsub.s32 %v555, %v557
        %v559 = vrot.slane %v545, %v558
        %v560 = vcombine.low %v504, %v520
        %v561 = vcombine.high %v504, %v520
        %v563 = vunpack.c.l.s4 1934713408
        %v564 = vunpack.c.0.s8 %v563
        %v565 = vlaneseq
        %v566 = vshrl.u32 %v565, 7
        %v567 = vsub.s32 %v564, %v566
        %v568 = vrot.slane %v560, %v567
        %v570 = vunpack.c.l.s4 1934713408
        %v571 = vunpack.c.0.s8 %v570
        %v572 = vlaneseq
        %v573 = vshrl.u32 %v572, 7
        %v574 = vsub.s32 %v571, %v573
        %v575 = vrot.slane %v561, %v574
        %v576 = vcombine.low %v511, %v527
        %v577 = vcombine.high %v511, %v527
        %v579 = vunpack.c.l.s4 1934713408
        %v580 = vunpack.c.0.s8 %v579
        %v581 = vlaneseq
        %v582 = vshrl.u32 %v581, 7
        %v583 = vsub.s32 %v580, %v582
        %v584 = vrot.slane %v576, %v583
        %v586 = vunpack.c.l.s4 1934713408
        %v587 = vunpack.c.0.s8 %v586
        %v588 = vlaneseq
        %v589 = vshrl.u32 %v588, 7
        %v590 = vsub.s32 %v587, %v589
        %v591 = vrot.slane %v577, %v590
        %v592 = vcombine.low %v536, %v552
        %v593 = vcombine.high %v536, %v552
        %v595 = vunpack.c.l.s4 1934713408
        %v596 = vunpack.c.0.s8 %v595
        %v597 = vlaneseq
        %v598 = vshrl.u32 %v597, 7
        %v599 = vsub.s32 %v596, %v598
        %v600 = vrot.slane %v592, %v599
        %v602 = vunpack.c.l.s4 1934713408
        %v603 = vunpack.c.0.s8 %v602
        %v604 = vlaneseq
        %v605 = vshrl.u32 %v604, 7
        %v606 = vsub.s32 %v603, %v605
        %v607 = vrot.slane %v593, %v606
        %v608 = vcombine.low %v543, %v559
        %v609 = vcombine.high %v543, %v559
        %v611 = vunpack.c.l.s4 1934713408
        %v612 = vunpack.c.0.s8 %v611
        %v613 = vlaneseq
        %v614 = vshrl.u32 %v613, 7
        %v615 = vsub.s32 %v612, %v614
        %v616 = vrot.slane %v608, %v615
        %v618 = vunpack.c.l.s4 1934713408
        %v619 = vunpack.c.0.s8 %v618
        %v620 = vlaneseq
        %v621 = vshrl.u32 %v620, 7
        %v622 = vsub.s32 %v619, %v621
        %v623 = vrot.slane %v609, %v622
        %v624 = vcombine.low %v568, %v600
        %v625 = vcombine.high %v568, %v600
        %v626 = vcombine.low %v575, %v607
        %v627 = vcombine.high %v575, %v607
        %v628 = vcombine.low %v584, %v616
        %v629 = vcombine.high %v584, %v616
        %v630 = vcombine.low %v591, %v623
        %v631 = vcombine.high %v591, %v623
        %v632 = vpack.c.bf16 %v624, %v624
        %v633 = vpack.c.bf16 %v625, %v625
        %v634 = vpack.c.bf16 %v626, %v626
        %v635 = vpack.c.bf16 %v627, %v627
        %v636 = vpack.c.bf16 %v628, %v628
        %v637 = vpack.c.bf16 %v629, %v629
        %v638 = vpack.c.bf16 %v630, %v630
        %v639 = vpack.c.bf16 %v631, %v631
        %640 = vrot.lane.b32.xlu0 %v333, 96
        %v641 = vpop.permute.xlu0 %640
        %642 = vrot.lane.b32.xlu0 %v340, 96
        %v643 = vpop.permute.xlu0 %642
        %644 = vrot.lane.b32.xlu0 %v343, 96
        %v645 = vpop.permute.xlu0 %644
        %646 = vrot.lane.b32.xlu0 %v346, 96
        %v647 = vpop.permute.xlu0 %646
        %648 = vrot.lane.b32.xlu0 %v349, 96
        %v649 = vpop.permute.xlu0 %648
        %650 = vrot.lane.b32.xlu0 %v352, 96
        %v651 = vpop.permute.xlu0 %650
        %652 = vrot.lane.b32.xlu0 %v355, 96
        %v653 = vpop.permute.xlu0 %652
        %654 = vrot.lane.b32.xlu0 %v358, 96
        %v655 = vpop.permute.xlu0 %654
        %v664 = vcombine.low %v641, %v645
        %v665 = vcombine.high %v641, %v645
        %v667 = vunpack.c.l.s4 1983009808
        %v668 = vunpack.c.0.s8 %v667
        %v669 = vlaneseq
        %v670 = vshrl.u32 %v669, 7
        %v671 = vsub.s32 %v668, %v670
        %v672 = vrot.slane %v664, %v671
        %v674 = vunpack.c.l.s4 1983009808
        %v675 = vunpack.c.0.s8 %v674
        %v676 = vlaneseq
        %v677 = vshrl.u32 %v676, 7
        %v678 = vsub.s32 %v675, %v677
        %v679 = vrot.slane %v665, %v678
        %v680 = vcombine.low %v643, %v647
        %v681 = vcombine.high %v643, %v647
        %v683 = vunpack.c.l.s4 1983009808
        %v684 = vunpack.c.0.s8 %v683
        %v685 = vlaneseq
        %v686 = vshrl.u32 %v685, 7
        %v687 = vsub.s32 %v684, %v686
        %v688 = vrot.slane %v680, %v687
        %v690 = vunpack.c.l.s4 1983009808
        %v691 = vunpack.c.0.s8 %v690
        %v692 = vlaneseq
        %v693 = vshrl.u32 %v692, 7
        %v694 = vsub.s32 %v691, %v693
        %v695 = vrot.slane %v681, %v694
        %v696 = vcombine.low %v649, %v653
        %v697 = vcombine.high %v649, %v653
        %v699 = vunpack.c.l.s4 1983009808
        %v700 = vunpack.c.0.s8 %v699
        %v701 = vlaneseq
        %v702 = vshrl.u32 %v701, 7
        %v703 = vsub.s32 %v700, %v702
        %v704 = vrot.slane %v696, %v703
        %v706 = vunpack.c.l.s4 1983009808
        %v707 = vunpack.c.0.s8 %v706
        %v708 = vlaneseq
        %v709 = vshrl.u32 %v708, 7
        %v710 = vsub.s32 %v707, %v709
        %v711 = vrot.slane %v697, %v710
        %v712 = vcombine.low %v651, %v655
        %v713 = vcombine.high %v651, %v655
        %v715 = vunpack.c.l.s4 1983009808
        %v716 = vunpack.c.0.s8 %v715
        %v717 = vlaneseq
        %v718 = vshrl.u32 %v717, 7
        %v719 = vsub.s32 %v716, %v718
        %v720 = vrot.slane %v712, %v719
        %v722 = vunpack.c.l.s4 1983009808
        %v723 = vunpack.c.0.s8 %v722
        %v724 = vlaneseq
        %v725 = vshrl.u32 %v724, 7
        %v726 = vsub.s32 %v723, %v725
        %v727 = vrot.slane %v713, %v726
        %v728 = vcombine.low %v672, %v688
        %v729 = vcombine.high %v672, %v688
        %v731 = vunpack.c.l.s4 1934713408
        %v732 = vunpack.c.0.s8 %v731
        %v733 = vlaneseq
        %v734 = vshrl.u32 %v733, 7
        %v735 = vsub.s32 %v732, %v734
        %v736 = vrot.slane %v728, %v735
        %v738 = vunpack.c.l.s4 1934713408
        %v739 = vunpack.c.0.s8 %v738
        %v740 = vlaneseq
        %v741 = vshrl.u32 %v740, 7
        %v742 = vsub.s32 %v739, %v741
        %v743 = vrot.slane %v729, %v742
        %v744 = vcombine.low %v679, %v695
        %v745 = vcombine.high %v679, %v695
        %v747 = vunpack.c.l.s4 1934713408
        %v748 = vunpack.c.0.s8 %v747
        %v749 = vlaneseq
        %v750 = vshrl.u32 %v749, 7
        %v751 = vsub.s32 %v748, %v750
        %v752 = vrot.slane %v744, %v751
        %v754 = vunpack.c.l.s4 1934713408
        %v755 = vunpack.c.0.s8 %v754
        %v756 = vlaneseq
        %v757 = vshrl.u32 %v756, 7
        %v758 = vsub.s32 %v755, %v757
        %v759 = vrot.slane %v745, %v758
        %v760 = vcombine.low %v704, %v720
        %v761 = vcombine.high %v704, %v720
        %v763 = vunpack.c.l.s4 1934713408
        %v764 = vunpack.c.0.s8 %v763
        %v765 = vlaneseq
        %v766 = vshrl.u32 %v765, 7
        %v767 = vsub.s32 %v764, %v766
        %v768 = vrot.slane %v760, %v767
        %v770 = vunpack.c.l.s4 1934713408
        %v771 = vunpack.c.0.s8 %v770
        %v772 = vlaneseq
        %v773 = vshrl.u32 %v772, 7
        %v774 = vsub.s32 %v771, %v773
        %v775 = vrot.slane %v761, %v774
        %v776 = vcombine.low %v711, %v727
        %v777 = vcombine.high %v711, %v727
        %v779 = vunpack.c.l.s4 1934713408
        %v780 = vunpack.c.0.s8 %v779
        %v781 = vlaneseq
        %v782 = vshrl.u32 %v781, 7
        %v783 = vsub.s32 %v780, %v782
        %v784 = vrot.slane %v776, %v783
        %v786 = vunpack.c.l.s4 1934713408
        %v787 = vunpack.c.0.s8 %v786
        %v788 = vlaneseq
        %v789 = vshrl.u32 %v788, 7
        %v790 = vsub.s32 %v787, %v789
        %v791 = vrot.slane %v777, %v790
        %v792 = vcombine.low %v736, %v768
        %v793 = vcombine.high %v736, %v768
        %v794 = vcombine.low %v743, %v775
        %v795 = vcombine.high %v743, %v775
        %v796 = vcombine.low %v752, %v784
        %v797 = vcombine.high %v752, %v784
        %v798 = vcombine.low %v759, %v791
        %v799 = vcombine.high %v759, %v791
        %v800 = vcombine.low %v792, %v794
        %v801 = vcombine.high %v792, %v794
        %v803 = vunpack.c.l.s4 1983009808
        %v804 = vunpack.c.0.s8 %v803
        %v805 = vlaneseq
        %v806 = vshrl.u32 %v805, 7
        %v807 = vsub.s32 %v804, %v806
        %v808 = vrot.slane %v800, %v807
        %v810 = vunpack.c.l.s4 1983009808
        %v811 = vunpack.c.0.s8 %v810
        %v812 = vlaneseq
        %v813 = vshrl.u32 %v812, 7
        %v814 = vsub.s32 %v811, %v813
        %v815 = vrot.slane %v801, %v814
        %v816 = vcombine.low %v793, %v795
        %v817 = vcombine.high %v793, %v795
        %v819 = vunpack.c.l.s4 1983009808
        %v820 = vunpack.c.0.s8 %v819
        %v821 = vlaneseq
        %v822 = vshrl.u32 %v821, 7
        %v823 = vsub.s32 %v820, %v822
        %v824 = vrot.slane %v816, %v823
        %v826 = vunpack.c.l.s4 1983009808
        %v827 = vunpack.c.0.s8 %v826
        %v828 = vlaneseq
        %v829 = vshrl.u32 %v828, 7
        %v830 = vsub.s32 %v827, %v829
        %v831 = vrot.slane %v817, %v830
        %v832 = vcombine.low %v796, %v798
        %v833 = vcombine.high %v796, %v798
        %v835 = vunpack.c.l.s4 1983009808
        %v836 = vunpack.c.0.s8 %v835
        %v837 = vlaneseq
        %v838 = vshrl.u32 %v837, 7
        %v839 = vsub.s32 %v836, %v838
        %v840 = vrot.slane %v832, %v839
        %v842 = vunpack.c.l.s4 1983009808
        %v843 = vunpack.c.0.s8 %v842
        %v844 = vlaneseq
        %v845 = vshrl.u32 %v844, 7
        %v846 = vsub.s32 %v843, %v845
        %v847 = vrot.slane %v833, %v846
        %v848 = vcombine.low %v797, %v799
        %v849 = vcombine.high %v797, %v799
        %v851 = vunpack.c.l.s4 1983009808
        %v852 = vunpack.c.0.s8 %v851
        %v853 = vlaneseq
        %v854 = vshrl.u32 %v853, 7
        %v855 = vsub.s32 %v852, %v854
        %v856 = vrot.slane %v848, %v855
        %v858 = vunpack.c.l.s4 1983009808
        %v859 = vunpack.c.0.s8 %v858
        %v860 = vlaneseq
        %v861 = vshrl.u32 %v860, 7
        %v862 = vsub.s32 %v859, %v861
        %v863 = vrot.slane %v849, %v862
        %v864 = vcombine.low %v808, %v824
        %v865 = vcombine.high %v808, %v824
        %v867 = vunpack.c.l.s4 1934713408
        %v868 = vunpack.c.0.s8 %v867
        %v869 = vlaneseq
        %v870 = vshrl.u32 %v869, 7
        %v871 = vsub.s32 %v868, %v870
        %v872 = vrot.slane %v864, %v871
        %v874 = vunpack.c.l.s4 1934713408
        %v875 = vunpack.c.0.s8 %v874
        %v876 = vlaneseq
        %v877 = vshrl.u32 %v876, 7
        %v878 = vsub.s32 %v875, %v877
        %v879 = vrot.slane %v865, %v878
        %v880 = vcombine.low %v815, %v831
        %v881 = vcombine.high %v815, %v831
        %v883 = vunpack.c.l.s4 1934713408
        %v884 = vunpack.c.0.s8 %v883
        %v885 = vlaneseq
        %v886 = vshrl.u32 %v885, 7
        %v887 = vsub.s32 %v884, %v886
        %v888 = vrot.slane %v880, %v887
        %v890 = vunpack.c.l.s4 1934713408
        %v891 = vunpack.c.0.s8 %v890
        %v892 = vlaneseq
        %v893 = vshrl.u32 %v892, 7
        %v894 = vsub.s32 %v891, %v893
        %v895 = vrot.slane %v881, %v894
        %v896 = vcombine.low %v840, %v856
        %v897 = vcombine.high %v840, %v856
        %v899 = vunpack.c.l.s4 1934713408
        %v900 = vunpack.c.0.s8 %v899
        %v901 = vlaneseq
        %v902 = vshrl.u32 %v901, 7
        %v903 = vsub.s32 %v900, %v902
        %v904 = vrot.slane %v896, %v903
        %v906 = vunpack.c.l.s4 1934713408
        %v907 = vunpack.c.0.s8 %v906
        %v908 = vlaneseq
        %v909 = vshrl.u32 %v908, 7
        %v910 = vsub.s32 %v907, %v909
        %v911 = vrot.slane %v897, %v910
        %v912 = vcombine.low %v847, %v863
        %v913 = vcombine.high %v847, %v863
        %v915 = vunpack.c.l.s4 1934713408
        %v916 = vunpack.c.0.s8 %v915
        %v917 = vlaneseq
        %v918 = vshrl.u32 %v917, 7
        %v919 = vsub.s32 %v916, %v918
        %v920 = vrot.slane %v912, %v919
        %v922 = vunpack.c.l.s4 1934713408
        %v923 = vunpack.c.0.s8 %v922
        %v924 = vlaneseq
        %v925 = vshrl.u32 %v924, 7
        %v926 = vsub.s32 %v923, %v925
        %v927 = vrot.slane %v913, %v926
        %v928 = vcombine.low %v872, %v904
        %v929 = vcombine.high %v872, %v904
        %v930 = vcombine.low %v879, %v911
        %v931 = vcombine.high %v879, %v911
        %v932 = vcombine.low %v888, %v920
        %v933 = vcombine.high %v888, %v920
        %v934 = vcombine.low %v895, %v927
        %v935 = vcombine.high %v895, %v927
        %v936 = vpack.c.bf16 %v928, %v928
        %v937 = vpack.c.bf16 %v929, %v929
        %v938 = vpack.c.bf16 %v930, %v930
        %v939 = vpack.c.bf16 %v931, %v931
        %v940 = vpack.c.bf16 %v932, %v932
        %v941 = vpack.c.bf16 %v933, %v933
        %v942 = vpack.c.bf16 %v934, %v934
        %v943 = vpack.c.bf16 %v935, %v935
        %944 = vrot.lane.b32.xlu0 %v333, 64
        %v945 = vpop.permute.xlu0 %944
        %946 = vrot.lane.b32.xlu0 %v340, 64
        %v947 = vpop.permute.xlu0 %946
        %948 = vrot.lane.b32.xlu0 %v343, 64
        %v949 = vpop.permute.xlu0 %948
        %950 = vrot.lane.b32.xlu0 %v346, 64
        %v951 = vpop.permute.xlu0 %950
        %952 = vrot.lane.b32.xlu0 %v349, 64
        %v953 = vpop.permute.xlu0 %952
        %954 = vrot.lane.b32.xlu0 %v352, 64
        %v955 = vpop.permute.xlu0 %954
        %956 = vrot.lane.b32.xlu0 %v355, 64
        %v957 = vpop.permute.xlu0 %956
        %958 = vrot.lane.b32.xlu0 %v358, 64
        %v959 = vpop.permute.xlu0 %958
        %v968 = vcombine.low %v945, %v949
        %v969 = vcombine.high %v945, %v949
        %v971 = vunpack.c.l.s4 1983009808
        %v972 = vunpack.c.0.s8 %v971
        %v973 = vlaneseq
        %v974 = vshrl.u32 %v973, 7
        %v975 = vsub.s32 %v972, %v974
        %v976 = vrot.slane %v968, %v975
        %v978 = vunpack.c.l.s4 1983009808
        %v979 = vunpack.c.0.s8 %v978
        %v980 = vlaneseq
        %v981 = vshrl.u32 %v980, 7
        %v982 = vsub.s32 %v979, %v981
        %v983 = vrot.slane %v969, %v982
        %v984 = vcombine.low %v947, %v951
        %v985 = vcombine.high %v947, %v951
        %v987 = vunpack.c.l.s4 1983009808
        %v988 = vunpack.c.0.s8 %v987
        %v989 = vlaneseq
        %v990 = vshrl.u32 %v989, 7
        %v991 = vsub.s32 %v988, %v990
        %v992 = vrot.slane %v984, %v991
        %v994 = vunpack.c.l.s4 1983009808
        %v995 = vunpack.c.0.s8 %v994
        %v996 = vlaneseq
        %v997 = vshrl.u32 %v996, 7
        %v998 = vsub.s32 %v995, %v997
        %v999 = vrot.slane %v985, %v998
        %v1000 = vcombine.low %v953, %v957
        %v1001 = vcombine.high %v953, %v957
        %v1003 = vunpack.c.l.s4 1983009808
        %v1004 = vunpack.c.0.s8 %v1003
        %v1005 = vlaneseq
        %v1006 = vshrl.u32 %v1005, 7
        %v1007 = vsub.s32 %v1004, %v1006
        %v1008 = vrot.slane %v1000, %v1007
        %v1010 = vunpack.c.l.s4 1983009808
        %v1011 = vunpack.c.0.s8 %v1010
        %v1012 = vlaneseq
        %v1013 = vshrl.u32 %v1012, 7
        %v1014 = vsub.s32 %v1011, %v1013
        %v1015 = vrot.slane %v1001, %v1014
        %v1016 = vcombine.low %v955, %v959
        %v1017 = vcombine.high %v955, %v959
        %v1019 = vunpack.c.l.s4 1983009808
        %v1020 = vunpack.c.0.s8 %v1019
        %v1021 = vlaneseq
        %v1022 = vshrl.u32 %v1021, 7
        %v1023 = vsub.s32 %v1020, %v1022
        %v1024 = vrot.slane %v1016, %v1023
        %v1026 = vunpack.c.l.s4 1983009808
        %v1027 = vunpack.c.0.s8 %v1026
        %v1028 = vlaneseq
        %v1029 = vshrl.u32 %v1028, 7
        %v1030 = vsub.s32 %v1027, %v1029
        %v1031 = vrot.slane %v1017, %v1030
        %v1032 = vcombine.low %v976, %v992
        %v1033 = vcombine.high %v976, %v992
        %v1035 = vunpack.c.l.s4 1934713408
        %v1036 = vunpack.c.0.s8 %v1035
        %v1037 = vlaneseq
        %v1038 = vshrl.u32 %v1037, 7
        %v1039 = vsub.s32 %v1036, %v1038
        %v1040 = vrot.slane %v1032, %v1039
        %v1042 = vunpack.c.l.s4 1934713408
        %v1043 = vunpack.c.0.s8 %v1042
        %v1044 = vlaneseq
        %v1045 = vshrl.u32 %v1044, 7
        %v1046 = vsub.s32 %v1043, %v1045
        %v1047 = vrot.slane %v1033, %v1046
        %v1048 = vcombine.low %v983, %v999
        %v1049 = vcombine.high %v983, %v999
        %v1051 = vunpack.c.l.s4 1934713408
        %v1052 = vunpack.c.0.s8 %v1051
        %v1053 = vlaneseq
        %v1054 = vshrl.u32 %v1053, 7
        %v1055 = vsub.s32 %v1052, %v1054
        %v1056 = vrot.slane %v1048, %v1055
        %v1058 = vunpack.c.l.s4 1934713408
        %v1059 = vunpack.c.0.s8 %v1058
        %v1060 = vlaneseq
        %v1061 = vshrl.u32 %v1060, 7
        %v1062 = vsub.s32 %v1059, %v1061
        %v1063 = vrot.slane %v1049, %v1062
        %v1064 = vcombine.low %v1008, %v1024
        %v1065 = vcombine.high %v1008, %v1024
        %v1067 = vunpack.c.l.s4 1934713408
        %v1068 = vunpack.c.0.s8 %v1067
        %v1069 = vlaneseq
        %v1070 = vshrl.u32 %v1069, 7
        %v1071 = vsub.s32 %v1068, %v1070
        %v1072 = vrot.slane %v1064, %v1071
        %v1074 = vunpack.c.l.s4 1934713408
        %v1075 = vunpack.c.0.s8 %v1074
        %v1076 = vlaneseq
        %v1077 = vshrl.u32 %v1076, 7
        %v1078 = vsub.s32 %v1075, %v1077
        %v1079 = vrot.slane %v1065, %v1078
        %v1080 = vcombine.low %v1015, %v1031
        %v1081 = vcombine.high %v1015, %v1031
        %v1083 = vunpack.c.l.s4 1934713408
        %v1084 = vunpack.c.0.s8 %v1083
        %v1085 = vlaneseq
        %v1086 = vshrl.u32 %v1085, 7
        %v1087 = vsub.s32 %v1084, %v1086
        %v1088 = vrot.slane %v1080, %v1087
        %v1090 = vunpack.c.l.s4 1934713408
        %v1091 = vunpack.c.0.s8 %v1090
        %v1092 = vlaneseq
        %v1093 = vshrl.u32 %v1092, 7
        %v1094 = vsub.s32 %v1091, %v1093
        %v1095 = vrot.slane %v1081, %v1094
        %v1096 = vcombine.low %v1040, %v1072
        %v1097 = vcombine.high %v1040, %v1072
        %v1098 = vcombine.low %v1047, %v1079
        %v1099 = vcombine.high %v1047, %v1079
        %v1100 = vcombine.low %v1056, %v1088
        %v1101 = vcombine.high %v1056, %v1088
        %v1102 = vcombine.low %v1063, %v1095
        %v1103 = vcombine.high %v1063, %v1095
        %v1104 = vcombine.low %v1096, %v1098
        %v1105 = vcombine.high %v1096, %v1098
        %v1107 = vunpack.c.l.s4 1983009808
        %v1108 = vunpack.c.0.s8 %v1107
        %v1109 = vlaneseq
        %v1110 = vshrl.u32 %v1109, 7
        %v1111 = vsub.s32 %v1108, %v1110
        %v1112 = vrot.slane %v1104, %v1111
        %v1114 = vunpack.c.l.s4 1983009808
        %v1115 = vunpack.c.0.s8 %v1114
        %v1116 = vlaneseq
        %v1117 = vshrl.u32 %v1116, 7
        %v1118 = vsub.s32 %v1115, %v1117
        %v1119 = vrot.slane %v1105, %v1118
        %v1120 = vcombine.low %v1097, %v1099
        %v1121 = vcombine.high %v1097, %v1099
        %v1123 = vunpack.c.l.s4 1983009808
        %v1124 = vunpack.c.0.s8 %v1123
        %v1125 = vlaneseq
        %v1126 = vshrl.u32 %v1125, 7
        %v1127 = vsub.s32 %v1124, %v1126
        %v1128 = vrot.slane %v1120, %v1127
        %v1130 = vunpack.c.l.s4 1983009808
        %v1131 = vunpack.c.0.s8 %v1130
        %v1132 = vlaneseq
        %v1133 = vshrl.u32 %v1132, 7
        %v1134 = vsub.s32 %v1131, %v1133
        %v1135 = vrot.slane %v1121, %v1134
        %v1136 = vcombine.low %v1100, %v1102
        %v1137 = vcombine.high %v1100, %v1102
        %v1139 = vunpack.c.l.s4 1983009808
        %v1140 = vunpack.c.0.s8 %v1139
        %v1141 = vlaneseq
        %v1142 = vshrl.u32 %v1141, 7
        %v1143 = vsub.s32 %v1140, %v1142
        %v1144 = vrot.slane %v1136, %v1143
        %v1146 = vunpack.c.l.s4 1983009808
        %v1147 = vunpack.c.0.s8 %v1146
        %v1148 = vlaneseq
        %v1149 = vshrl.u32 %v1148, 7
        %v1150 = vsub.s32 %v1147, %v1149
        %v1151 = vrot.slane %v1137, %v1150
        %v1152 = vcombine.low %v1101, %v1103
        %v1153 = vcombine.high %v1101, %v1103
        %v1155 = vunpack.c.l.s4 1983009808
        %v1156 = vunpack.c.0.s8 %v1155
        %v1157 = vlaneseq
        %v1158 = vshrl.u32 %v1157, 7
        %v1159 = vsub.s32 %v1156, %v1158
        %v1160 = vrot.slane %v1152, %v1159
        %v1162 = vunpack.c.l.s4 1983009808
        %v1163 = vunpack.c.0.s8 %v1162
        %v1164 = vlaneseq
        %v1165 = vshrl.u32 %v1164, 7
        %v1166 = vsub.s32 %v1163, %v1165
        %v1167 = vrot.slane %v1153, %v1166
        %v1168 = vcombine.low %v1112, %v1128
        %v1169 = vcombine.high %v1112, %v1128
        %v1171 = vunpack.c.l.s4 1934713408
        %v1172 = vunpack.c.0.s8 %v1171
        %v1173 = vlaneseq
        %v1174 = vshrl.u32 %v1173, 7
        %v1175 = vsub.s32 %v1172, %v1174
        %v1176 = vrot.slane %v1168, %v1175
        %v1178 = vunpack.c.l.s4 1934713408
        %v1179 = vunpack.c.0.s8 %v1178
        %v1180 = vlaneseq
        %v1181 = vshrl.u32 %v1180, 7
        %v1182 = vsub.s32 %v1179, %v1181
        %v1183 = vrot.slane %v1169, %v1182
        %v1184 = vcombine.low %v1119, %v1135
        %v1185 = vcombine.high %v1119, %v1135
        %v1187 = vunpack.c.l.s4 1934713408
        %v1188 = vunpack.c.0.s8 %v1187
        %v1189 = vlaneseq
        %v1190 = vshrl.u32 %v1189, 7
        %v1191 = vsub.s32 %v1188, %v1190
        %v1192 = vrot.slane %v1184, %v1191
        %v1194 = vunpack.c.l.s4 1934713408
        %v1195 = vunpack.c.0.s8 %v1194
        %v1196 = vlaneseq
        %v1197 = vshrl.u32 %v1196, 7
        %v1198 = vsub.s32 %v1195, %v1197
        %v1199 = vrot.slane %v1185, %v1198
        %v1200 = vcombine.low %v1144, %v1160
        %v1201 = vcombine.high %v1144, %v1160
        %v1203 = vunpack.c.l.s4 1934713408
        %v1204 = vunpack.c.0.s8 %v1203
        %v1205 = vlaneseq
        %v1206 = vshrl.u32 %v1205, 7
        %v1207 = vsub.s32 %v1204, %v1206
        %v1208 = vrot.slane %v1200, %v1207
        %v1210 = vunpack.c.l.s4 1934713408
        %v1211 = vunpack.c.0.s8 %v1210
        %v1212 = vlaneseq
        %v1213 = vshrl.u32 %v1212, 7
        %v1214 = vsub.s32 %v1211, %v1213
        %v1215 = vrot.slane %v1201, %v1214
        %v1216 = vcombine.low %v1151, %v1167
        %v1217 = vcombine.high %v1151, %v1167
        %v1219 = vunpack.c.l.s4 1934713408
        %v1220 = vunpack.c.0.s8 %v1219
        %v1221 = vlaneseq
        %v1222 = vshrl.u32 %v1221, 7
        %v1223 = vsub.s32 %v1220, %v1222
        %v1224 = vrot.slane %v1216, %v1223
        %v1226 = vunpack.c.l.s4 1934713408
        %v1227 = vunpack.c.0.s8 %v1226
        %v1228 = vlaneseq
        %v1229 = vshrl.u32 %v1228, 7
        %v1230 = vsub.s32 %v1227, %v1229
        %v1231 = vrot.slane %v1217, %v1230
        %v1232 = vcombine.low %v1176, %v1208
        %v1233 = vcombine.high %v1176, %v1208
        %v1234 = vcombine.low %v1183, %v1215
        %v1235 = vcombine.high %v1183, %v1215
        %v1236 = vcombine.low %v1192, %v1224
        %v1237 = vcombine.high %v1192, %v1224
        %v1238 = vcombine.low %v1199, %v1231
        %v1239 = vcombine.high %v1199, %v1231
        %v1240 = vpack.c.bf16 %v1232, %v1232
        %v1241 = vpack.c.bf16 %v1233, %v1233
        %v1242 = vpack.c.bf16 %v1234, %v1234
        %v1243 = vpack.c.bf16 %v1235, %v1235
        %v1244 = vpack.c.bf16 %v1236, %v1236
        %v1245 = vpack.c.bf16 %v1237, %v1237
        %v1246 = vpack.c.bf16 %v1238, %v1238
        %v1247 = vpack.c.bf16 %v1239, %v1239
        %vm1248 = vcmask 31744
        %v1250 = vsel %vm1248, %v632, 0
        %v1253 = vsel %vm1248, %v936, 0
        %1255 = vmatprep.subr.bf16.mxu0 0
        %1256 = vmatpush1.bf16.xpose.msra.mxu0 %v1253
        %1257 = vmatprep.subr.bf16.mxu0 0
        %1258 = vmatpush1.bf16.xpose.msra.mxu0 0
        %1259 = vmatprep.subr.bf16.mxu0 0
        %1260 = vmatpush1.bf16.xpose.msra.mxu0 0
        %1261 = vmatprep.subr.bf16.mxu0 0
        %1262 = vmatpush1.bf16.xpose.msra.mxu0 0
        %1263 = vmatprep.subr.bf16.mxu0 0
        %1264 = vmatpush1.bf16.xpose.msra.mxu0 0
        %1265 = vmatprep.subr.bf16.mxu0 0
        %1266 = vmatpush1.bf16.xpose.msra.mxu0 0
        %1267 = vmatprep.subr.bf16.mxu0 0
        %1268 = vmatpush1.bf16.xpose.msra.mxu0 0
        %1269 = vmatprep.subr.bf16.mxu0 0
        %1270 = vmatpush1.bf16.xpose.msra.mxu0 0
        %1271 = vmatprep.subr.bf16.mxu0 0
        %1272 = vmatpush1.bf16.xpose.msra.mxu0 0
        %1273 = vmatprep.subr.bf16.mxu0 0
        %1274 = vmatpush1.bf16.xpose.msra.mxu0 0
        %1275 = vmatprep.subr.bf16.mxu0 0
        %1276 = vmatpush1.bf16.xpose.msra.mxu0 0
        %1277 = vmatprep.subr.bf16.mxu0 0
        %1278 = vmatpush1.bf16.xpose.msra.mxu0 0
        %1279 = vmatprep.subr.bf16.mxu0 0
        %1280 = vmatpush1.bf16.xpose.msra.mxu0 0
        %1281 = vmatprep.subr.bf16.mxu0 0
        %1282 = vmatpush1.bf16.xpose.msra.mxu0 0
        %1283 = vmatprep.subr.bf16.mxu0 0
        %1284 = vmatpush1.bf16.xpose.msra.mxu0 0
        %1285 = vmatprep.subr.bf16.mxu0 0
        %1286 = vmatpush1.bf16.xpose.msra.mxu0 0
        %1287 = vmatprep.mubr.bf16.mxu0 0
        %1288 = vmatmul.mubr.bf16.gmra.mrb[0].mxu0 %v1250
        %v1289 = vpop.f32.mrb[0].mxu0
        %v1290 = vadd.f32 0.0, %v1289
        %v1291 = vpop.f32.mrb[0].mxu0
        %v1292 = vpop.f32.mrb[0].mxu0
        %v1293 = vpop.f32.mrb[0].mxu0
        %1294 = vdwg.mxu0
        %v1296 = vsel %vm1248, %v633, 0
        %v1299 = vsel %vm1248, %v937, 0
        %1301 = vmatprep.subr.bf16.mxu0 0
        %1302 = vmatpush1.bf16.xpose.msra.mxu0 %v1299
        %1303 = vmatprep.subr.bf16.mxu0 0
        %1304 = vmatpush1.bf16.xpose.msra.mxu0 0
        %1305 = vmatprep.subr.bf16.mxu0 0
        %1306 = vmatpush1.bf16.xpose.msra.mxu0 0
        %1307 = vmatprep.subr.bf16.mxu0 0
        %1308 = vmatpush1.bf16.xpose.msra.mxu0 0
        %1309 = vmatprep.subr.bf16.mxu0 0
        %1310 = vmatpush1.bf16.xpose.msra.mxu0 0
        %1311 = vmatprep.subr.bf16.mxu0 0
        %1312 = vmatpush1.bf16.xpose.msra.mxu0 0
        %1313 = vmatprep.subr.bf16.mxu0 0
        %1314 = vmatpush1.bf16.xpose.msra.mxu0 0
        %1315 = vmatprep.subr.bf16.mxu0 0
        %1316 = vmatpush1.bf16.xpose.msra.mxu0 0
        %1317 = vmatprep.subr.bf16.mxu0 0
        %1318 = vmatpush1.bf16.xpose.msra.mxu0 0
        %1319 = vmatprep.subr.bf16.mxu0 0
        %1320 = vmatpush1.bf16.xpose.msra.mxu0 0
        %1321 = vmatprep.subr.bf16.mxu0 0
        %1322 = vmatpush1.bf16.xpose.msra.mxu0 0
        %1323 = vmatprep.subr.bf16.mxu0 0
        %1324 = vmatpush1.bf16.xpose.msra.mxu0 0
        %1325 = vmatprep.subr.bf16.mxu0 0
        %1326 = vmatpush1.bf16.xpose.msra.mxu0 0
        %1327 = vmatprep.subr.bf16.mxu0 0
        %1328 = vmatpush1.bf16.xpose.msra.mxu0 0
        %1329 = vmatprep.subr.bf16.mxu0 0
        %1330 = vmatpush1.bf16.xpose.msra.mxu0 0
        %1331 = vmatprep.subr.bf16.mxu0 0
        %1332 = vmatpush1.bf16.xpose.msra.mxu0 0
        %1333 = vmatprep.mubr.bf16.mxu0 0
        %1334 = vmatmul.mubr.bf16.gmra.mrb[0].mxu0 %v1296
        %v1335 = vpop.f32.mrb[0].mxu0
        %v1336 = vadd.f32 0.0, %v1335
        %v1337 = vpop.f32.mrb[0].mxu0
        %v1338 = vpop.f32.mrb[0].mxu0
        %v1339 = vpop.f32.mrb[0].mxu0
        %1340 = vdwg.mxu0
        %v1342 = vsel %vm1248, %v634, 0
        %v1345 = vsel %vm1248, %v938, 0
        %1347 = vmatprep.subr.bf16.mxu0 0
        %1348 = vmatpush1.bf16.xpose.msra.mxu0 %v1345
        %1349 = vmatprep.subr.bf16.mxu0 0
        %1350 = vmatpush1.bf16.xpose.msra.mxu0 0
        %1351 = vmatprep.subr.bf16.mxu0 0
        %1352 = vmatpush1.bf16.xpose.msra.mxu0 0
        %1353 = vmatprep.subr.bf16.mxu0 0
        %1354 = vmatpush1.bf16.xpose.msra.mxu0 0
        %1355 = vmatprep.subr.bf16.mxu0 0
        %1356 = vmatpush1.bf16.xpose.msra.mxu0 0
        %1357 = vmatprep.subr.bf16.mxu0 0
        %1358 = vmatpush1.bf16.xpose.msra.mxu0 0
        %1359 = vmatprep.subr.bf16.mxu0 0
        %1360 = vmatpush1.bf16.xpose.msra.mxu0 0
        %1361 = vmatprep.subr.bf16.mxu0 0
        %1362 = vmatpush1.bf16.xpose.msra.mxu0 0
        %1363 = vmatprep.subr.bf16.mxu0 0
        %1364 = vmatpush1.bf16.xpose.msra.mxu0 0
        %1365 = vmatprep.subr.bf16.mxu0 0
        %1366 = vmatpush1.bf16.xpose.msra.mxu0 0
        %1367 = vmatprep.subr.bf16.mxu0 0
        %1368 = vmatpush1.bf16.xpose.msra.mxu0 0
        %1369 = vmatprep.subr.bf16.mxu0 0
        %1370 = vmatpush1.bf16.xpose.msra.mxu0 0
        %1371 = vmatprep.subr.bf16.mxu0 0
        %1372 = vmatpush1.bf16.xpose.msra.mxu0 0
        %1373 = vmatprep.subr.bf16.mxu0 0
        %1374 = vmatpush1.bf16.xpose.msra.mxu0 0
        %1375 = vmatprep.subr.bf16.mxu0 0
        %1376 = vmatpush1.bf16.xpose.msra.mxu0 0
        %1377 = vmatprep.subr.bf16.mxu0 0
        %1378 = vmatpush1.bf16.xpose.msra.mxu0 0
        %1379 = vmatprep.mubr.bf16.mxu0 0
        %1380 = vmatmul.mubr.bf16.gmra.mrb[0].mxu0 %v1342
        %v1381 = vpop.f32.mrb[0].mxu0
        %v1382 = vadd.f32 0.0, %v1381
        %v1383 = vpop.f32.mrb[0].mxu0
        %v1384 = vpop.f32.mrb[0].mxu0
        %v1385 = vpop.f32.mrb[0].mxu0
        %1386 = vdwg.mxu0
        %v1388 = vsel %vm1248, %v635, 0
        %v1391 = vsel %vm1248, %v939, 0
        %1393 = vmatprep.subr.bf16.mxu0 0
        %1394 = vmatpush1.bf16.xpose.msra.mxu0 %v1391
        %1395 = vmatprep.subr.bf16.mxu0 0
        %1396 = vmatpush1.bf16.xpose.msra.mxu0 0
        %1397 = vmatprep.subr.bf16.mxu0 0
        %1398 = vmatpush1.bf16.xpose.msra.mxu0 0
        %1399 = vmatprep.subr.bf16.mxu0 0
        %1400 = vmatpush1.bf16.xpose.msra.mxu0 0
        %1401 = vmatprep.subr.bf16.mxu0 0
        %1402 = vmatpush1.bf16.xpose.msra.mxu0 0
        %1403 = vmatprep.subr.bf16.mxu0 0
        %1404 = vmatpush1.bf16.xpose.msra.mxu0 0
        %1405 = vmatprep.subr.bf16.mxu0 0
        %1406 = vmatpush1.bf16.xpose.msra.mxu0 0
        %1407 = vmatprep.subr.bf16.mxu0 0
        %1408 = vmatpush1.bf16.xpose.msra.mxu0 0
        %1409 = vmatprep.subr.bf16.mxu0 0
        %1410 = vmatpush1.bf16.xpose.msra.mxu0 0
        %1411 = vmatprep.subr.bf16.mxu0 0
        %1412 = vmatpush1.bf16.xpose.msra.mxu0 0
        %1413 = vmatprep.subr.bf16.mxu0 0
        %1414 = vmatpush1.bf16.xpose.msra.mxu0 0
        %1415 = vmatprep.subr.bf16.mxu0 0
        %1416 = vmatpush1.bf16.xpose.msra.mxu0 0
        %1417 = vmatprep.subr.bf16.mxu0 0
        %1418 = vmatpush1.bf16.xpose.msra.mxu0 0
        %1419 = vmatprep.subr.bf16.mxu0 0
        %1420 = vmatpush1.bf16.xpose.msra.mxu0 0
        %1421 = vmatprep.subr.bf16.mxu0 0
        %1422 = vmatpush1.bf16.xpose.msra.mxu0 0
        %1423 = vmatprep.subr.bf16.mxu0 0
        %1424 = vmatpush1.bf16.xpose.msra.mxu0 0
        %1425 = vmatprep.mubr.bf16.mxu0 0
        %1426 = vmatmul.mubr.bf16.gmra.mrb[0].mxu0 %v1388
        %v1427 = vpop.f32.mrb[0].mxu0
        %v1428 = vadd.f32 0.0, %v1427
        %v1429 = vpop.f32.mrb[0].mxu0
        %v1430 = vpop.f32.mrb[0].mxu0
        %v1431 = vpop.f32.mrb[0].mxu0
        %1432 = vdwg.mxu0
        %v1434 = vsel %vm1248, %v636, 0
        %v1437 = vsel %vm1248, %v940, 0
        %1439 = vmatprep.subr.bf16.mxu0 0
        %1440 = vmatpush1.bf16.xpose.msra.mxu0 %v1437
        %1441 = vmatprep.subr.bf16.mxu0 0
        %1442 = vmatpush1.bf16.xpose.msra.mxu0 0
        %1443 = vmatprep.subr.bf16.mxu0 0
        %1444 = vmatpush1.bf16.xpose.msra.mxu0 0
        %1445 = vmatprep.subr.bf16.mxu0 0
        %1446 = vmatpush1.bf16.xpose.msra.mxu0 0
        %1447 = vmatprep.subr.bf16.mxu0 0
        %1448 = vmatpush1.bf16.xpose.msra.mxu0 0
        %1449 = vmatprep.subr.bf16.mxu0 0
        %1450 = vmatpush1.bf16.xpose.msra.mxu0 0
        %1451 = vmatprep.subr.bf16.mxu0 0
        %1452 = vmatpush1.bf16.xpose.msra.mxu0 0
        %1453 = vmatprep.subr.bf16.mxu0 0
        %1454 = vmatpush1.bf16.xpose.msra.mxu0 0
        %1455 = vmatprep.subr.bf16.mxu0 0
        %1456 = vmatpush1.bf16.xpose.msra.mxu0 0
        %1457 = vmatprep.subr.bf16.mxu0 0
        %1458 = vmatpush1.bf16.xpose.msra.mxu0 0
        %1459 = vmatprep.subr.bf16.mxu0 0
        %1460 = vmatpush1.bf16.xpose.msra.mxu0 0
        %1461 = vmatprep.subr.bf16.mxu0 0
        %1462 = vmatpush1.bf16.xpose.msra.mxu0 0
        %1463 = vmatprep.subr.bf16.mxu0 0
        %1464 = vmatpush1.bf16.xpose.msra.mxu0 0
        %1465 = vmatprep.subr.bf16.mxu0 0
        %1466 = vmatpush1.bf16.xpose.msra.mxu0 0
        %1467 = vmatprep.subr.bf16.mxu0 0
        %1468 = vmatpush1.bf16.xpose.msra.mxu0 0
        %1469 = vmatprep.subr.bf16.mxu0 0
        %1470 = vmatpush1.bf16.xpose.msra.mxu0 0
        %1471 = vmatprep.mubr.bf16.mxu0 0
        %1472 = vmatmul.mubr.bf16.gmra.mrb[0].mxu0 %v1434
        %v1473 = vpop.f32.mrb[0].mxu0
        %v1474 = vadd.f32 0.0, %v1473
        %v1475 = vpop.f32.mrb[0].mxu0
        %v1476 = vpop.f32.mrb[0].mxu0
        %v1477 = vpop.f32.mrb[0].mxu0
        %1478 = vdwg.mxu0
        %v1480 = vsel %vm1248, %v637, 0
        %v1483 = vsel %vm1248, %v941, 0
        %1485 = vmatprep.subr.bf16.mxu0 0
        %1486 = vmatpush1.bf16.xpose.msra.mxu0 %v1483
        %1487 = vmatprep.subr.bf16.mxu0 0
        %1488 = vmatpush1.bf16.xpose.msra.mxu0 0
        %1489 = vmatprep.subr.bf16.mxu0 0
        %1490 = vmatpush1.bf16.xpose.msra.mxu0 0
        %1491 = vmatprep.subr.bf16.mxu0 0
        %1492 = vmatpush1.bf16.xpose.msra.mxu0 0
        %1493 = vmatprep.subr.bf16.mxu0 0
        %1494 = vmatpush1.bf16.xpose.msra.mxu0 0
        %1495 = vmatprep.subr.bf16.mxu0 0
        %1496 = vmatpush1.bf16.xpose.msra.mxu0 0
        %1497 = vmatprep.subr.bf16.mxu0 0
        %1498 = vmatpush1.bf16.xpose.msra.mxu0 0
        %1499 = vmatprep.subr.bf16.mxu0 0
        %1500 = vmatpush1.bf16.xpose.msra.mxu0 0
        %1501 = vmatprep.subr.bf16.mxu0 0
        %1502 = vmatpush1.bf16.xpose.msra.mxu0 0
        %1503 = vmatprep.subr.bf16.mxu0 0
        %1504 = vmatpush1.bf16.xpose.msra.mxu0 0
        %1505 = vmatprep.subr.bf16.mxu0 0
        %1506 = vmatpush1.bf16.xpose.msra.mxu0 0
        %1507 = vmatprep.subr.bf16.mxu0 0
        %1508 = vmatpush1.bf16.xpose.msra.mxu0 0
        %1509 = vmatprep.subr.bf16.mxu0 0
        %1510 = vmatpush1.bf16.xpose.msra.mxu0 0
        %1511 = vmatprep.subr.bf16.mxu0 0
        %1512 = vmatpush1.bf16.xpose.msra.mxu0 0
        %1513 = vmatprep.subr.bf16.mxu0 0
        %1514 = vmatpush1.bf16.xpose.msra.mxu0 0
        %1515 = vmatprep.subr.bf16.mxu0 0
        %1516 = vmatpush1.bf16.xpose.msra.mxu0 0
        %1517 = vmatprep.mubr.bf16.mxu0 0
        %1518 = vmatmul.mubr.bf16.gmra.mrb[0].mxu0 %v1480
        %v1519 = vpop.f32.mrb[0].mxu0
        %v1520 = vadd.f32 0.0, %v1519
        %v1521 = vpop.f32.mrb[0].mxu0
        %v1522 = vpop.f32.mrb[0].mxu0
        %v1523 = vpop.f32.mrb[0].mxu0
        %1524 = vdwg.mxu0
        %v1526 = vsel %vm1248, %v638, 0
        %v1529 = vsel %vm1248, %v942, 0
        %1531 = vmatprep.subr.bf16.mxu0 0
        %1532 = vmatpush1.bf16.xpose.msra.mxu0 %v1529
        %1533 = vmatprep.subr.bf16.mxu0 0
        %1534 = vmatpush1.bf16.xpose.msra.mxu0 0
        %1535 = vmatprep.subr.bf16.mxu0 0
        %1536 = vmatpush1.bf16.xpose.msra.mxu0 0
        %1537 = vmatprep.subr.bf16.mxu0 0
        %1538 = vmatpush1.bf16.xpose.msra.mxu0 0
        %1539 = vmatprep.subr.bf16.mxu0 0
        %1540 = vmatpush1.bf16.xpose.msra.mxu0 0
        %1541 = vmatprep.subr.bf16.mxu0 0
        %1542 = vmatpush1.bf16.xpose.msra.mxu0 0
        %1543 = vmatprep.subr.bf16.mxu0 0
        %1544 = vmatpush1.bf16.xpose.msra.mxu0 0
        %1545 = vmatprep.subr.bf16.mxu0 0
        %1546 = vmatpush1.bf16.xpose.msra.mxu0 0
        %1547 = vmatprep.subr.bf16.mxu0 0
        %1548 = vmatpush1.bf16.xpose.msra.mxu0 0
        %1549 = vmatprep.subr.bf16.mxu0 0
        %1550 = vmatpush1.bf16.xpose.msra.mxu0 0
        %1551 = vmatprep.subr.bf16.mxu0 0
        %1552 = vmatpush1.bf16.xpose.msra.mxu0 0
        %1553 = vmatprep.subr.bf16.mxu0 0
        %1554 = vmatpush1.bf16.xpose.msra.mxu0 0
        %1555 = vmatprep.subr.bf16.mxu0 0
        %1556 = vmatpush1.bf16.xpose.msra.mxu0 0
        %1557 = vmatprep.subr.bf16.mxu0 0
        %1558 = vmatpush1.bf16.xpose.msra.mxu0 0
        %1559 = vmatprep.subr.bf16.mxu0 0
        %1560 = vmatpush1.bf16.xpose.msra.mxu0 0
        %1561 = vmatprep.subr.bf16.mxu0 0
        %1562 = vmatpush1.bf16.xpose.msra.mxu0 0
        %1563 = vmatprep.mubr.bf16.mxu0 0
        %1564 = vmatmul.mubr.bf16.gmra.mrb[0].mxu0 %v1526
        %v1565 = vpop.f32.mrb[0].mxu0
        %v1566 = vadd.f32 0.0, %v1565
        %v1567 = vpop.f32.mrb[0].mxu0
        %v1568 = vpop.f32.mrb[0].mxu0
        %v1569 = vpop.f32.mrb[0].mxu0
        %1570 = vdwg.mxu0
        %v1572 = vsel %vm1248, %v639, 0
        %v1575 = vsel %vm1248, %v943, 0
        %1577 = vmatprep.subr.bf16.mxu0 0
        %1578 = vmatpush1.bf16.xpose.msra.mxu0 %v1575
        %1579 = vmatprep.subr.bf16.mxu0 0
        %1580 = vmatpush1.bf16.xpose.msra.mxu0 0
        %1581 = vmatprep.subr.bf16.mxu0 0
        %1582 = vmatpush1.bf16.xpose.msra.mxu0 0
        %1583 = vmatprep.subr.bf16.mxu0 0
        %1584 = vmatpush1.bf16.xpose.msra.mxu0 0
        %1585 = vmatprep.subr.bf16.mxu0 0
        %1586 = vmatpush1.bf16.xpose.msra.mxu0 0
        %1587 = vmatprep.subr.bf16.mxu0 0
        %1588 = vmatpush1.bf16.xpose.msra.mxu0 0
        %1589 = vmatprep.subr.bf16.mxu0 0
        %1590 = vmatpush1.bf16.xpose.msra.mxu0 0
        %1591 = vmatprep.subr.bf16.mxu0 0
        %1592 = vmatpush1.bf16.xpose.msra.mxu0 0
        %1593 = vmatprep.subr.bf16.mxu0 0
        %1594 = vmatpush1.bf16.xpose.msra.mxu0 0
        %1595 = vmatprep.subr.bf16.mxu0 0
        %1596 = vmatpush1.bf16.xpose.msra.mxu0 0
        %1597 = vmatprep.subr.bf16.mxu0 0
        %1598 = vmatpush1.bf16.xpose.msra.mxu0 0
        %1599 = vmatprep.subr.bf16.mxu0 0
        %1600 = vmatpush1.bf16.xpose.msra.mxu0 0
        %1601 = vmatprep.subr.bf16.mxu0 0
        %1602 = vmatpush1.bf16.xpose.msra.mxu0 0
        %1603 = vmatprep.subr.bf16.mxu0 0
        %1604 = vmatpush1.bf16.xpose.msra.mxu0 0
        %1605 = vmatprep.subr.bf16.mxu0 0
        %1606 = vmatpush1.bf16.xpose.msra.mxu0 0
        %1607 = vmatprep.subr.bf16.mxu0 0
        %1608 = vmatpush1.bf16.xpose.msra.mxu0 0
        %1609 = vmatprep.mubr.bf16.mxu0 0
        %1610 = vmatmul.mubr.bf16.gmra.mrb[0].mxu0 %v1572
        %v1611 = vpop.f32.mrb[0].mxu0
        %v1612 = vadd.f32 0.0, %v1611
        %v1613 = vpop.f32.mrb[0].mxu0
        %v1614 = vpop.f32.mrb[0].mxu0
        %v1615 = vpop.f32.mrb[0].mxu0
        %1616 = vdwg.mxu0
        %vm1617 = vcmask 64512
        %v1618 = vsel %vm1617, %v1290, -inf
        %1619 = vmax.xlane.f32.xlu0 %v1618
        %v1620 = vpop.xlane.xlu0 %1619
        %v1621 = vsel %vm1617, %v1336, -inf
        %1622 = vmax.xlane.f32.xlu0 %v1621
        %v1623 = vpop.xlane.xlu0 %1622
        %v1624 = vsel %vm1617, %v1382, -inf
        %1625 = vmax.xlane.f32.xlu0 %v1624
        %v1626 = vpop.xlane.xlu0 %1625
        %v1627 = vsel %vm1617, %v1428, -inf
        %1628 = vmax.xlane.f32.xlu0 %v1627
        %v1629 = vpop.xlane.xlu0 %1628
        %v1630 = vsel %vm1617, %v1474, -inf
        %1631 = vmax.xlane.f32.xlu0 %v1630
        %v1632 = vpop.xlane.xlu0 %1631
        %v1633 = vsel %vm1617, %v1520, -inf
        %1634 = vmax.xlane.f32.xlu0 %v1633
        %v1635 = vpop.xlane.xlu0 %1634
        %v1636 = vsel %vm1617, %v1566, -inf
        %1637 = vmax.xlane.f32.xlu0 %v1636
        %v1638 = vpop.xlane.xlu0 %1637
        %v1639 = vsel %vm1617, %v1612, -inf
        %1640 = vmax.xlane.f32.xlu0 %v1639
        %v1641 = vpop.xlane.xlu0 %1640
        %v1642 = vsub.f32 %v1290, %v1620
        %v1643 = vsub.f32 %v1336, %v1623
        %v1644 = vsub.f32 %v1382, %v1626
        %v1645 = vsub.f32 %v1428, %v1629
        %v1646 = vsub.f32 %v1474, %v1632
        %v1647 = vsub.f32 %v1520, %v1635
        %v1648 = vsub.f32 %v1566, %v1638
        %v1649 = vsub.f32 %v1612, %v1641
        %v1650 = vmul.f32 %v1642, 1.442695
        %v1651 = vpow.pop %v1650
        %v1652 = vmul.f32 %v1643, 1.442695
        %v1653 = vpow.pop %v1652
        %v1654 = vmul.f32 %v1644, 1.442695
        %v1655 = vpow.pop %v1654
        %v1656 = vmul.f32 %v1645, 1.442695
        %v1657 = vpow.pop %v1656
        %v1658 = vmul.f32 %v1646, 1.442695
        %v1659 = vpow.pop %v1658
        %v1660 = vmul.f32 %v1647, 1.442695
        %v1661 = vpow.pop %v1660
        %v1662 = vmul.f32 %v1648, 1.442695
        %v1663 = vpow.pop %v1662
        %v1664 = vmul.f32 %v1649, 1.442695
        %v1665 = vpow.pop %v1664
        %v1666 = vsel %vm1617, %v1651, 0.0
        %1667 = vadd.xlane.f32.xlu0 %v1666
        %v1668 = vpop.xlane.xlu0 %1667
        %v1669 = vsel %vm1617, %v1653, 0.0
        %1670 = vadd.xlane.f32.xlu0 %v1669
        %v1671 = vpop.xlane.xlu0 %1670
        %v1672 = vsel %vm1617, %v1655, 0.0
        %1673 = vadd.xlane.f32.xlu0 %v1672
        %v1674 = vpop.xlane.xlu0 %1673
        %v1675 = vsel %vm1617, %v1657, 0.0
        %1676 = vadd.xlane.f32.xlu0 %v1675
        %v1677 = vpop.xlane.xlu0 %1676
        %v1678 = vsel %vm1617, %v1659, 0.0
        %1679 = vadd.xlane.f32.xlu0 %v1678
        %v1680 = vpop.xlane.xlu0 %1679
        %v1681 = vsel %vm1617, %v1661, 0.0
        %1682 = vadd.xlane.f32.xlu0 %v1681
        %v1683 = vpop.xlane.xlu0 %1682
        %v1684 = vsel %vm1617, %v1663, 0.0
        %1685 = vadd.xlane.f32.xlu0 %v1684
        %v1686 = vpop.xlane.xlu0 %1685
        %v1687 = vsel %vm1617, %v1665, 0.0
        %1688 = vadd.xlane.f32.xlu0 %v1687
        %v1689 = vpop.xlane.xlu0 %1688
        %v1690 = vrcp.pop %v1668
        %v1691 = vrcp.pop %v1671
        %v1692 = vrcp.pop %v1674
        %v1693 = vrcp.pop %v1677
        %v1694 = vrcp.pop %v1680
        %v1695 = vrcp.pop %v1683
        %v1696 = vrcp.pop %v1686
        %v1697 = vrcp.pop %v1689
        %v1698 = vmul.f32 %v1651, %v1690
        %v1699 = vmul.f32 %v1653, %v1691
        %v1700 = vmul.f32 %v1655, %v1692
        %v1701 = vmul.f32 %v1657, %v1693
        %v1702 = vmul.f32 %v1659, %v1694
        %v1703 = vmul.f32 %v1661, %v1695
        %v1704 = vmul.f32 %v1663, %v1696
        %v1705 = vmul.f32 %v1665, %v1697
        %v1706 = vpack.c.bf16 %v1698, %v1698
        %v1707 = vpack.c.bf16 %v1699, %v1699
        %v1708 = vpack.c.bf16 %v1700, %v1700
        %v1709 = vpack.c.bf16 %v1701, %v1701
        %v1710 = vpack.c.bf16 %v1702, %v1702
        %v1711 = vpack.c.bf16 %v1703, %v1703
        %v1712 = vpack.c.bf16 %v1704, %v1704
        %v1713 = vpack.c.bf16 %v1705, %v1705
        %v1715 = vsel %vm1617, %v1706, 0
        %vm1717 = vcmask 1043456
        %v1719 = vsel %vm1717, %v1240, 0
        %1721 = vmatprep.subr.bf16.mxu0 0
        %1722 = vmatpush1.bf16.msra.mxu0 %v1719
        %1723 = vmatprep.subr.bf16.mxu0 0
        %1724 = vmatpush1.bf16.msra.mxu0 0
        %1725 = vmatprep.subr.bf16.mxu0 0
        %1726 = vmatpush1.bf16.msra.mxu0 0
        %1727 = vmatprep.subr.bf16.mxu0 0
        %1728 = vmatpush1.bf16.msra.mxu0 0
        %1729 = vmatprep.subr.bf16.mxu0 0
        %1730 = vmatpush1.bf16.msra.mxu0 0
        %1731 = vmatprep.subr.bf16.mxu0 0
        %1732 = vmatpush1.bf16.msra.mxu0 0
        %1733 = vmatprep.subr.bf16.mxu0 0
        %1734 = vmatpush1.bf16.msra.mxu0 0
        %1735 = vmatprep.subr.bf16.mxu0 0
        %1736 = vmatpush1.bf16.msra.mxu0 0
        %1737 = vmatprep.subr.bf16.mxu0 0
        %1738 = vmatpush1.bf16.msra.mxu0 0
        %1739 = vmatprep.subr.bf16.mxu0 0
        %1740 = vmatpush1.bf16.msra.mxu0 0
        %1741 = vmatprep.subr.bf16.mxu0 0
        %1742 = vmatpush1.bf16.msra.mxu0 0
        %1743 = vmatprep.subr.bf16.mxu0 0
        %1744 = vmatpush1.bf16.msra.mxu0 0
        %1745 = vmatprep.subr.bf16.mxu0 0
        %1746 = vmatpush1.bf16.msra.mxu0 0
        %1747 = vmatprep.subr.bf16.mxu0 0
        %1748 = vmatpush1.bf16.msra.mxu0 0
        %1749 = vmatprep.subr.bf16.mxu0 0
        %1750 = vmatpush1.bf16.msra.mxu0 0
        %1751 = vmatprep.subr.bf16.mxu0 0
        %1752 = vmatpush1.bf16.msra.mxu0 0
        %1753 = vmatprep.mubr.bf16.mxu0 0
        %1754 = vmatmul.mubr.bf16.gmra.mrb[0].mxu0 %v1715
        %v1755 = vpop.f32.mrb[0].mxu0
        %v1756 = vadd.f32 0.0, %v1755
        %v1757 = vpop.f32.mrb[0].mxu0
        %v1758 = vpop.f32.mrb[0].mxu0
        %v1759 = vpop.f32.mrb[0].mxu0
        %1760 = vdwg.mxu0
        %v1762 = vsel %vm1617, %v1707, 0
        %v1765 = vsel %vm1717, %v1241, 0
        %1767 = vmatprep.subr.bf16.mxu0 0
        %1768 = vmatpush1.bf16.msra.mxu0 %v1765
        %1769 = vmatprep.subr.bf16.mxu0 0
        %1770 = vmatpush1.bf16.msra.mxu0 0
        %1771 = vmatprep.subr.bf16.mxu0 0
        %1772 = vmatpush1.bf16.msra.mxu0 0
        %1773 = vmatprep.subr.bf16.mxu0 0
        %1774 = vmatpush1.bf16.msra.mxu0 0
        %1775 = vmatprep.subr.bf16.mxu0 0
        %1776 = vmatpush1.bf16.msra.mxu0 0
        %1777 = vmatprep.subr.bf16.mxu0 0
        %1778 = vmatpush1.bf16.msra.mxu0 0
        %1779 = vmatprep.subr.bf16.mxu0 0
        %1780 = vmatpush1.bf16.msra.mxu0 0
        %1781 = vmatprep.subr.bf16.mxu0 0
        %1782 = vmatpush1.bf16.msra.mxu0 0
        %1783 = vmatprep.subr.bf16.mxu0 0
        %1784 = vmatpush1.bf16.msra.mxu0 0
        %1785 = vmatprep.subr.bf16.mxu0 0
        %1786 = vmatpush1.bf16.msra.mxu0 0
        %1787 = vmatprep.subr.bf16.mxu0 0
        %1788 = vmatpush1.bf16.msra.mxu0 0
        %1789 = vmatprep.subr.bf16.mxu0 0
        %1790 = vmatpush1.bf16.msra.mxu0 0
        %1791 = vmatprep.subr.bf16.mxu0 0
        %1792 = vmatpush1.bf16.msra.mxu0 0
        %1793 = vmatprep.subr.bf16.mxu0 0
        %1794 = vmatpush1.bf16.msra.mxu0 0
        %1795 = vmatprep.subr.bf16.mxu0 0
        %1796 = vmatpush1.bf16.msra.mxu0 0
        %1797 = vmatprep.subr.bf16.mxu0 0
        %1798 = vmatpush1.bf16.msra.mxu0 0
        %1799 = vmatprep.mubr.bf16.mxu0 0
        %1800 = vmatmul.mubr.bf16.gmra.mrb[0].mxu0 %v1762
        %v1801 = vpop.f32.mrb[0].mxu0
        %v1802 = vadd.f32 0.0, %v1801
        %v1803 = vpop.f32.mrb[0].mxu0
        %v1804 = vpop.f32.mrb[0].mxu0
        %v1805 = vpop.f32.mrb[0].mxu0
        %1806 = vdwg.mxu0
        %v1808 = vsel %vm1617, %v1708, 0
        %v1811 = vsel %vm1717, %v1242, 0
        %1813 = vmatprep.subr.bf16.mxu0 0
        %1814 = vmatpush1.bf16.msra.mxu0 %v1811
        %1815 = vmatprep.subr.bf16.mxu0 0
        %1816 = vmatpush1.bf16.msra.mxu0 0
        %1817 = vmatprep.subr.bf16.mxu0 0
        %1818 = vmatpush1.bf16.msra.mxu0 0
        %1819 = vmatprep.subr.bf16.mxu0 0
        %1820 = vmatpush1.bf16.msra.mxu0 0
        %1821 = vmatprep.subr.bf16.mxu0 0
        %1822 = vmatpush1.bf16.msra.mxu0 0
        %1823 = vmatprep.subr.bf16.mxu0 0
        %1824 = vmatpush1.bf16.msra.mxu0 0
        %1825 = vmatprep.subr.bf16.mxu0 0
        %1826 = vmatpush1.bf16.msra.mxu0 0
        %1827 = vmatprep.subr.bf16.mxu0 0
        %1828 = vmatpush1.bf16.msra.mxu0 0
        %1829 = vmatprep.subr.bf16.mxu0 0
        %1830 = vmatpush1.bf16.msra.mxu0 0
        %1831 = vmatprep.subr.bf16.mxu0 0
        %1832 = vmatpush1.bf16.msra.mxu0 0
        %1833 = vmatprep.subr.bf16.mxu0 0
        %1834 = vmatpush1.bf16.msra.mxu0 0
        %1835 = vmatprep.subr.bf16.mxu0 0
        %1836 = vmatpush1.bf16.msra.mxu0 0
        %1837 = vmatprep.subr.bf16.mxu0 0
        %1838 = vmatpush1.bf16.msra.mxu0 0
        %1839 = vmatprep.subr.bf16.mxu0 0
        %1840 = vmatpush1.bf16.msra.mxu0 0
        %1841 = vmatprep.subr.bf16.mxu0 0
        %1842 = vmatpush1.bf16.msra.mxu0 0
        %1843 = vmatprep.subr.bf16.mxu0 0
        %1844 = vmatpush1.bf16.msra.mxu0 0
        %1845 = vmatprep.mubr.bf16.mxu0 0
        %1846 = vmatmul.mubr.bf16.gmra.mrb[0].mxu0 %v1808
        %v1847 = vpop.f32.mrb[0].mxu0
        %v1848 = vadd.f32 0.0, %v1847
        %v1849 = vpop.f32.mrb[0].mxu0
        %v1850 = vpop.f32.mrb[0].mxu0
        %v1851 = vpop.f32.mrb[0].mxu0
        %1852 = vdwg.mxu0
        %v1854 = vsel %vm1617, %v1709, 0
        %v1857 = vsel %vm1717, %v1243, 0
        %1859 = vmatprep.subr.bf16.mxu0 0
        %1860 = vmatpush1.bf16.msra.mxu0 %v1857
        %1861 = vmatprep.subr.bf16.mxu0 0
        %1862 = vmatpush1.bf16.msra.mxu0 0
        %1863 = vmatprep.subr.bf16.mxu0 0
        %1864 = vmatpush1.bf16.msra.mxu0 0
        %1865 = vmatprep.subr.bf16.mxu0 0
        %1866 = vmatpush1.bf16.msra.mxu0 0
        %1867 = vmatprep.subr.bf16.mxu0 0
        %1868 = vmatpush1.bf16.msra.mxu0 0
        %1869 = vmatprep.subr.bf16.mxu0 0
        %1870 = vmatpush1.bf16.msra.mxu0 0
        %1871 = vmatprep.subr.bf16.mxu0 0
        %1872 = vmatpush1.bf16.msra.mxu0 0
        %1873 = vmatprep.subr.bf16.mxu0 0
        %1874 = vmatpush1.bf16.msra.mxu0 0
        %1875 = vmatprep.subr.bf16.mxu0 0
        %1876 = vmatpush1.bf16.msra.mxu0 0
        %1877 = vmatprep.subr.bf16.mxu0 0
        %1878 = vmatpush1.bf16.msra.mxu0 0
        %1879 = vmatprep.subr.bf16.mxu0 0
        %1880 = vmatpush1.bf16.msra.mxu0 0
        %1881 = vmatprep.subr.bf16.mxu0 0
        %1882 = vmatpush1.bf16.msra.mxu0 0
        %1883 = vmatprep.subr.bf16.mxu0 0
        %1884 = vmatpush1.bf16.msra.mxu0 0
        %1885 = vmatprep.subr.bf16.mxu0 0
        %1886 = vmatpush1.bf16.msra.mxu0 0
        %1887 = vmatprep.subr.bf16.mxu0 0
        %1888 = vmatpush1.bf16.msra.mxu0 0
        %1889 = vmatprep.subr.bf16.mxu0 0
        %1890 = vmatpush1.bf16.msra.mxu0 0
        %1891 = vmatprep.mubr.bf16.mxu0 0
        %1892 = vmatmul.mubr.bf16.gmra.mrb[0].mxu0 %v1854
        %v1893 = vpop.f32.mrb[0].mxu0
        %v1894 = vadd.f32 0.0, %v1893
        %v1895 = vpop.f32.mrb[0].mxu0
        %v1896 = vpop.f32.mrb[0].mxu0
        %v1897 = vpop.f32.mrb[0].mxu0
        %1898 = vdwg.mxu0
        %v1900 = vsel %vm1617, %v1710, 0
        %v1903 = vsel %vm1717, %v1244, 0
        %1905 = vmatprep.subr.bf16.mxu0 0
        %1906 = vmatpush1.bf16.msra.mxu0 %v1903
        %1907 = vmatprep.subr.bf16.mxu0 0
        %1908 = vmatpush1.bf16.msra.mxu0 0
        %1909 = vmatprep.subr.bf16.mxu0 0
        %1910 = vmatpush1.bf16.msra.mxu0 0
        %1911 = vmatprep.subr.bf16.mxu0 0
        %1912 = vmatpush1.bf16.msra.mxu0 0
        %1913 = vmatprep.subr.bf16.mxu0 0
        %1914 = vmatpush1.bf16.msra.mxu0 0
        %1915 = vmatprep.subr.bf16.mxu0 0
        %1916 = vmatpush1.bf16.msra.mxu0 0
        %1917 = vmatprep.subr.bf16.mxu0 0
        %1918 = vmatpush1.bf16.msra.mxu0 0
        %1919 = vmatprep.subr.bf16.mxu0 0
        %1920 = vmatpush1.bf16.msra.mxu0 0
        %1921 = vmatprep.subr.bf16.mxu0 0
        %1922 = vmatpush1.bf16.msra.mxu0 0
        %1923 = vmatprep.subr.bf16.mxu0 0
        %1924 = vmatpush1.bf16.msra.mxu0 0
        %1925 = vmatprep.subr.bf16.mxu0 0
        %1926 = vmatpush1.bf16.msra.mxu0 0
        %1927 = vmatprep.subr.bf16.mxu0 0
        %1928 = vmatpush1.bf16.msra.mxu0 0
        %1929 = vmatprep.subr.bf16.mxu0 0
        %1930 = vmatpush1.bf16.msra.mxu0 0
        %1931 = vmatprep.subr.bf16.mxu0 0
        %1932 = vmatpush1.bf16.msra.mxu0 0
        %1933 = vmatprep.subr.bf16.mxu0 0
        %1934 = vmatpush1.bf16.msra.mxu0 0
        %1935 = vmatprep.subr.bf16.mxu0 0
        %1936 = vmatpush1.bf16.msra.mxu0 0
        %1937 = vmatprep.mubr.bf16.mxu0 0
        %1938 = vmatmul.mubr.bf16.gmra.mrb[0].mxu0 %v1900
        %v1939 = vpop.f32.mrb[0].mxu0
        %v1940 = vadd.f32 0.0, %v1939
        %v1941 = vpop.f32.mrb[0].mxu0
        %v1942 = vpop.f32.mrb[0].mxu0
        %v1943 = vpop.f32.mrb[0].mxu0
        %1944 = vdwg.mxu0
        %v1946 = vsel %vm1617, %v1711, 0
        %v1949 = vsel %vm1717, %v1245, 0
        %1951 = vmatprep.subr.bf16.mxu0 0
        %1952 = vmatpush1.bf16.msra.mxu0 %v1949
        %1953 = vmatprep.subr.bf16.mxu0 0
        %1954 = vmatpush1.bf16.msra.mxu0 0
        %1955 = vmatprep.subr.bf16.mxu0 0
        %1956 = vmatpush1.bf16.msra.mxu0 0
        %1957 = vmatprep.subr.bf16.mxu0 0
        %1958 = vmatpush1.bf16.msra.mxu0 0
        %1959 = vmatprep.subr.bf16.mxu0 0
        %1960 = vmatpush1.bf16.msra.mxu0 0
        %1961 = vmatprep.subr.bf16.mxu0 0
        %1962 = vmatpush1.bf16.msra.mxu0 0
        %1963 = vmatprep.subr.bf16.mxu0 0
        %1964 = vmatpush1.bf16.msra.mxu0 0
        %1965 = vmatprep.subr.bf16.mxu0 0
        %1966 = vmatpush1.bf16.msra.mxu0 0
        %1967 = vmatprep.subr.bf16.mxu0 0
        %1968 = vmatpush1.bf16.msra.mxu0 0
        %1969 = vmatprep.subr.bf16.mxu0 0
        %1970 = vmatpush1.bf16.msra.mxu0 0
        %1971 = vmatprep.subr.bf16.mxu0 0
        %1972 = vmatpush1.bf16.msra.mxu0 0
        %1973 = vmatprep.subr.bf16.mxu0 0
        %1974 = vmatpush1.bf16.msra.mxu0 0
        %1975 = vmatprep.subr.bf16.mxu0 0
        %1976 = vmatpush1.bf16.msra.mxu0 0
        %1977 = vmatprep.subr.bf16.mxu0 0
        %1978 = vmatpush1.bf16.msra.mxu0 0
        %1979 = vmatprep.subr.bf16.mxu0 0
        %1980 = vmatpush1.bf16.msra.mxu0 0
        %1981 = vmatprep.subr.bf16.mxu0 0
        %1982 = vmatpush1.bf16.msra.mxu0 0
        %1983 = vmatprep.mubr.bf16.mxu0 0
        %1984 = vmatmul.mubr.bf16.gmra.mrb[0].mxu0 %v1946
        %v1985 = vpop.f32.mrb[0].mxu0
        %v1986 = vadd.f32 0.0, %v1985
        %v1987 = vpop.f32.mrb[0].mxu0
        %v1988 = vpop.f32.mrb[0].mxu0
        %v1989 = vpop.f32.mrb[0].mxu0
        %1990 = vdwg.mxu0
        %v1992 = vsel %vm1617, %v1712, 0
        %v1995 = vsel %vm1717, %v1246, 0
        %1997 = vmatprep.subr.bf16.mxu0 0
        %1998 = vmatpush1.bf16.msra.mxu0 %v1995
        %1999 = vmatprep.subr.bf16.mxu0 0
        %2000 = vmatpush1.bf16.msra.mxu0 0
        %2001 = vmatprep.subr.bf16.mxu0 0
        %2002 = vmatpush1.bf16.msra.mxu0 0
        %2003 = vmatprep.subr.bf16.mxu0 0
        %2004 = vmatpush1.bf16.msra.mxu0 0
        %2005 = vmatprep.subr.bf16.mxu0 0
        %2006 = vmatpush1.bf16.msra.mxu0 0
        %2007 = vmatprep.subr.bf16.mxu0 0
        %2008 = vmatpush1.bf16.msra.mxu0 0
        %2009 = vmatprep.subr.bf16.mxu0 0
        %2010 = vmatpush1.bf16.msra.mxu0 0
        %2011 = vmatprep.subr.bf16.mxu0 0
        %2012 = vmatpush1.bf16.msra.mxu0 0
        %2013 = vmatprep.subr.bf16.mxu0 0
        %2014 = vmatpush1.bf16.msra.mxu0 0
        %2015 = vmatprep.subr.bf16.mxu0 0
        %2016 = vmatpush1.bf16.msra.mxu0 0
        %2017 = vmatprep.subr.bf16.mxu0 0
        %2018 = vmatpush1.bf16.msra.mxu0 0
        %2019 = vmatprep.subr.bf16.mxu0 0
        %2020 = vmatpush1.bf16.msra.mxu0 0
        %2021 = vmatprep.subr.bf16.mxu0 0
        %2022 = vmatpush1.bf16.msra.mxu0 0
        %2023 = vmatprep.subr.bf16.mxu0 0
        %2024 = vmatpush1.bf16.msra.mxu0 0
        %2025 = vmatprep.subr.bf16.mxu0 0
        %2026 = vmatpush1.bf16.msra.mxu0 0
        %2027 = vmatprep.subr.bf16.mxu0 0
        %2028 = vmatpush1.bf16.msra.mxu0 0
        %2029 = vmatprep.mubr.bf16.mxu0 0
        %2030 = vmatmul.mubr.bf16.gmra.mrb[0].mxu0 %v1992
        %v2031 = vpop.f32.mrb[0].mxu0
        %v2032 = vadd.f32 0.0, %v2031
        %v2033 = vpop.f32.mrb[0].mxu0
        %v2034 = vpop.f32.mrb[0].mxu0
        %v2035 = vpop.f32.mrb[0].mxu0
        %2036 = vdwg.mxu0
        %v2038 = vsel %vm1617, %v1713, 0
        %v2041 = vsel %vm1717, %v1247, 0
        %2043 = vmatprep.subr.bf16.mxu0 0
        %2044 = vmatpush1.bf16.msra.mxu0 %v2041
        %2045 = vmatprep.subr.bf16.mxu0 0
        %2046 = vmatpush1.bf16.msra.mxu0 0
        %2047 = vmatprep.subr.bf16.mxu0 0
        %2048 = vmatpush1.bf16.msra.mxu0 0
        %2049 = vmatprep.subr.bf16.mxu0 0
        %2050 = vmatpush1.bf16.msra.mxu0 0
        %2051 = vmatprep.subr.bf16.mxu0 0
        %2052 = vmatpush1.bf16.msra.mxu0 0
        %2053 = vmatprep.subr.bf16.mxu0 0
        %2054 = vmatpush1.bf16.msra.mxu0 0
        %2055 = vmatprep.subr.bf16.mxu0 0
        %2056 = vmatpush1.bf16.msra.mxu0 0
        %2057 = vmatprep.subr.bf16.mxu0 0
        %2058 = vmatpush1.bf16.msra.mxu0 0
        %2059 = vmatprep.subr.bf16.mxu0 0
        %2060 = vmatpush1.bf16.msra.mxu0 0
        %2061 = vmatprep.subr.bf16.mxu0 0
        %2062 = vmatpush1.bf16.msra.mxu0 0
        %2063 = vmatprep.subr.bf16.mxu0 0
        %2064 = vmatpush1.bf16.msra.mxu0 0
        %2065 = vmatprep.subr.bf16.mxu0 0
        %2066 = vmatpush1.bf16.msra.mxu0 0
        %2067 = vmatprep.subr.bf16.mxu0 0
        %2068 = vmatpush1.bf16.msra.mxu0 0
        %2069 = vmatprep.subr.bf16.mxu0 0
        %2070 = vmatpush1.bf16.msra.mxu0 0
        %2071 = vmatprep.subr.bf16.mxu0 0
        %2072 = vmatpush1.bf16.msra.mxu0 0
        %2073 = vmatprep.subr.bf16.mxu0 0
        %2074 = vmatpush1.bf16.msra.mxu0 0
        %2075 = vmatprep.mubr.bf16.mxu0 0
        %2076 = vmatmul.mubr.bf16.gmra.mrb[0].mxu0 %v2038
        %v2077 = vpop.f32.mrb[0].mxu0
        %v2078 = vadd.f32 0.0, %v2077
        %v2079 = vpop.f32.mrb[0].mxu0
        %v2080 = vpop.f32.mrb[0].mxu0
        %v2081 = vpop.f32.mrb[0].mxu0
        %2082 = vdwg.mxu0
        %v2083 = vcombine.low %v1756, %v1848
        %v2084 = vcombine.high %v1756, %v1848
        %v2086 = vunpack.c.l.s4 1983009808
        %v2087 = vunpack.c.0.s8 %v2086
        %v2088 = vlaneseq
        %v2089 = vshrl.u32 %v2088, 7
        %v2090 = vsub.s32 %v2087, %v2089
        %v2091 = vrot.slane %v2083, %v2090
        %v2093 = vunpack.c.l.s4 1983009808
        %v2094 = vunpack.c.0.s8 %v2093
        %v2095 = vlaneseq
        %v2096 = vshrl.u32 %v2095, 7
        %v2097 = vsub.s32 %v2094, %v2096
        %v2098 = vrot.slane %v2084, %v2097
        %v2099 = vcombine.low %v1802, %v1894
        %v2100 = vcombine.high %v1802, %v1894
        %v2102 = vunpack.c.l.s4 1983009808
        %v2103 = vunpack.c.0.s8 %v2102
        %v2104 = vlaneseq
        %v2105 = vshrl.u32 %v2104, 7
        %v2106 = vsub.s32 %v2103, %v2105
        %v2107 = vrot.slane %v2099, %v2106
        %v2109 = vunpack.c.l.s4 1983009808
        %v2110 = vunpack.c.0.s8 %v2109
        %v2111 = vlaneseq
        %v2112 = vshrl.u32 %v2111, 7
        %v2113 = vsub.s32 %v2110, %v2112
        %v2114 = vrot.slane %v2100, %v2113
        %v2115 = vcombine.low %v1940, %v2032
        %v2116 = vcombine.high %v1940, %v2032
        %v2118 = vunpack.c.l.s4 1983009808
        %v2119 = vunpack.c.0.s8 %v2118
        %v2120 = vlaneseq
        %v2121 = vshrl.u32 %v2120, 7
        %v2122 = vsub.s32 %v2119, %v2121
        %v2123 = vrot.slane %v2115, %v2122
        %v2125 = vunpack.c.l.s4 1983009808
        %v2126 = vunpack.c.0.s8 %v2125
        %v2127 = vlaneseq
        %v2128 = vshrl.u32 %v2127, 7
        %v2129 = vsub.s32 %v2126, %v2128
        %v2130 = vrot.slane %v2116, %v2129
        %v2131 = vcombine.low %v1986, %v2078
        %v2132 = vcombine.high %v1986, %v2078
        %v2134 = vunpack.c.l.s4 1983009808
        %v2135 = vunpack.c.0.s8 %v2134
        %v2136 = vlaneseq
        %v2137 = vshrl.u32 %v2136, 7
        %v2138 = vsub.s32 %v2135, %v2137
        %v2139 = vrot.slane %v2131, %v2138
        %v2141 = vunpack.c.l.s4 1983009808
        %v2142 = vunpack.c.0.s8 %v2141
        %v2143 = vlaneseq
        %v2144 = vshrl.u32 %v2143, 7
        %v2145 = vsub.s32 %v2142, %v2144
        %v2146 = vrot.slane %v2132, %v2145
        %v2147 = vcombine.low %v2091, %v2107
        %v2148 = vcombine.high %v2091, %v2107
        %v2150 = vunpack.c.l.s4 1934713408
        %v2151 = vunpack.c.0.s8 %v2150
        %v2152 = vlaneseq
        %v2153 = vshrl.u32 %v2152, 7
        %v2154 = vsub.s32 %v2151, %v2153
        %v2155 = vrot.slane %v2147, %v2154
        %v2157 = vunpack.c.l.s4 1934713408
        %v2158 = vunpack.c.0.s8 %v2157
        %v2159 = vlaneseq
        %v2160 = vshrl.u32 %v2159, 7
        %v2161 = vsub.s32 %v2158, %v2160
        %v2162 = vrot.slane %v2148, %v2161
        %v2163 = vcombine.low %v2098, %v2114
        %v2164 = vcombine.high %v2098, %v2114
        %v2166 = vunpack.c.l.s4 1934713408
        %v2167 = vunpack.c.0.s8 %v2166
        %v2168 = vlaneseq
        %v2169 = vshrl.u32 %v2168, 7
        %v2170 = vsub.s32 %v2167, %v2169
        %v2171 = vrot.slane %v2163, %v2170
        %v2173 = vunpack.c.l.s4 1934713408
        %v2174 = vunpack.c.0.s8 %v2173
        %v2175 = vlaneseq
        %v2176 = vshrl.u32 %v2175, 7
        %v2177 = vsub.s32 %v2174, %v2176
        %v2178 = vrot.slane %v2164, %v2177
        %v2179 = vcombine.low %v2123, %v2139
        %v2180 = vcombine.high %v2123, %v2139
        %v2182 = vunpack.c.l.s4 1934713408
        %v2183 = vunpack.c.0.s8 %v2182
        %v2184 = vlaneseq
        %v2185 = vshrl.u32 %v2184, 7
        %v2186 = vsub.s32 %v2183, %v2185
        %v2187 = vrot.slane %v2179, %v2186
        %v2189 = vunpack.c.l.s4 1934713408
        %v2190 = vunpack.c.0.s8 %v2189
        %v2191 = vlaneseq
        %v2192 = vshrl.u32 %v2191, 7
        %v2193 = vsub.s32 %v2190, %v2192
        %v2194 = vrot.slane %v2180, %v2193
        %v2195 = vcombine.low %v2130, %v2146
        %v2196 = vcombine.high %v2130, %v2146
        %v2198 = vunpack.c.l.s4 1934713408
        %v2199 = vunpack.c.0.s8 %v2198
        %v2200 = vlaneseq
        %v2201 = vshrl.u32 %v2200, 7
        %v2202 = vsub.s32 %v2199, %v2201
        %v2203 = vrot.slane %v2195, %v2202
        %v2205 = vunpack.c.l.s4 1934713408
        %v2206 = vunpack.c.0.s8 %v2205
        %v2207 = vlaneseq
        %v2208 = vshrl.u32 %v2207, 7
        %v2209 = vsub.s32 %v2206, %v2208
        %v2210 = vrot.slane %v2196, %v2209
        %v2211 = vcombine.low %v2155, %v2187
        %v2212 = vcombine.high %v2155, %v2187
        %v2213 = vcombine.low %v2162, %v2194
        %v2214 = vcombine.high %v2162, %v2194
        %v2215 = vcombine.low %v2171, %v2203
        %v2216 = vcombine.high %v2171, %v2203
        %v2217 = vcombine.low %v2178, %v2210
        %v2218 = vcombine.high %v2178, %v2210
        %v2219 = vcombine.low %v2211, %v2213
        %v2220 = vcombine.high %v2211, %v2213
        %v2222 = vunpack.c.l.s4 1983009808
        %v2223 = vunpack.c.0.s8 %v2222
        %v2224 = vlaneseq
        %v2225 = vshrl.u32 %v2224, 7
        %v2226 = vsub.s32 %v2223, %v2225
        %v2227 = vrot.slane %v2219, %v2226
        %v2229 = vunpack.c.l.s4 1983009808
        %v2230 = vunpack.c.0.s8 %v2229
        %v2231 = vlaneseq
        %v2232 = vshrl.u32 %v2231, 7
        %v2233 = vsub.s32 %v2230, %v2232
        %v2234 = vrot.slane %v2220, %v2233
        %v2235 = vcombine.low %v2212, %v2214
        %v2236 = vcombine.high %v2212, %v2214
        %v2238 = vunpack.c.l.s4 1983009808
        %v2239 = vunpack.c.0.s8 %v2238
        %v2240 = vlaneseq
        %v2241 = vshrl.u32 %v2240, 7
        %v2242 = vsub.s32 %v2239, %v2241
        %v2243 = vrot.slane %v2235, %v2242
        %v2245 = vunpack.c.l.s4 1983009808
        %v2246 = vunpack.c.0.s8 %v2245
        %v2247 = vlaneseq
        %v2248 = vshrl.u32 %v2247, 7
        %v2249 = vsub.s32 %v2246, %v2248
        %v2250 = vrot.slane %v2236, %v2249
        %v2251 = vcombine.low %v2215, %v2217
        %v2252 = vcombine.high %v2215, %v2217
        %v2254 = vunpack.c.l.s4 1983009808
        %v2255 = vunpack.c.0.s8 %v2254
        %v2256 = vlaneseq
        %v2257 = vshrl.u32 %v2256, 7
        %v2258 = vsub.s32 %v2255, %v2257
        %v2259 = vrot.slane %v2251, %v2258
        %v2261 = vunpack.c.l.s4 1983009808
        %v2262 = vunpack.c.0.s8 %v2261
        %v2263 = vlaneseq
        %v2264 = vshrl.u32 %v2263, 7
        %v2265 = vsub.s32 %v2262, %v2264
        %v2266 = vrot.slane %v2252, %v2265
        %v2267 = vcombine.low %v2216, %v2218
        %v2268 = vcombine.high %v2216, %v2218
        %v2270 = vunpack.c.l.s4 1983009808
        %v2271 = vunpack.c.0.s8 %v2270
        %v2272 = vlaneseq
        %v2273 = vshrl.u32 %v2272, 7
        %v2274 = vsub.s32 %v2271, %v2273
        %v2275 = vrot.slane %v2267, %v2274
        %v2277 = vunpack.c.l.s4 1983009808
        %v2278 = vunpack.c.0.s8 %v2277
        %v2279 = vlaneseq
        %v2280 = vshrl.u32 %v2279, 7
        %v2281 = vsub.s32 %v2278, %v2280
        %v2282 = vrot.slane %v2268, %v2281
        %v2283 = vcombine.low %v2227, %v2243
        %v2284 = vcombine.high %v2227, %v2243
        %v2286 = vunpack.c.l.s4 1934713408
        %v2287 = vunpack.c.0.s8 %v2286
        %v2288 = vlaneseq
        %v2289 = vshrl.u32 %v2288, 7
        %v2290 = vsub.s32 %v2287, %v2289
        %v2291 = vrot.slane %v2283, %v2290
        %v2293 = vunpack.c.l.s4 1934713408
        %v2294 = vunpack.c.0.s8 %v2293
        %v2295 = vlaneseq
        %v2296 = vshrl.u32 %v2295, 7
        %v2297 = vsub.s32 %v2294, %v2296
        %v2298 = vrot.slane %v2284, %v2297
        %v2299 = vcombine.low %v2234, %v2250
        %v2300 = vcombine.high %v2234, %v2250
        %v2302 = vunpack.c.l.s4 1934713408
        %v2303 = vunpack.c.0.s8 %v2302
        %v2304 = vlaneseq
        %v2305 = vshrl.u32 %v2304, 7
        %v2306 = vsub.s32 %v2303, %v2305
        %v2307 = vrot.slane %v2299, %v2306
        %v2309 = vunpack.c.l.s4 1934713408
        %v2310 = vunpack.c.0.s8 %v2309
        %v2311 = vlaneseq
        %v2312 = vshrl.u32 %v2311, 7
        %v2313 = vsub.s32 %v2310, %v2312
        %v2314 = vrot.slane %v2300, %v2313
        %v2315 = vcombine.low %v2259, %v2275
        %v2316 = vcombine.high %v2259, %v2275
        %v2318 = vunpack.c.l.s4 1934713408
        %v2319 = vunpack.c.0.s8 %v2318
        %v2320 = vlaneseq
        %v2321 = vshrl.u32 %v2320, 7
        %v2322 = vsub.s32 %v2319, %v2321
        %v2323 = vrot.slane %v2315, %v2322
        %v2325 = vunpack.c.l.s4 1934713408
        %v2326 = vunpack.c.0.s8 %v2325
        %v2327 = vlaneseq
        %v2328 = vshrl.u32 %v2327, 7
        %v2329 = vsub.s32 %v2326, %v2328
        %v2330 = vrot.slane %v2316, %v2329
        %v2331 = vcombine.low %v2266, %v2282
        %v2332 = vcombine.high %v2266, %v2282
        %v2334 = vunpack.c.l.s4 1934713408
        %v2335 = vunpack.c.0.s8 %v2334
        %v2336 = vlaneseq
        %v2337 = vshrl.u32 %v2336, 7
        %v2338 = vsub.s32 %v2335, %v2337
        %v2339 = vrot.slane %v2331, %v2338
        %v2341 = vunpack.c.l.s4 1934713408
        %v2342 = vunpack.c.0.s8 %v2341
        %v2343 = vlaneseq
        %v2344 = vshrl.u32 %v2343, 7
        %v2345 = vsub.s32 %v2342, %v2344
        %v2346 = vrot.slane %v2332, %v2345
        %v2347 = vcombine.low %v2291, %v2323
        %v2348 = vcombine.high %v2291, %v2323
        %v2349 = vcombine.low %v2298, %v2330
        %v2350 = vcombine.high %v2298, %v2330
        %v2351 = vcombine.low %v2307, %v2339
        %v2352 = vcombine.high %v2307, %v2339
        %v2353 = vcombine.low %v2314, %v2346
        %v2354 = vcombine.high %v2314, %v2346
        %2356 = vrot.lane.b32.xlu0 %v2348, 4
        %v2357 = vpop.permute.xlu0 %2356
        %2360 = vrot.lane.b32.xlu0 %v2349, 8
        %v2361 = vpop.permute.xlu0 %2360
        %2364 = vrot.lane.b32.xlu0 %v2350, 12
        %v2365 = vpop.permute.xlu0 %2364
        %2368 = vrot.lane.b32.xlu0 %v2351, 16
        %v2369 = vpop.permute.xlu0 %2368
        %2372 = vrot.lane.b32.xlu0 %v2352, 20
        %v2373 = vpop.permute.xlu0 %2372
        %2376 = vrot.lane.b32.xlu0 %v2353, 24
        %v2377 = vpop.permute.xlu0 %2376
        %2380 = vrot.lane.b32.xlu0 %v2354, 28
        %v2381 = vpop.permute.xlu0 %2380
        %v2383 = vsel %vm1248, %v2347, %v2357
        %v2384 = vsel %vm1617, %v2383, %v2361
        %vm2385 = vcmask 97280
        %v2386 = vsel %vm2385, %v2384, %v2365
        %vm2387 = vcmask 130048
        %v2388 = vsel %vm2387, %v2386, %v2369
        %vm2389 = vcmask 162816
        %v2390 = vsel %vm2389, %v2388, %v2373
        %vm2391 = vcmask 195584
        %v2392 = vsel %vm2391, %v2390, %v2377
        %vm2393 = vcmask 228352
        %v2394 = vsel %vm2393, %v2392, %v2381
        %v2395 = vpack.c.bf16 %v2394, %v2394
        %v2396 = vld [vmem:[#allocation7] sm:$0xf]
        %v2397 = vld [vmem:[#allocation7 + $0x4] sm:$0xf]
        %v2398 = vld [vmem:[#allocation7 + $0x8] sm:$0xf]
        %v2399 = vld [vmem:[#allocation7 + $0xc] sm:$0xf]
        %v2400 = vld [vmem:[%s4] sm:$0x1]
        %v2402 = vlaneseq
        %v2403 = vshrl.u32 %v2402, 7
        %v2404 = vsub.s32 0, %v2403
        %v2405 = vrot.slane %v2400, %v2404
        %v2411 = vunpack.c.l.b16 %v2396
        %v2412 = vunpack.c.l.b16 %v2397
        %v2413 = vunpack.c.l.b16 %v2398
        %v2414 = vunpack.c.l.b16 %v2399
        %v2415 = vpack.c.b16 %v2412, %v2411
        %v2416 = vpack.c.b16 %v2414, %v2413
        %v2420 = vsel %vm294, %v2395, 0
        %2422 = vmatprep.subr.bf16.mxu0 0
        %2423 = vmatpush1.bf16.msra.mxu0 %v2415
        %2424 = vmatprep.subr.bf16.mxu0 0
        %2425 = vmatpush1.bf16.msra.mxu0 %v2416
        %2426 = vmatprep.subr.bf16.mxu0 0
        %2427 = vmatpush1.bf16.msra.mxu0 0
        %2428 = vmatprep.subr.bf16.mxu0 0
        %2429 = vmatpush1.bf16.msra.mxu0 0
        %2430 = vmatprep.subr.bf16.mxu0 0
        %2431 = vmatpush1.bf16.msra.mxu0 0
        %2432 = vmatprep.subr.bf16.mxu0 0
        %2433 = vmatpush1.bf16.msra.mxu0 0
        %2434 = vmatprep.subr.bf16.mxu0 0
        %2435 = vmatpush1.bf16.msra.mxu0 0
        %2436 = vmatprep.subr.bf16.mxu0 0
        %2437 = vmatpush1.bf16.msra.mxu0 0
        %2438 = vmatprep.subr.bf16.mxu0 0
        %2439 = vmatpush1.bf16.msra.mxu0 0
        %2440 = vmatprep.subr.bf16.mxu0 0
        %2441 = vmatpush1.bf16.msra.mxu0 0
        %2442 = vmatprep.subr.bf16.mxu0 0
        %2443 = vmatpush1.bf16.msra.mxu0 0
        %2444 = vmatprep.subr.bf16.mxu0 0
        %2445 = vmatpush1.bf16.msra.mxu0 0
        %2446 = vmatprep.subr.bf16.mxu0 0
        %2447 = vmatpush1.bf16.msra.mxu0 0
        %2448 = vmatprep.subr.bf16.mxu0 0
        %2449 = vmatpush1.bf16.msra.mxu0 0
        %2450 = vmatprep.subr.bf16.mxu0 0
        %2451 = vmatpush1.bf16.msra.mxu0 0
        %2452 = vmatprep.subr.bf16.mxu0 0
        %2453 = vmatpush1.bf16.msra.mxu0 0
        %2454 = vmatprep.mubr.bf16.mxu0 0
        %2455 = vmatmul.mubr.bf16.gmra.mrb[0].mxu0 %v2420
        %v2456 = vpop.f32.mrb[0].mxu0
        %v2457 = vadd.f32 %v2405, %v2456
        %v2458 = vpop.f32.mrb[0].mxu0
        %v2459 = vpop.f32.mrb[0].mxu0
        %v2460 = vpop.f32.mrb[0].mxu0
        %2461 = vdwg.mxu0
        %v2462 = vpack.c.bf16 %v2457, %v2457
        %vm2463 = vcmask 257024
        %2464 = vst.msk [vmem:[%s268] sm:$0xf] %vm2463, %v2462
        %s2465 = sand.u32 %s141, 1
        %s2466 = scalar_lea.sflag [#allocation4], %s2465
        %s2467 = sand.u32 %s141, 1
        %s2468 = smul.addr %s2467, 4
        %s2469 = scalar_lea.vmem [#allocation8], %s2468
        // Predicated region
        $region53: #{tpu_custom_call.1} parent=39 // pred_check
          %p2470 = pneg %p151
        $region54: #{tpu_custom_call.1} parent=39 // pred_check_branch
          %2472 = sbr.rel (%p2470) target = $region56
        $region55: #{tpu_custom_call.1} parent=39 // pred_region
          %s2474 = ssub.s32 64, 64
          %2475 = vsyncadd %s2466, %s2474
          %s2476 = smul.addr %s23, 64
          %s2477 = scalar_lea.hbm %s5, %s2476
          %s2479 = sshll.u32 %s2469, 4
          %s2480 = int_to_ptr.vmem [resolvable:$true] %s2479
          %2482 = dma.vmem_to_hbm [thread:$0]  %s2480, 64, %s2477, %s2466
        $region56: #{tpu_custom_call.1} parent=39 // pred_fallthru
          _
      $region40: #{tpu_custom_call.1} parent=5 // pred_fallthru
        _
      %p2483 = scmp.le.s32.totalorder 2, %s18
      // Predicated region
      $region57: #{tpu_custom_call.1} parent=5 // pred_check
        %p2484 = pneg %p2483
      $region58: #{tpu_custom_call.1} parent=5 // pred_check_branch
        %2486 = sbr.rel (%p2484) target = $region60
      $region59: #{tpu_custom_call.1} parent=5 // pred_region
        %s2487 = ssub.s32 %s18, 2
        // Predicated region
        $region61: #{tpu_custom_call.1} parent=59 // pred_check
          %p2488 = pneg %p157
        $region62: #{tpu_custom_call.1} parent=59 // pred_check_branch
          %2490 = sbr.rel (%p2488) target = $region64
        $region63: #{tpu_custom_call.1} parent=59 // pred_region
          %s2491 = sand.u32 %s142, 1
          %s2492 = scalar_lea.sflag [#allocation4], %s2491
          %s2493 = sand.u32 %s142, 1
          %s2494 = smul.addr %s2493, 4
          %s2495 = scalar_lea.vmem [#allocation8], %s2494
          %2496 = dma.done %s2492, 64
        $region64: #{tpu_custom_call.1} parent=59 // pred_fallthru
          _
      $region60: #{tpu_custom_call.1} parent=5 // pred_fallthru
        _
    $region6: #{tpu_custom_call.1} parent=1 // loop_footer
      %s22 = sadd.s32 1, %s18
    $region7: #{tpu_custom_call.1} parent=1 // loop_footer_branch
      %17 = sbr.rel target = $region3
    $region8: #{tpu_custom_call.1} parent=1 // loop_exit
      _
    %2497 = vsyncpa [#allocation3], 1
    %s2498 = scalar_lea.sflag [#allocation3], 1
    %2499 = vsyncpa %s2498, 1
    %2500 = vsyncpa [#allocation6], 1
    %2501 = vsyncpa [#allocation4], 1
    %s2502 = scalar_lea.sflag [#allocation4], 1
    %2503 = vsyncpa %s2502, 1

</llo_original>
